<compile_context>
chip_gen: v6e
topology: v6e:2x2x1
jax: 0.10.0
libtpu: 0.0.40
codegen_flags: <defaults>
</compile_context>

<pallas_src>
import functools

import jax
import jax.numpy as jnp
from jax.experimental import pallas as pl
from jax.experimental.pallas import tpu as pltpu

LANE = 128


def _round_up(x, m):
    return (x + m - 1) // m * m


def _vmem_limit_bytes():
    # Generation-aware VMEM budget: ~3/4 of physical, capped at 96 MiB
    # (=> ~96 MiB on v5e/v6e's 128 MiB VMEM, ~48 MiB on v7x's 64 MiB).
    try:
        cap = int(pltpu.get_tpu_info().vmem_capacity_bytes)
    except Exception:
        cap = 0
    if cap <= 0:
        return 32 * 1024 * 1024
    return int(min(cap * 3 // 4, 96 * 1024 * 1024))


def _compiler_params():
    return pltpu.CompilerParams(
        dimension_semantics=("parallel",),     # batch grid -> both TCs on v7x
        vmem_limit_bytes=_vmem_limit_bytes(),
    )


def _resident_spec(block_shape, index_map):
    """BlockSpec for a constant-index operand: single-buffered to save VMEM."""
    try:
        return pl.BlockSpec(block_shape, index_map,
                            pipeline_mode=pl.Buffered(1))
    except Exception:                       # older jax without pipeline_mode
        return pl.BlockSpec(block_shape, index_map)


# ---------------------------------------------------------------------------
# Pallas kernels (fused im2col: unrolled k*k tap reduction on the MXU)
# ---------------------------------------------------------------------------
def _tap_accumulate(x_ref, w_ref, *, k, s, hph, ho, wo):
    """Sum_{i,j} x_pad[oh*s+i, ow*s+j, :] @ W[i,j]  with f32 accumulation.

    x_ref: (1, s*s*hph, wph, C) bf16 phase-split padded input (one image).
    w_ref: (k*k, C, Cp) bf16.
    """
    c = x_ref.shape[-1]
    cp = w_ref.shape[-1]
    m = ho * wo
    acc = jnp.zeros((m, cp), jnp.float32)
    for i in range(k):
        di, a = i // s, i % s
        for j in range(k):
            dj, b = j // s, j % s
            row0 = (a * s + b) * hph + di          # phase (a,b), row offset di
            patch = x_ref[0, row0:row0 + ho, dj:dj + wo, :].reshape(m, c)
            acc = acc + jnp.dot(patch, w_ref[i * k + j],
                                preferred_element_type=jnp.float32)
    return acc


def _conv_bn_relu_kernel(x_ref, w_ref, scale_ref, shift_ref, o_ref,
                         *, k, s, hph, ho, wo):
    acc = _tap_accumulate(x_ref, w_ref, k=k, s=s, hph=hph, ho=ho, wo=wo)
    acc = jnp.maximum(acc * scale_ref[...] + shift_ref[...], 0.0)
    o_ref[0] = acc.reshape(ho, wo, -1).astype(o_ref.dtype)


def _conv_bn_relu_resid_id_kernel(x_ref, w_ref, scale_ref, shift_ref, r_ref,
                                  o_ref, *, k, s, hph, ho, wo):
    acc = _tap_accumulate(x_ref, w_ref, k=k, s=s, hph=hph, ho=ho, wo=wo)
    acc = jnp.maximum(acc * scale_ref[...] + shift_ref[...], 0.0)
    res = r_ref[0].reshape(ho * wo, -1).astype(jnp.float32)   # bf16 shortcut
    o_ref[0] = (acc + res).reshape(ho, wo, -1).astype(o_ref.dtype)


def _conv_bn_relu_resid_proj_kernel(x_ref, w_ref, scale_ref, shift_ref, r_ref,
                                    wl_ref, bl_ref, o_ref,
                                    *, k, s, hph, ho, wo):
    acc = _tap_accumulate(x_ref, w_ref, k=k, s=s, hph=hph, ho=ho, wo=wo)
    acc = jnp.maximum(acc * scale_ref[...] + shift_ref[...], 0.0)
    r = r_ref[0].reshape(ho * wo, -1)                          # (M, Cin) bf16
    res = jnp.dot(r, wl_ref[...], preferred_element_type=jnp.float32)
    res = res + bl_ref[...]
    o_ref[0] = (acc + res).reshape(ho, wo, -1).astype(o_ref.dtype)


# ---------------------------------------------------------------------------
# Host-side glue
# ---------------------------------------------------------------------------
def _phase_split(x_nhwc, k, stride, padding):
    """Pad spatially and split into stride^2 phases so every conv tap becomes
    a contiguous static slice in-kernel.  Single pass over the input."""
    n, h, w, c = x_nhwc.shape
    s = stride
    ho = (h + 2 * padding - k) // s + 1
    wo = (w + 2 * padding - k) // s + 1
    hph = ho + (k - 1) // s
    wph = wo + (k - 1) // s
    xp = jnp.pad(x_nhwc, ((0, 0),
                          (padding, max(s * hph - h - padding, 0)),
                          (padding, max(s * wph - w - padding, 0)),
                          (0, 0)))
    xp = xp[:, :s * hph, :s * wph, :]
    xp = xp.reshape(n, hph, s, wph, s, c)
    xp = jnp.transpose(xp, (0, 2, 4, 1, 3, 5))       # (n, s, s, hph, wph, c)
    return xp.reshape(n, s * s * hph, wph, c), ho, wo, hph, wph


def _conv_block(x_nhwc, wmat, scale, shift, *, k, stride, padding,
                residual=None, wlin=None, blin=None, out_dtype=jnp.bfloat16):
    """Fused Conv2d + (folded bias+BN) + ReLU [+ fused residual / projection].

    x_nhwc : (N, H, W, C) bf16
    wmat   : (k*k, C, Cp) bf16  (Cp = Cout rounded up to 128)
    scale, shift : (1, Cp) f32  folded conv-bias + BatchNorm (eval mode)
    residual     : optional (N, Ho, Wo, Cr) bf16, added after the ReLU
    wlin, blin   : optional (Cr, Cp) bf16 / (1, Cp) f32 residual projection
    """
    n, _, _, c = x_nhwc.shape
    cp = wmat.shape[-1]
    s = stride
    xph, ho, wo, hph, wph = _phase_split(x_nhwc, k, s, padding)

    x_spec = pl.BlockSpec((1, s * s * hph, wph, c), lambda i: (i, 0, 0, 0))
    w_spec = _resident_spec((k * k, c, cp), lambda i: (0, 0, 0))
    v_spec = _resident_spec((1, cp), lambda i: (0, 0))
    o_spec = pl.BlockSpec((1, ho, wo, cp), lambda i: (i, 0, 0, 0))
    out_shape = jax.ShapeDtypeStruct((n, ho, wo, cp), out_dtype)
    kargs = dict(k=k, s=s, hph=hph, ho=ho, wo=wo)
    cparams = _compiler_params()

    if residual is None:
        return pl.pallas_call(
            functools.partial(_conv_bn_relu_kernel, **kargs),
            out_shape=out_shape, grid=(n,),
            in_specs=[x_spec, w_spec, v_spec, v_spec],
            out_specs=o_spec, compiler_params=cparams,
        )(xph, wmat, scale, shift)

    r_spec = pl.BlockSpec((1, ho, wo, residual.shape[-1]),
                          lambda i: (i, 0, 0, 0))
    if wlin is None:
        return pl.pallas_call(
            functools.partial(_conv_bn_relu_resid_id_kernel, **kargs),
            out_shape=out_shape, grid=(n,),
            in_specs=[x_spec, w_spec, v_spec, v_spec, r_spec],
            out_specs=o_spec, compiler_params=cparams,
        )(xph, wmat, scale, shift, residual)

    wl_spec = _resident_spec(wlin.shape, lambda i: (0, 0))
    return pl.pallas_call(
        functools.partial(_conv_bn_relu_resid_proj_kernel, **kargs),
        out_shape=out_shape, grid=(n,),
        in_specs=[x_spec, w_spec, v_spec, v_spec, r_spec, wl_spec, v_spec],
        out_specs=o_spec, compiler_params=cparams,
    )(xph, wmat, scale, shift, residual, wlin, blin)


# ---------------------------------------------------------------------------
# Parameters: raw init (f32) + one-time prep (pad / bf16 / BN folding)
# ---------------------------------------------------------------------------
def init_resnet_block_params(key, in_channels, out_channels, kernel_size):
    ks = jax.random.split(key, 14)
    k = kernel_size

    def rnd(i, shape):
        return 0.1 * jax.random.normal(ks[i], shape, jnp.float32)

    p = {
        "w1": rnd(0, (k, k, in_channels, out_channels)),
        "b1": rnd(1, (out_channels,)),
        "g1": 1.0 + rnd(2, (out_channels,)),
        "be1": rnd(3, (out_channels,)),
        "m1": rnd(4, (out_channels,)),
        "v1": 1.0 + jnp.abs(rnd(5, (out_channels,))),
        "w2": rnd(6, (k, k, out_channels, out_channels)),
        "b2": rnd(7, (out_channels,)),
        "g2": 1.0 + rnd(8, (out_channels,)),
        "be2": rnd(9, (out_channels,)),
        "m2": rnd(10, (out_channels,)),
        "v2": 1.0 + jnp.abs(rnd(11, (out_channels,))),
        "wlin": None,
        "blin": None,
    }
    if in_channels != out_channels:
        p["wlin"] = rnd(12, (in_channels, out_channels))
        p["blin"] = rnd(13, (out_channels,))
    return p


def prepare_resnet_block_params(p, in_channels, out_channels, kernel_size,
                                eps=1e-5):
    """One-time padding / bf16 cast / conv-bias+BN folding (hoisted out of the
    per-call forward graph)."""
    k = kernel_size
    cp = _round_up(out_channels, LANE)
    cpad = cp - out_channels

    def fold(b, g, be, m, v):
        scale = g / jnp.sqrt(v + eps)
        shift = (b - m) * scale + be
        return (jnp.pad(scale, (0, cpad)).reshape(1, cp).astype(jnp.float32),
                jnp.pad(shift, (0, cpad)).reshape(1, cp).astype(jnp.float32))

    def conv_w(w, cin, cin_pad):
        wm = w.reshape(k * k, cin, out_channels)
        wm = jnp.pad(wm, ((0, 0), (0, cin_pad - cin), (0, cpad)))
        return wm.astype(jnp.bfloat16)

    s1, sh1 = fold(p["b1"], p["g1"], p["be1"], p["m1"], p["v1"])
    s2, sh2 = fold(p["b2"], p["g2"], p["be2"], p["m2"], p["v2"])
    prepared = {
        "w1": conv_w(p["w1"], in_channels, in_channels),
        "scale1": s1, "shift1": sh1,
        # conv2 consumes conv1's channel-padded bf16 output -> pad its Cin too
        # (padded channels are zeros, padded weight rows are zeros).
        "w2": conv_w(p["w2"], out_channels, cp),
        "scale2": s2, "shift2": sh2,
        "wlin": None, "blin": None,
    }
    if p["wlin"] is not None:
        prepared["wlin"] = jnp.pad(
            p["wlin"], ((0, 0), (0, cpad))).astype(jnp.bfloat16)
        prepared["blin"] = jnp.pad(
            p["blin"], (0, cpad)).reshape(1, cp).astype(jnp.float32)
    return prepared


# ---------------------------------------------------------------------------
# Forward
# ---------------------------------------------------------------------------
@functools.partial(jax.jit,
                   static_argnames=("kernel_size", "stride", "out_channels"))
def resnet_block_forward(prepared, x_nchw, *, kernel_size, stride,
                         out_channels):
    k = kernel_size
    padding = k // 2
    cp = prepared["w2"].shape[-1]

    # Module I/O is NCHW; compute in NHWC so channels sit on the lane dim.
    x = jnp.transpose(x_nchw, (0, 2, 3, 1)).astype(jnp.bfloat16)

    # cnn_1: conv(stride) + BN + ReLU.  Channel-padded bf16 output feeds conv2
    # directly (no slice/pad pass in between).
    z = _conv_block(x, prepared["w1"], prepared["scale1"], prepared["shift1"],
                    k=k, stride=stride, padding=padding)

    # Shortcut: the per-pixel Linear commutes with the ::stride subsampling,
    # so subsample first; the projection / add is fused into the conv2 kernel.
    xs = x[:, ::stride, ::stride, :] if stride > 1 else x
    if prepared["wlin"] is None:
        # Identity shortcut (Cin == Cout): pre-pad channels so the fused add
        # is lane-aligned with the kernel's Cp-wide accumulator.
        xs = jnp.pad(xs, ((0, 0), (0, 0), (0, 0), (0, cp - out_channels)))
        out = _conv_block(z, prepared["w2"], prepared["scale2"],
                          prepared["shift2"], k=k, stride=1, padding=padding,
                          residual=xs)
    else:
        out = _conv_block(z, prepared["w2"], prepared["scale2"],
                          prepared["shift2"], k=k, stride=1, padding=padding,
                          residual=xs, wlin=prepared["wlin"],
                          blin=prepared["blin"])

    out = out[..., :out_channels].astype(jnp.float32)
    return jnp.transpose(out, (0, 3, 1, 2))             # NHWC -> NCHW


# ---------------------------------------------------------------------------
# Pure-JAX f32 reference of the (assumed) ResNetBlock forward
# ---------------------------------------------------------------------------
def _reference_forward(p, x_nchw, *, kernel_size, stride, eps=1e-5):
    k = kernel_size
    pad = k // 2
    x = jnp.transpose(x_nchw, (0, 2, 3, 1))

    def cnn(h, w, b, g, be, m, v, s):
        y = jax.lax.conv_general_dilated(
            h, w, (s, s), ((pad, pad), (pad, pad)),
            dimension_numbers=("NHWC", "HWIO", "NHWC"))
        y = (y + b - m) * (g / jnp.sqrt(v + eps)) + be
        return jnp.maximum(y, 0.0)

    z = cnn(x, p["w1"], p["b1"], p["g1"], p["be1"], p["m1"], p["v1"], stride)
    z = cnn(z, p["w2"], p["b2"], p["g2"], p["be2"], p["m2"], p["v2"], 1)
    xr = x
    if p["wlin"] is not None:
        xr = xr @ p["wlin"] + p["blin"]
    if stride > 1:
        xr = xr[:, ::stride, ::stride, :]
    return jnp.transpose(z + xr, (0, 3, 1, 2))


if __name__ == "__main__":
    key = jax.random.PRNGKey(0)
    k_p1, k_p2, k_x = jax.random.split(key, 3)

    # Case 1: projection shortcut (in != out), stride 2.
    in_c, out_c, ksz, stride = 4, 8, 3, 2
    raw = init_resnet_block_params(k_p1, in_c, out_c, ksz)
    prepared = prepare_resnet_block_params(raw, in_c, out_c, ksz)
    x = jax.random.normal(k_x, (2, in_c, 16, 16), jnp.float32)
    y = jax.block_until_ready(resnet_block_forward(
        prepared, x, kernel_size=ksz, stride=stride, out_channels=out_c))
    assert y.shape == (2, out_c, 8, 8), y.shape
    y_ref = _reference_forward(raw, x, kernel_size=ksz, stride=stride)
    err = float(jnp.max(jnp.abs(y - y_ref)))
    assert err < 0.15, f"projection-path mismatch, max abs err {err}"

    # Case 2: identity shortcut (in == out), stride 1.
    raw2 = init_resnet_block_params(k_p2, 8, 8, ksz)
    prepared2 = prepare_resnet_block_params(raw2, 8, 8, ksz)
    x2 = jax.random.normal(k_x, (2, 8, 16, 16), jnp.float32)
    y2 = jax.block_until_ready(resnet_block_forward(
        prepared2, x2, kernel_size=ksz, stride=1, out_channels=8))
    assert y2.shape == (2, 8, 16, 16), y2.shape
    y2_ref = _reference_forward(raw2, x2, kernel_size=ksz, stride=1)
    err2 = float(jnp.max(jnp.abs(y2 - y2_ref)))
    assert err2 < 0.15, f"identity-path mismatch, max abs err {err2}"

    print("KERNEL_OK")
</pallas_src>

<mosaic_0001>
module attributes {stable_mosaic.version = 11 : i64} {
  func.func @_conv_bn_relu_kernel(%arg0: i32, %arg1: memref<1x36x9x4xbf16, #tpu.memory_space<vmem>>, %arg2: memref<9x4x128xbf16, #tpu.memory_space<vmem>>, %arg3: memref<1x128xf32, #tpu.memory_space<vmem>>, %arg4: memref<1x128xf32, #tpu.memory_space<vmem>>, %arg5: memref<1x8x8x128xbf16, #tpu.memory_space<vmem>>) attributes {dimension_semantics = [#tpu.dimension_semantics<parallel>], iteration_bounds = array<i64: 2>, scalar_prefetch = 0 : i64, scratch_operands = 0 : i64, tpu.core_type = #tpu.core_type<tc>, window_params = [{transform_indices = @transform_0, window_bounds = array<i64: 1, 36, 9, 4>}, {pipeline_mode = #tpu.pipeline_mode<synchronous>, transform_indices = @transform_1, window_bounds = array<i64: 9, 4, 128>}, {pipeline_mode = #tpu.pipeline_mode<synchronous>, transform_indices = @transform_2, window_bounds = array<i64: 1, 128>}, {pipeline_mode = #tpu.pipeline_mode<synchronous>, transform_indices = @transform_3, window_bounds = array<i64: 1, 128>}, {transform_indices = @transform_4, window_bounds = array<i64: 1, 8, 8, 128>}]} {
    %cst = arith.constant 0.000000e+00 : f32
    %0 = vector.broadcast %cst : f32 to vector<64x128xf32>
    %c0 = arith.constant 0 : index
    %c0_0 = arith.constant 0 : index
    %c0_1 = arith.constant 0 : index
    %c0_2 = arith.constant 0 : index
    %1 = vector.load %arg1[%c0, %c0_0, %c0_1, %c0_2] : memref<1x36x9x4xbf16, #tpu.memory_space<vmem>>, vector<1x8x8x4xbf16>
    %2 = vector.shape_cast %1 : vector<1x8x8x4xbf16> to vector<8x8x4xbf16>
    %3 = vector.shape_cast %2 : vector<8x8x4xbf16> to vector<64x4xbf16>
    %c0_3 = arith.constant 0 : index
    %c0_4 = arith.constant 0 : index
    %c0_5 = arith.constant 0 : index
    %4 = vector.load %arg2[%c0_3, %c0_4, %c0_5] : memref<9x4x128xbf16, #tpu.memory_space<vmem>>, vector<1x4x128xbf16>
    %5 = vector.shape_cast %4 : vector<1x4x128xbf16> to vector<4x128xbf16>
    %cst_6 = arith.constant dense<0.000000e+00> : vector<64x128xf32>
    %6 = tpu.matmul %3, %5, %cst_6 {dimension_numbers = #tpu.dot_dimension_numbers<[1], [0], [0], [1], [0, 0, 1, 1], [], []>} : vector<64x4xbf16>, vector<4x128xbf16>, vector<64x128xf32> -> vector<64x128xf32>
    %7 = arith.addf %0, %6 : vector<64x128xf32>
    %c0_7 = arith.constant 0 : index
    %c9 = arith.constant 9 : index
    %c0_8 = arith.constant 0 : index
    %c0_9 = arith.constant 0 : index
    %8 = vector.load %arg1[%c0_7, %c9, %c0_8, %c0_9] : memref<1x36x9x4xbf16, #tpu.memory_space<vmem>>, vector<1x8x8x4xbf16>
    %9 = vector.shape_cast %8 : vector<1x8x8x4xbf16> to vector<8x8x4xbf16>
    %10 = vector.shape_cast %9 : vector<8x8x4xbf16> to vector<64x4xbf16>
    %c1 = arith.constant 1 : index
    %c0_10 = arith.constant 0 : index
    %c0_11 = arith.constant 0 : index
    %11 = vector.load %arg2[%c1, %c0_10, %c0_11] : memref<9x4x128xbf16, #tpu.memory_space<vmem>>, vector<1x4x128xbf16>
    %12 = vector.shape_cast %11 : vector<1x4x128xbf16> to vector<4x128xbf16>
    %cst_12 = arith.constant dense<0.000000e+00> : vector<64x128xf32>
    %13 = tpu.matmul %10, %12, %cst_12 {dimension_numbers = #tpu.dot_dimension_numbers<[1], [0], [0], [1], [0, 0, 1, 1], [], []>} : vector<64x4xbf16>, vector<4x128xbf16>, vector<64x128xf32> -> vector<64x128xf32>
    %14 = arith.addf %7, %13 : vector<64x128xf32>
    %c0_13 = arith.constant 0 : index
    %c0_14 = arith.constant 0 : index
    %c1_15 = arith.constant 1 : index
    %c0_16 = arith.constant 0 : index
    %15 = vector.load %arg1[%c0_13, %c0_14, %c1_15, %c0_16] : memref<1x36x9x4xbf16, #tpu.memory_space<vmem>>, vector<1x8x8x4xbf16>
    %16 = vector.shape_cast %15 : vector<1x8x8x4xbf16> to vector<8x8x4xbf16>
    %17 = vector.shape_cast %16 : vector<8x8x4xbf16> to vector<64x4xbf16>
    %c2 = arith.constant 2 : index
    %c0_17 = arith.constant 0 : index
    %c0_18 = arith.constant 0 : index
    %18 = vector.load %arg2[%c2, %c0_17, %c0_18] : memref<9x4x128xbf16, #tpu.memory_space<vmem>>, vector<1x4x128xbf16>
    %19 = vector.shape_cast %18 : vector<1x4x128xbf16> to vector<4x128xbf16>
    %cst_19 = arith.constant dense<0.000000e+00> : vector<64x128xf32>
    %20 = tpu.matmul %17, %19, %cst_19 {dimension_numbers = #tpu.dot_dimension_numbers<[1], [0], [0], [1], [0, 0, 1, 1], [], []>} : vector<64x4xbf16>, vector<4x128xbf16>, vector<64x128xf32> -> vector<64x128xf32>
    %21 = arith.addf %14, %20 : vector<64x128xf32>
    %c0_20 = arith.constant 0 : index
    %c18 = arith.constant 18 : index
    %c0_21 = arith.constant 0 : index
    %c0_22 = arith.constant 0 : index
    %22 = vector.load %arg1[%c0_20, %c18, %c0_21, %c0_22] : memref<1x36x9x4xbf16, #tpu.memory_space<vmem>>, vector<1x8x8x4xbf16>
    %23 = vector.shape_cast %22 : vector<1x8x8x4xbf16> to vector<8x8x4xbf16>
    %24 = vector.shape_cast %23 : vector<8x8x4xbf16> to vector<64x4xbf16>
    %c3 = arith.constant 3 : index
    %c0_23 = arith.constant 0 : index
    %c0_24 = arith.constant 0 : index
    %25 = vector.load %arg2[%c3, %c0_23, %c0_24] : memref<9x4x128xbf16, #tpu.memory_space<vmem>>, vector<1x4x128xbf16>
    %26 = vector.shape_cast %25 : vector<1x4x128xbf16> to vector<4x128xbf16>
    %cst_25 = arith.constant dense<0.000000e+00> : vector<64x128xf32>
    %27 = tpu.matmul %24, %26, %cst_25 {dimension_numbers = #tpu.dot_dimension_numbers<[1], [0], [0], [1], [0, 0, 1, 1], [], []>} : vector<64x4xbf16>, vector<4x128xbf16>, vector<64x128xf32> -> vector<64x128xf32>
    %28 = arith.addf %21, %27 : vector<64x128xf32>
    %c0_26 = arith.constant 0 : index
    %c27 = arith.constant 27 : index
    %c0_27 = arith.constant 0 : index
    %c0_28 = arith.constant 0 : index
    %29 = vector.load %arg1[%c0_26, %c27, %c0_27, %c0_28] : memref<1x36x9x4xbf16, #tpu.memory_space<vmem>>, vector<1x8x8x4xbf16>
    %30 = vector.shape_cast %29 : vector<1x8x8x4xbf16> to vector<8x8x4xbf16>
    %31 = vector.shape_cast %30 : vector<8x8x4xbf16> to vector<64x4xbf16>
    %c4 = arith.constant 4 : index
    %c0_29 = arith.constant 0 : index
    %c0_30 = arith.constant 0 : index
    %32 = vector.load %arg2[%c4, %c0_29, %c0_30] : memref<9x4x128xbf16, #tpu.memory_space<vmem>>, vector<1x4x128xbf16>
    %33 = vector.shape_cast %32 : vector<1x4x128xbf16> to vector<4x128xbf16>
    %cst_31 = arith.constant dense<0.000000e+00> : vector<64x128xf32>
    %34 = tpu.matmul %31, %33, %cst_31 {dimension_numbers = #tpu.dot_dimension_numbers<[1], [0], [0], [1], [0, 0, 1, 1], [], []>} : vector<64x4xbf16>, vector<4x128xbf16>, vector<64x128xf32> -> vector<64x128xf32>
    %35 = arith.addf %28, %34 : vector<64x128xf32>
    %c0_32 = arith.constant 0 : index
    %c18_33 = arith.constant 18 : index
    %c1_34 = arith.constant 1 : index
    %c0_35 = arith.constant 0 : index
    %36 = vector.load %arg1[%c0_32, %c18_33, %c1_34, %c0_35] : memref<1x36x9x4xbf16, #tpu.memory_space<vmem>>, vector<1x8x8x4xbf16>
    %37 = vector.shape_cast %36 : vector<1x8x8x4xbf16> to vector<8x8x4xbf16>
    %38 = vector.shape_cast %37 : vector<8x8x4xbf16> to vector<64x4xbf16>
    %c5 = arith.constant 5 : index
    %c0_36 = arith.constant 0 : index
    %c0_37 = arith.constant 0 : index
    %39 = vector.load %arg2[%c5, %c0_36, %c0_37] : memref<9x4x128xbf16, #tpu.memory_space<vmem>>, vector<1x4x128xbf16>
    %40 = vector.shape_cast %39 : vector<1x4x128xbf16> to vector<4x128xbf16>
    %cst_38 = arith.constant dense<0.000000e+00> : vector<64x128xf32>
    %41 = tpu.matmul %38, %40, %cst_38 {dimension_numbers = #tpu.dot_dimension_numbers<[1], [0], [0], [1], [0, 0, 1, 1], [], []>} : vector<64x4xbf16>, vector<4x128xbf16>, vector<64x128xf32> -> vector<64x128xf32>
    %42 = arith.addf %35, %41 : vector<64x128xf32>
    %c0_39 = arith.constant 0 : index
    %c1_40 = arith.constant 1 : index
    %c0_41 = arith.constant 0 : index
    %c0_42 = arith.constant 0 : index
    %43 = vector.load %arg1[%c0_39, %c1_40, %c0_41, %c0_42] : memref<1x36x9x4xbf16, #tpu.memory_space<vmem>>, vector<1x8x8x4xbf16>
    %44 = vector.shape_cast %43 : vector<1x8x8x4xbf16> to vector<8x8x4xbf16>
    %45 = vector.shape_cast %44 : vector<8x8x4xbf16> to vector<64x4xbf16>
    %c6 = arith.constant 6 : index
    %c0_43 = arith.constant 0 : index
    %c0_44 = arith.constant 0 : index
    %46 = vector.load %arg2[%c6, %c0_43, %c0_44] : memref<9x4x128xbf16, #tpu.memory_space<vmem>>, vector<1x4x128xbf16>
    %47 = vector.shape_cast %46 : vector<1x4x128xbf16> to vector<4x128xbf16>
    %cst_45 = arith.constant dense<0.000000e+00> : vector<64x128xf32>
    %48 = tpu.matmul %45, %47, %cst_45 {dimension_numbers = #tpu.dot_dimension_numbers<[1], [0], [0], [1], [0, 0, 1, 1], [], []>} : vector<64x4xbf16>, vector<4x128xbf16>, vector<64x128xf32> -> vector<64x128xf32>
    %49 = arith.addf %42, %48 : vector<64x128xf32>
    %c0_46 = arith.constant 0 : index
    %c10 = arith.constant 10 : index
    %c0_47 = arith.constant 0 : index
    %c0_48 = arith.constant 0 : index
    %50 = vector.load %arg1[%c0_46, %c10, %c0_47, %c0_48] : memref<1x36x9x4xbf16, #tpu.memory_space<vmem>>, vector<1x8x8x4xbf16>
    %51 = vector.shape_cast %50 : vector<1x8x8x4xbf16> to vector<8x8x4xbf16>
    %52 = vector.shape_cast %51 : vector<8x8x4xbf16> to vector<64x4xbf16>
    %c7 = arith.constant 7 : index
    %c0_49 = arith.constant 0 : index
    %c0_50 = arith.constant 0 : index
    %53 = vector.load %arg2[%c7, %c0_49, %c0_50] : memref<9x4x128xbf16, #tpu.memory_space<vmem>>, vector<1x4x128xbf16>
    %54 = vector.shape_cast %53 : vector<1x4x128xbf16> to vector<4x128xbf16>
    %cst_51 = arith.constant dense<0.000000e+00> : vector<64x128xf32>
    %55 = tpu.matmul %52, %54, %cst_51 {dimension_numbers = #tpu.dot_dimension_numbers<[1], [0], [0], [1], [0, 0, 1, 1], [], []>} : vector<64x4xbf16>, vector<4x128xbf16>, vector<64x128xf32> -> vector<64x128xf32>
    %56 = arith.addf %49, %55 : vector<64x128xf32>
    %c0_52 = arith.constant 0 : index
    %c1_53 = arith.constant 1 : index
    %c1_54 = arith.constant 1 : index
    %c0_55 = arith.constant 0 : index
    %57 = vector.load %arg1[%c0_52, %c1_53, %c1_54, %c0_55] : memref<1x36x9x4xbf16, #tpu.memory_space<vmem>>, vector<1x8x8x4xbf16>
    %58 = vector.shape_cast %57 : vector<1x8x8x4xbf16> to vector<8x8x4xbf16>
    %59 = vector.shape_cast %58 : vector<8x8x4xbf16> to vector<64x4xbf16>
    %c8 = arith.constant 8 : index
    %c0_56 = arith.constant 0 : index
    %c0_57 = arith.constant 0 : index
    %60 = vector.load %arg2[%c8, %c0_56, %c0_57] : memref<9x4x128xbf16, #tpu.memory_space<vmem>>, vector<1x4x128xbf16>
    %61 = vector.shape_cast %60 : vector<1x4x128xbf16> to vector<4x128xbf16>
    %cst_58 = arith.constant dense<0.000000e+00> : vector<64x128xf32>
    %62 = tpu.matmul %59, %61, %cst_58 {dimension_numbers = #tpu.dot_dimension_numbers<[1], [0], [0], [1], [0, 0, 1, 1], [], []>} : vector<64x4xbf16>, vector<4x128xbf16>, vector<64x128xf32> -> vector<64x128xf32>
    %63 = arith.addf %56, %62 : vector<64x128xf32>
    %c0_59 = arith.constant 0 : index
    %c0_60 = arith.constant 0 : index
    %64 = vector.load %arg3[%c0_59, %c0_60] : memref<1x128xf32, #tpu.memory_space<vmem>>, vector<1x128xf32>
    %65 = vector.broadcast %64 : vector<1x128xf32> to vector<64x128xf32>
    %66 = arith.mulf %63, %65 : vector<64x128xf32>
    %c0_61 = arith.constant 0 : index
    %c0_62 = arith.constant 0 : index
    %67 = vector.load %arg4[%c0_61, %c0_62] : memref<1x128xf32, #tpu.memory_space<vmem>>, vector<1x128xf32>
    %68 = vector.broadcast %67 : vector<1x128xf32> to vector<64x128xf32>
    %69 = arith.addf %66, %68 : vector<64x128xf32>
    %cst_63 = arith.constant 0.000000e+00 : f32
    %70 = vector.broadcast %cst_63 : f32 to vector<64x128xf32>
    %71 = arith.maximumf %69, %70 : vector<64x128xf32>
    %72 = vector.shape_cast %71 : vector<64x128xf32> to vector<8x8x128xf32>
    %73 = arith.truncf %72 : vector<8x8x128xf32> to vector<8x8x128xbf16>
    %c0_64 = arith.constant 0 : index
    %c0_65 = arith.constant 0 : index
    %c0_66 = arith.constant 0 : index
    %c0_67 = arith.constant 0 : index
    %74 = vector.load %arg5[%c0_64, %c0_65, %c0_66, %c0_67] : memref<1x8x8x128xbf16, #tpu.memory_space<vmem>>, vector<1x8x8x128xbf16>
    %75 = vector.shape_cast %74 : vector<1x8x8x128xbf16> to vector<8x8x128xbf16>
    %76 = vector.shape_cast %73 : vector<8x8x128xbf16> to vector<1x8x8x128xbf16>
    tpu.vector_store %arg5[%c0_64, %c0_65, %c0_66, %c0_67], %76 {strides = array<i32>} : memref<1x8x8x128xbf16, #tpu.memory_space<vmem>>, vector<1x8x8x128xbf16>,
    return
  }
  func.func @transform_0(%arg0: i32) -> (i32, i32, i32, i32) {
    %c0_i32 = arith.constant 0 : i32
    %c0_i32_0 = arith.constant 0 : i32
    %c0_i32_1 = arith.constant 0 : i32
    %c0_i32_2 = arith.constant 0 : i32
    return %arg0, %c0_i32, %c0_i32_0, %c0_i32_1 : i32, i32, i32, i32
  }
  func.func @transform_1(%arg0: i32) -> (i32, i32, i32) {
    %c0_i32 = arith.constant 0 : i32
    %c0_i32_0 = arith.constant 0 : i32
    %c0_i32_1 = arith.constant 0 : i32
    %c0_i32_2 = arith.constant 0 : i32
    return %c0_i32, %c0_i32_0, %c0_i32_1 : i32, i32, i32
  }
  func.func @transform_2(%arg0: i32) -> (i32, i32) {
    %c0_i32 = arith.constant 0 : i32
    %c0_i32_0 = arith.constant 0 : i32
    %c0_i32_1 = arith.constant 0 : i32
    return %c0_i32, %c0_i32_0 : i32, i32
  }
  func.func @transform_3(%arg0: i32) -> (i32, i32) {
    %c0_i32 = arith.constant 0 : i32
    %c0_i32_0 = arith.constant 0 : i32
    %c0_i32_1 = arith.constant 0 : i32
    return %c0_i32, %c0_i32_0 : i32, i32
  }
  func.func @transform_4(%arg0: i32) -> (i32, i32, i32, i32) {
    %c0_i32 = arith.constant 0 : i32
    %c0_i32_0 = arith.constant 0 : i32
    %c0_i32_1 = arith.constant 0 : i32
    %c0_i32_2 = arith.constant 0 : i32
    return %arg0, %c0_i32, %c0_i32_0, %c0_i32_1 : i32, i32, i32, i32
  }
}

module attributes {stable_mosaic.version = 11 : i64} {
  func.func @_conv_bn_relu_resid_proj_kernel(%arg0: i32, %arg1: memref<1x10x10x128xbf16, #tpu.memory_space<vmem>>, %arg2: memref<9x128x128xbf16, #tpu.memory_space<vmem>>, %arg3: memref<1x128xf32, #tpu.memory_space<vmem>>, %arg4: memref<1x128xf32, #tpu.memory_space<vmem>>, %arg5: memref<1x8x8x4xbf16, #tpu.memory_space<vmem>>, %arg6: memref<4x128xbf16, #tpu.memory_space<vmem>>, %arg7: memref<1x128xf32, #tpu.memory_space<vmem>>, %arg8: memref<1x8x8x128xbf16, #tpu.memory_space<vmem>>) attributes {dimension_semantics = [#tpu.dimension_semantics<parallel>], iteration_bounds = array<i64: 2>, scalar_prefetch = 0 : i64, scratch_operands = 0 : i64, tpu.core_type = #tpu.core_type<tc>, window_params = [{transform_indices = @transform_0, window_bounds = array<i64: 1, 10, 10, 128>}, {pipeline_mode = #tpu.pipeline_mode<synchronous>, transform_indices = @transform_1, window_bounds = array<i64: 9, 128, 128>}, {pipeline_mode = #tpu.pipeline_mode<synchronous>, transform_indices = @transform_2, window_bounds = array<i64: 1, 128>}, {pipeline_mode = #tpu.pipeline_mode<synchronous>, transform_indices = @transform_3, window_bounds = array<i64: 1, 128>}, {transform_indices = @transform_4, window_bounds = array<i64: 1, 8, 8, 4>}, {pipeline_mode = #tpu.pipeline_mode<synchronous>, transform_indices = @transform_5, window_bounds = array<i64: 4, 128>}, {pipeline_mode = #tpu.pipeline_mode<synchronous>, transform_indices = @transform_6, window_bounds = array<i64: 1, 128>}, {transform_indices = @transform_7, window_bounds = array<i64: 1, 8, 8, 128>}]} {
    %cst = arith.constant 0.000000e+00 : f32
    %0 = vector.broadcast %cst : f32 to vector<64x128xf32>
    %c0 = arith.constant 0 : index
    %c0_0 = arith.constant 0 : index
    %c0_1 = arith.constant 0 : index
    %c0_2 = arith.constant 0 : index
    %1 = vector.load %arg1[%c0, %c0_0, %c0_1, %c0_2] : memref<1x10x10x128xbf16, #tpu.memory_space<vmem>>, vector<1x8x8x128xbf16>
    %2 = vector.shape_cast %1 : vector<1x8x8x128xbf16> to vector<8x8x128xbf16>
    %3 = vector.shape_cast %2 : vector<8x8x128xbf16> to vector<64x128xbf16>
    %c0_3 = arith.constant 0 : index
    %c0_4 = arith.constant 0 : index
    %c0_5 = arith.constant 0 : index
    %4 = vector.load %arg2[%c0_3, %c0_4, %c0_5] : memref<9x128x128xbf16, #tpu.memory_space<vmem>>, vector<1x128x128xbf16>
    %5 = vector.shape_cast %4 : vector<1x128x128xbf16> to vector<128x128xbf16>
    %cst_6 = arith.constant dense<0.000000e+00> : vector<64x128xf32>
    %6 = tpu.matmul %3, %5, %cst_6 {dimension_numbers = #tpu.dot_dimension_numbers<[1], [0], [0], [1], [0, 0, 1, 1], [], []>} : vector<64x128xbf16>, vector<128x128xbf16>, vector<64x128xf32> -> vector<64x128xf32>
    %7 = arith.addf %0, %6 : vector<64x128xf32>
    %c0_7 = arith.constant 0 : index
    %c0_8 = arith.constant 0 : index
    %c1 = arith.constant 1 : index
    %c0_9 = arith.constant 0 : index
    %8 = vector.load %arg1[%c0_7, %c0_8, %c1, %c0_9] : memref<1x10x10x128xbf16, #tpu.memory_space<vmem>>, vector<1x8x8x128xbf16>
    %9 = vector.shape_cast %8 : vector<1x8x8x128xbf16> to vector<8x8x128xbf16>
    %10 = vector.shape_cast %9 : vector<8x8x128xbf16> to vector<64x128xbf16>
    %c1_10 = arith.constant 1 : index
    %c0_11 = arith.constant 0 : index
    %c0_12 = arith.constant 0 : index
    %11 = vector.load %arg2[%c1_10, %c0_11, %c0_12] : memref<9x128x128xbf16, #tpu.memory_space<vmem>>, vector<1x128x128xbf16>
    %12 = vector.shape_cast %11 : vector<1x128x128xbf16> to vector<128x128xbf16>
    %cst_13 = arith.constant dense<0.000000e+00> : vector<64x128xf32>
    %13 = tpu.matmul %10, %12, %cst_13 {dimension_numbers = #tpu.dot_dimension_numbers<[1], [0], [0], [1], [0, 0, 1, 1], [], []>} : vector<64x128xbf16>, vector<128x128xbf16>, vector<64x128xf32> -> vector<64x128xf32>
    %14 = arith.addf %7, %13 : vector<64x128xf32>
    %c0_14 = arith.constant 0 : index
    %c0_15 = arith.constant 0 : index
    %c2 = arith.constant 2 : index
    %c0_16 = arith.constant 0 : index
    %15 = vector.load %arg1[%c0_14, %c0_15, %c2, %c0_16] : memref<1x10x10x128xbf16, #tpu.memory_space<vmem>>, vector<1x8x8x128xbf16>
    %16 = vector.shape_cast %15 : vector<1x8x8x128xbf16> to vector<8x8x128xbf16>
    %17 = vector.shape_cast %16 : vector<8x8x128xbf16> to vector<64x128xbf16>
    %c2_17 = arith.constant 2 : index
    %c0_18 = arith.constant 0 : index
    %c0_19 = arith.constant 0 : index
    %18 = vector.load %arg2[%c2_17, %c0_18, %c0_19] : memref<9x128x128xbf16, #tpu.memory_space<vmem>>, vector<1x128x128xbf16>
    %19 = vector.shape_cast %18 : vector<1x128x128xbf16> to vector<128x128xbf16>
    %cst_20 = arith.constant dense<0.000000e+00> : vector<64x128xf32>
    %20 = tpu.matmul %17, %19, %cst_20 {dimension_numbers = #tpu.dot_dimension_numbers<[1], [0], [0], [1], [0, 0, 1, 1], [], []>} : vector<64x128xbf16>, vector<128x128xbf16>, vector<64x128xf32> -> vector<64x128xf32>
    %21 = arith.addf %14, %20 : vector<64x128xf32>
    %c0_21 = arith.constant 0 : index
    %c1_22 = arith.constant 1 : index
    %c0_23 = arith.constant 0 : index
    %c0_24 = arith.constant 0 : index
    %22 = vector.load %arg1[%c0_21, %c1_22, %c0_23, %c0_24] : memref<1x10x10x128xbf16, #tpu.memory_space<vmem>>, vector<1x8x8x128xbf16>
    %23 = vector.shape_cast %22 : vector<1x8x8x128xbf16> to vector<8x8x128xbf16>
    %24 = vector.shape_cast %23 : vector<8x8x128xbf16> to vector<64x128xbf16>
    %c3 = arith.constant 3 : index
    %c0_25 = arith.constant 0 : index
    %c0_26 = arith.constant 0 : index
    %25 = vector.load %arg2[%c3, %c0_25, %c0_26] : memref<9x128x128xbf16, #tpu.memory_space<vmem>>, vector<1x128x128xbf16>
    %26 = vector.shape_cast %25 : vector<1x128x128xbf16> to vector<128x128xbf16>
    %cst_27 = arith.constant dense<0.000000e+00> : vector<64x128xf32>
    %27 = tpu.matmul %24, %26, %cst_27 {dimension_numbers = #tpu.dot_dimension_numbers<[1], [0], [0], [1], [0, 0, 1, 1], [], []>} : vector<64x128xbf16>, vector<128x128xbf16>, vector<64x128xf32> -> vector<64x128xf32>
    %28 = arith.addf %21, %27 : vector<64x128xf32>
    %c0_28 = arith.constant 0 : index
    %c1_29 = arith.constant 1 : index
    %c1_30 = arith.constant 1 : index
    %c0_31 = arith.constant 0 : index
    %29 = vector.load %arg1[%c0_28, %c1_29, %c1_30, %c0_31] : memref<1x10x10x128xbf16, #tpu.memory_space<vmem>>, vector<1x8x8x128xbf16>
    %30 = vector.shape_cast %29 : vector<1x8x8x128xbf16> to vector<8x8x128xbf16>
    %31 = vector.shape_cast %30 : vector<8x8x128xbf16> to vector<64x128xbf16>
    %c4 = arith.constant 4 : index
    %c0_32 = arith.constant 0 : index
    %c0_33 = arith.constant 0 : index
    %32 = vector.load %arg2[%c4, %c0_32, %c0_33] : memref<9x128x128xbf16, #tpu.memory_space<vmem>>, vector<1x128x128xbf16>
    %33 = vector.shape_cast %32 : vector<1x128x128xbf16> to vector<128x128xbf16>
    %cst_34 = arith.constant dense<0.000000e+00> : vector<64x128xf32>
    %34 = tpu.matmul %31, %33, %cst_34 {dimension_numbers = #tpu.dot_dimension_numbers<[1], [0], [0], [1], [0, 0, 1, 1], [], []>} : vector<64x128xbf16>, vector<128x128xbf16>, vector<64x128xf32> -> vector<64x128xf32>
    %35 = arith.addf %28, %34 : vector<64x128xf32>
    %c0_35 = arith.constant 0 : index
    %c1_36 = arith.constant 1 : index
    %c2_37 = arith.constant 2 : index
    %c0_38 = arith.constant 0 : index
    %36 = vector.load %arg1[%c0_35, %c1_36, %c2_37, %c0_38] : memref<1x10x10x128xbf16, #tpu.memory_space<vmem>>, vector<1x8x8x128xbf16>
    %37 = vector.shape_cast %36 : vector<1x8x8x128xbf16> to vector<8x8x128xbf16>
    %38 = vector.shape_cast %37 : vector<8x8x128xbf16> to vector<64x128xbf16>
    %c5 = arith.constant 5 : index
    %c0_39 = arith.constant 0 : index
    %c0_40 = arith.constant 0 : index
    %39 = vector.load %arg2[%c5, %c0_39, %c0_40] : memref<9x128x128xbf16, #tpu.memory_space<vmem>>, vector<1x128x128xbf16>
    %40 = vector.shape_cast %39 : vector<1x128x128xbf16> to vector<128x128xbf16>
    %cst_41 = arith.constant dense<0.000000e+00> : vector<64x128xf32>
    %41 = tpu.matmul %38, %40, %cst_41 {dimension_numbers = #tpu.dot_dimension_numbers<[1], [0], [0], [1], [0, 0, 1, 1], [], []>} : vector<64x128xbf16>, vector<128x128xbf16>, vector<64x128xf32> -> vector<64x128xf32>
    %42 = arith.addf %35, %41 : vector<64x128xf32>
    %c0_42 = arith.constant 0 : index
    %c2_43 = arith.constant 2 : index
    %c0_44 = arith.constant 0 : index
    %c0_45 = arith.constant 0 : index
    %43 = vector.load %arg1[%c0_42, %c2_43, %c0_44, %c0_45] : memref<1x10x10x128xbf16, #tpu.memory_space<vmem>>, vector<1x8x8x128xbf16>
    %44 = vector.shape_cast %43 : vector<1x8x8x128xbf16> to vector<8x8x128xbf16>
    %45 = vector.shape_cast %44 : vector<8x8x128xbf16> to vector<64x128xbf16>
    %c6 = arith.constant 6 : index
    %c0_46 = arith.constant 0 : index
    %c0_47 = arith.constant 0 : index
    %46 = vector.load %arg2[%c6, %c0_46, %c0_47] : memref<9x128x128xbf16, #tpu.memory_space<vmem>>, vector<1x128x128xbf16>
    %47 = vector.shape_cast %46 : vector<1x128x128xbf16> to vector<128x128xbf16>
    %cst_48 = arith.constant dense<0.000000e+00> : vector<64x128xf32>
    %48 = tpu.matmul %45, %47, %cst_48 {dimension_numbers = #tpu.dot_dimension_numbers<[1], [0], [0], [1], [0, 0, 1, 1], [], []>} : vector<64x128xbf16>, vector<128x128xbf16>, vector<64x128xf32> -> vector<64x128xf32>
    %49 = arith.addf %42, %48 : vector<64x128xf32>
    %c0_49 = arith.constant 0 : index
    %c2_50 = arith.constant 2 : index
    %c1_51 = arith.constant 1 : index
    %c0_52 = arith.constant 0 : index
    %50 = vector.load %arg1[%c0_49, %c2_50, %c1_51, %c0_52] : memref<1x10x10x128xbf16, #tpu.memory_space<vmem>>, vector<1x8x8x128xbf16>
    %51 = vector.shape_cast %50 : vector<1x8x8x128xbf16> to vector<8x8x128xbf16>
    %52 = vector.shape_cast %51 : vector<8x8x128xbf16> to vector<64x128xbf16>
    %c7 = arith.constant 7 : index
    %c0_53 = arith.constant 0 : index
    %c0_54 = arith.constant 0 : index
    %53 = vector.load %arg2[%c7, %c0_53, %c0_54] : memref<9x128x128xbf16, #tpu.memory_space<vmem>>, vector<1x128x128xbf16>
    %54 = vector.shape_cast %53 : vector<1x128x128xbf16> to vector<128x128xbf16>
    %cst_55 = arith.constant dense<0.000000e+00> : vector<64x128xf32>
    %55 = tpu.matmul %52, %54, %cst_55 {dimension_numbers = #tpu.dot_dimension_numbers<[1], [0], [0], [1], [0, 0, 1, 1], [], []>} : vector<64x128xbf16>, vector<128x128xbf16>, vector<64x128xf32> -> vector<64x128xf32>
    %56 = arith.addf %49, %55 : vector<64x128xf32>
    %c0_56 = arith.constant 0 : index
    %c2_57 = arith.constant 2 : index
    %c2_58 = arith.constant 2 : index
    %c0_59 = arith.constant 0 : index
    %57 = vector.load %arg1[%c0_56, %c2_57, %c2_58, %c0_59] : memref<1x10x10x128xbf16, #tpu.memory_space<vmem>>, vector<1x8x8x128xbf16>
    %58 = vector.shape_cast %57 : vector<1x8x8x128xbf16> to vector<8x8x128xbf16>
    %59 = vector.shape_cast %58 : vector<8x8x128xbf16> to vector<64x128xbf16>
    %c8 = arith.constant 8 : index
    %c0_60 = arith.constant 0 : index
    %c0_61 = arith.constant 0 : index
    %60 = vector.load %arg2[%c8, %c0_60, %c0_61] : memref<9x128x128xbf16, #tpu.memory_space<vmem>>, vector<1x128x128xbf16>
    %61 = vector.shape_cast %60 : vector<1x128x128xbf16> to vector<128x128xbf16>
    %cst_62 = arith.constant dense<0.000000e+00> : vector<64x128xf32>
    %62 = tpu.matmul %59, %61, %cst_62 {dimension_numbers = #tpu.dot_dimension_numbers<[1], [0], [0], [1], [0, 0, 1, 1], [], []>} : vector<64x128xbf16>, vector<128x128xbf16>, vector<64x128xf32> -> vector<64x128xf32>
    %63 = arith.addf %56, %62 : vector<64x128xf32>
    %c0_63 = arith.constant 0 : index
    %c0_64 = arith.constant 0 : index
    %64 = vector.load %arg3[%c0_63, %c0_64] : memref<1x128xf32, #tpu.memory_space<vmem>>, vector<1x128xf32>
    %65 = vector.broadcast %64 : vector<1x128xf32> to vector<64x128xf32>
    %66 = arith.mulf %63, %65 : vector<64x128xf32>
    %c0_65 = arith.constant 0 : index
    %c0_66 = arith.constant 0 : index
    %67 = vector.load %arg4[%c0_65, %c0_66] : memref<1x128xf32, #tpu.memory_space<vmem>>, vector<1x128xf32>
    %68 = vector.broadcast %67 : vector<1x128xf32> to vector<64x128xf32>
    %69 = arith.addf %66, %68 : vector<64x128xf32>
    %cst_67 = arith.constant 0.000000e+00 : f32
    %70 = vector.broadcast %cst_67 : f32 to vector<64x128xf32>
    %71 = arith.maximumf %69, %70 : vector<64x128xf32>
    %c0_68 = arith.constant 0 : index
    %c0_69 = arith.constant 0 : index
    %c0_70 = arith.constant 0 : index
    %c0_71 = arith.constant 0 : index
    %72 = vector.load %arg5[%c0_68, %c0_69, %c0_70, %c0_71] : memref<1x8x8x4xbf16, #tpu.memory_space<vmem>>, vector<1x8x8x4xbf16>
    %73 = vector.shape_cast %72 : vector<1x8x8x4xbf16> to vector<8x8x4xbf16>
    %74 = vector.shape_cast %73 : vector<8x8x4xbf16> to vector<64x4xbf16>
    %c0_72 = arith.constant 0 : index
    %c0_73 = arith.constant 0 : index
    %75 = vector.load %arg6[%c0_72, %c0_73] : memref<4x128xbf16, #tpu.memory_space<vmem>>, vector<4x128xbf16>
    %cst_74 = arith.constant dense<0.000000e+00> : vector<64x128xf32>
    %76 = tpu.matmul %74, %75, %cst_74 {dimension_numbers = #tpu.dot_dimension_numbers<[1], [0], [0], [1], [0, 0, 1, 1], [], []>} : vector<64x4xbf16>, vector<4x128xbf16>, vector<64x128xf32> -> vector<64x128xf32>
    %c0_75 = arith.constant 0 : index
    %c0_76 = arith.constant 0 : index
    %77 = vector.load %arg7[%c0_75, %c0_76] : memref<1x128xf32, #tpu.memory_space<vmem>>, vector<1x128xf32>
    %78 = vector.broadcast %77 : vector<1x128xf32> to vector<64x128xf32>
    %79 = arith.addf %76, %78 : vector<64x128xf32>
    %80 = arith.addf %71, %79 : vector<64x128xf32>
    %81 = vector.shape_cast %80 : vector<64x128xf32> to vector<8x8x128xf32>
    %82 = arith.truncf %81 : vector<8x8x128xf32> to vector<8x8x128xbf16>
    %c0_77 = arith.constant 0 : index
    %c0_78 = arith.constant 0 : index
    %c0_79 = arith.constant 0 : index
    %c0_80 = arith.constant 0 : index
    %83 = vector.load %arg8[%c0_77, %c0_78, %c0_79, %c0_80] : memref<1x8x8x128xbf16, #tpu.memory_space<vmem>>, vector<1x8x8x128xbf16>
    %84 = vector.shape_cast %83 : vector<1x8x8x128xbf16> to vector<8x8x128xbf16>
    %85 = vector.shape_cast %82 : vector<8x8x128xbf16> to vector<1x8x8x128xbf16>
    tpu.vector_store %arg8[%c0_77, %c0_78, %c0_79, %c0_80], %85 {strides = array<i32>} : memref<1x8x8x128xbf16, #tpu.memory_space<vmem>>, vector<1x8x8x128xbf16>,
    return
  }
  func.func @transform_0(%arg0: i32) -> (i32, i32, i32, i32) {
    %c0_i32 = arith.constant 0 : i32
    %c0_i32_0 = arith.constant 0 : i32
    %c0_i32_1 = arith.constant 0 : i32
    %c0_i32_2 = arith.constant 0 : i32
    return %arg0, %c0_i32, %c0_i32_0, %c0_i32_1 : i32, i32, i32, i32
  }
  func.func @transform_1(%arg0: i32) -> (i32, i32, i32) {
    %c0_i32 = arith.constant 0 : i32
    %c0_i32_0 = arith.constant 0 : i32
    %c0_i32_1 = arith.constant 0 : i32
    %c0_i32_2 = arith.constant 0 : i32
    return %c0_i32, %c0_i32_0, %c0_i32_1 : i32, i32, i32
  }
  func.func @transform_2(%arg0: i32) -> (i32, i32) {
    %c0_i32 = arith.constant 0 : i32
    %c0_i32_0 = arith.constant 0 : i32
    %c0_i32_1 = arith.constant 0 : i32
    return %c0_i32, %c0_i32_0 : i32, i32
  }
  func.func @transform_3(%arg0: i32) -> (i32, i32) {
    %c0_i32 = arith.constant 0 : i32
    %c0_i32_0 = arith.constant 0 : i32
    %c0_i32_1 = arith.constant 0 : i32
    return %c0_i32, %c0_i32_0 : i32, i32
  }
  func.func @transform_4(%arg0: i32) -> (i32, i32, i32, i32) {
    %c0_i32 = arith.constant 0 : i32
    %c0_i32_0 = arith.constant 0 : i32
    %c0_i32_1 = arith.constant 0 : i32
    %c0_i32_2 = arith.constant 0 : i32
    return %arg0, %c0_i32, %c0_i32_0, %c0_i32_1 : i32, i32, i32, i32
  }
  func.func @transform_5(%arg0: i32) -> (i32, i32) {
    %c0_i32 = arith.constant 0 : i32
    %c0_i32_0 = arith.constant 0 : i32
    %c0_i32_1 = arith.constant 0 : i32
    return %c0_i32, %c0_i32_0 : i32, i32
  }
  func.func @transform_6(%arg0: i32) -> (i32, i32) {
    %c0_i32 = arith.constant 0 : i32
    %c0_i32_0 = arith.constant 0 : i32
    %c0_i32_1 = arith.constant 0 : i32
    return %c0_i32, %c0_i32_0 : i32, i32
  }
  func.func @transform_7(%arg0: i32) -> (i32, i32, i32, i32) {
    %c0_i32 = arith.constant 0 : i32
    %c0_i32_0 = arith.constant 0 : i32
    %c0_i32_1 = arith.constant 0 : i32
    %c0_i32_2 = arith.constant 0 : i32
    return %arg0, %c0_i32, %c0_i32_0, %c0_i32_1 : i32, i32, i32, i32
  }
}

</mosaic_0001>

<llo_original>
// kernel: resnet_block_forward.2
$region0: #{resnet_block_forward.2}
  #allocation0 [shape = 'u32[]', space=smem, size = 0x4, offset = 0x4, fixed_abs, tag = 'smem constant byte address 0x4 - core index']
  #allocation1 [shape = 'u32[144,128]{1,0:T(1,128)}', space=vmem, size = 0x12000, scoped, tag = 'internal scratch']
  %s0 = inlined_call_operand.vmem [shape: bf16[2,36,9,4], index: 0, kind: input, shape index: {}]
  %s1 = inlined_call_operand.vmem [shape: bf16[9,4,128], index: 1, kind: input, shape index: {}]
  %s2 = inlined_call_operand.vmem [shape: f32[1,128], index: 2, kind: input, shape index: {}]
  %s3 = inlined_call_operand.vmem [shape: f32[1,128], index: 3, kind: input, shape index: {}]
  %s4 = inlined_call_operand.vmem [shape: bf16[2,8,8,128], index: 4, kind: output, shape index: {}]
  %s5 = sld [smem:[#allocation0]]
  $region49: #{resnet_block_forward.2} parent=0
    _
  %s7 = ssub.s32 1, %s5
  %s8 = scalar_select 0, %s7, %s5
  loop: start=0, step=1, limit=4
  $region2: #{resnet_block_forward.2} parent=0 // loop_pre_header
    _
  $region3: #{resnet_block_forward.2} parent=0 // loop_header
    %s10 = sphi 0, %s14
    %p11 = scmp.ge.s32.totalorder %s10, 4
    %s20 = sphi 0, %s22
    %s23 = sphi 0, %s20
    %s24 = sphi 0, %s23
    %s40 = sphi 0, %s24
    %s44 = sphi 0, %s44
    %s46 = sphi 0, %s44
    %s47 = sphi 0, %s46
    %s61 = sphi 0, %s47
    %s65 = sphi 0, %s65
    %s67 = sphi 0, %s65
    %s68 = sphi 0, %s67
    %s82 = sphi 0, %s68
    %s86 = sphi 0, %s86
    %s88 = sphi 0, %s86
    %s89 = sphi 0, %s88
    %s103 = sphi 0, %s89
    %s109 = sphi 0, %s111
    %s112 = sphi 0, %s109
    %s113 = sphi 0, %s112
    %s129 = sphi 0, %s113
  $region4: #{resnet_block_forward.2} parent=0 // loop_header_branch
    %13 = sbr.rel (%p11) target = $region8
  $region5: #{resnet_block_forward.2} parent=0 // loop_body
    %s15 = ssub.s32 %s10, 1
    %s16 = ssub.s32 %s10, 2
    %s17 = sadd.s32 %s10, 1
    %s18 = ssub.s32 %s10, %s17
    %p19 = scmp.eq.s32.totalorder %s18, 0
    %s21 = sadd.s32 %s20, 1
    %s22 = scalar_select %p19, %s20, %s21
    %p25 = pneg %p19
    %p26 = scmp.eq.s32.totalorder %s10, 1
    %p27 = por %p25, %p26
    %p28 = scmp.ne.s32.totalorder %s20, %s23
    %p29 = scmp.eq.s32.totalorder %s10, 0
    %p30 = por %p28, %p29
    %p31 = scmp.ne.s32.totalorder %s20, %s23
    %p32 = scmp.eq.s32.totalorder %s15, 1
    %p33 = por %p31, %p32
    %p34 = scmp.ne.s32.totalorder %s23, %s24
    %p35 = scmp.eq.s32.totalorder %s15, 0
    %p36 = por %p34, %p35
    %p37 = scmp.ne.s32.totalorder %s23, %s24
    %p38 = scmp.eq.s32.totalorder %s16, 1
    %p39 = por %p37, %p38
    %p41 = scmp.ne.s32.totalorder %s24, %s40
    %p42 = scmp.eq.s32.totalorder %s16, 0
    %p43 = por %p41, %p42
    %s45 = sadd.s32 %s44, 1
    %p48 = scmp.eq.s32.totalorder %s10, 1
    %p49 = scmp.ne.s32.totalorder %s44, %s46
    %p50 = scmp.eq.s32.totalorder %s10, 0
    %p51 = por %p49, %p50
    %p52 = scmp.ne.s32.totalorder %s44, %s46
    %p53 = scmp.eq.s32.totalorder %s15, 1
    %p54 = por %p52, %p53
    %p55 = scmp.ne.s32.totalorder %s46, %s47
    %p56 = scmp.eq.s32.totalorder %s15, 0
    %p57 = por %p55, %p56
    %p58 = scmp.ne.s32.totalorder %s46, %s47
    %p59 = scmp.eq.s32.totalorder %s16, 1
    %p60 = por %p58, %p59
    %p62 = scmp.ne.s32.totalorder %s47, %s61
    %p63 = scmp.eq.s32.totalorder %s16, 0
    %p64 = por %p62, %p63
    %s66 = sadd.s32 %s65, 1
    %p69 = scmp.eq.s32.totalorder %s10, 1
    %p70 = scmp.ne.s32.totalorder %s65, %s67
    %p71 = scmp.eq.s32.totalorder %s10, 0
    %p72 = por %p70, %p71
    %p73 = scmp.ne.s32.totalorder %s65, %s67
    %p74 = scmp.eq.s32.totalorder %s15, 1
    %p75 = por %p73, %p74
    %p76 = scmp.ne.s32.totalorder %s67, %s68
    %p77 = scmp.eq.s32.totalorder %s15, 0
    %p78 = por %p76, %p77
    %p79 = scmp.ne.s32.totalorder %s67, %s68
    %p80 = scmp.eq.s32.totalorder %s16, 1
    %p81 = por %p79, %p80
    %p83 = scmp.ne.s32.totalorder %s68, %s82
    %p84 = scmp.eq.s32.totalorder %s16, 0
    %p85 = por %p83, %p84
    %s87 = sadd.s32 %s86, 1
    %p90 = scmp.eq.s32.totalorder %s10, 1
    %p91 = scmp.ne.s32.totalorder %s86, %s88
    %p92 = scmp.eq.s32.totalorder %s10, 0
    %p93 = por %p91, %p92
    %p94 = scmp.ne.s32.totalorder %s86, %s88
    %p95 = scmp.eq.s32.totalorder %s15, 1
    %p96 = por %p94, %p95
    %p97 = scmp.ne.s32.totalorder %s88, %s89
    %p98 = scmp.eq.s32.totalorder %s15, 0
    %p99 = por %p97, %p98
    %p100 = scmp.ne.s32.totalorder %s88, %s89
    %p101 = scmp.eq.s32.totalorder %s16, 1
    %p102 = por %p100, %p101
    %p104 = scmp.ne.s32.totalorder %s89, %s103
    %p105 = scmp.eq.s32.totalorder %s16, 0
    %p106 = por %p104, %p105
    %s107 = ssub.s32 %s10, %s17
    %p108 = scmp.eq.s32.totalorder %s107, 0
    %s110 = sadd.s32 %s109, 1
    %s111 = scalar_select %p108, %s109, %s110
    %p114 = pneg %p108
    %p115 = scmp.eq.s32.totalorder %s10, 1
    %p116 = por %p114, %p115
    %p117 = scmp.ne.s32.totalorder %s109, %s112
    %p118 = scmp.eq.s32.totalorder %s10, 0
    %p119 = por %p117, %p118
    %p120 = scmp.ne.s32.totalorder %s109, %s112
    %p121 = scmp.eq.s32.totalorder %s15, 1
    %p122 = por %p120, %p121
    %p123 = scmp.ne.s32.totalorder %s112, %s113
    %p124 = scmp.eq.s32.totalorder %s15, 0
    %p125 = por %p123, %p124
    %p126 = scmp.ne.s32.totalorder %s112, %s113
    %p127 = scmp.eq.s32.totalorder %s16, 1
    %p128 = por %p126, %p127
    %p130 = scmp.ne.s32.totalorder %s113, %s129
    %p131 = scmp.eq.s32.totalorder %s16, 0
    %p132 = por %p130, %p131
    %p133 = scmp.le.s32.totalorder 1, %s10
    %p134 = scmp.lt.s32.totalorder %s10, 3
    %p135 = pnand %p133, %p134
    %p136 = pneg %p135
    // Predicated region
    $region9: #{resnet_block_forward.2} parent=5 // pred_check
      _
    $region10: #{resnet_block_forward.2} parent=5 // pred_check_branch
      %138 = sbr.rel (%p135) target = $region12
    $region11: #{resnet_block_forward.2} parent=5 // pred_region
      %s139 = ssub.s32 %s10, 1
      // Predicated region
      $region13: #{resnet_block_forward.2} parent=11 // pred_check
        %p140 = pneg %p57
      $region14: #{resnet_block_forward.2} parent=11 // pred_check_branch
        %142 = sbr.rel (%p140) target = $region16
      $region15: #{resnet_block_forward.2} parent=11 // pred_region
        _
      $region16: #{resnet_block_forward.2} parent=11 // pred_fallthru
        _
      // Predicated region
      $region17: #{resnet_block_forward.2} parent=11 // pred_check
        %p143 = pneg %p78
      $region18: #{resnet_block_forward.2} parent=11 // pred_check_branch
        %145 = sbr.rel (%p143) target = $region20
      $region19: #{resnet_block_forward.2} parent=11 // pred_region
        _
      $region20: #{resnet_block_forward.2} parent=11 // pred_fallthru
        _
      // Predicated region
      $region21: #{resnet_block_forward.2} parent=11 // pred_check
        %p146 = pneg %p99
      $region22: #{resnet_block_forward.2} parent=11 // pred_check_branch
        %148 = sbr.rel (%p146) target = $region24
      $region23: #{resnet_block_forward.2} parent=11 // pred_region
        _
      $region24: #{resnet_block_forward.2} parent=11 // pred_fallthru
        _
    $region12: #{resnet_block_forward.2} parent=5 // pred_fallthru
      _
    %p149 = scmp.lt.s32.totalorder %s10, 2
    // Predicated region
    $region25: #{resnet_block_forward.2} parent=5 // pred_check
      %p150 = pneg %p149
    $region26: #{resnet_block_forward.2} parent=5 // pred_check_branch
      %152 = sbr.rel (%p150) target = $region28
    $region27: #{resnet_block_forward.2} parent=5 // pred_region
      // Predicated region
      $region29: #{resnet_block_forward.2} parent=27 // pred_check
        %p153 = pneg %p30
      $region30: #{resnet_block_forward.2} parent=27 // pred_check_branch
        %155 = sbr.rel (%p153) target = $region32
      $region31: #{resnet_block_forward.2} parent=27 // pred_region
        %p156 = scmp.lt.s32.totalorder %s10, 1
        %s157 = scalar_select %p156, %s10, 1
        %s158 = smul.addr %s157, 72
        %s159 = smul.addr %s158, 4
        %s160 = scalar_lea.vmem %s0, %s159
      $region32: #{resnet_block_forward.2} parent=27 // pred_fallthru
        _
    $region28: #{resnet_block_forward.2} parent=5 // pred_fallthru
      _
    %p161 = scmp.le.s32.totalorder 1, %s10
    %p162 = scmp.lt.s32.totalorder %s10, 3
    %p163 = pnand %p161, %p162
    %p164 = pneg %p163
    // Predicated region
    $region33: #{resnet_block_forward.2} parent=5 // pred_check
      _
    $region34: #{resnet_block_forward.2} parent=5 // pred_check_branch
      %166 = sbr.rel (%p163) target = $region36
    $region35: #{resnet_block_forward.2} parent=5 // pred_region
      %s167 = ssub.s32 %s10, 1
      %p168 = scmp.lt.s32.totalorder %s15, 1
      %s169 = scalar_select %p168, %s15, 1
      %s170 = smul.addr %s169, 72
      %s171 = smul.addr %s170, 4
      %s172 = scalar_lea.vmem %s0, %s171
      %p173 = pneg %p36
      %p174 = pneg %p33
      %p175 = pneg %p57
      %p176 = pneg %p54
      %p177 = pneg %p78
      %p178 = pneg %p75
      %p179 = pneg %p99
      %p180 = pneg %p96
      %p181 = pneg %p125
      %p182 = pneg %p122
      %p183 = scmp.lt.s32.totalorder %s15, 1
      %s184 = scalar_select %p183, %s15, 1
      %s185 = smul.addr %s184, 8
      %s186 = smul.addr %s185, 4
      %s187 = scalar_lea.vmem %s4, %s186
      %p188 = scmp.lt.s32.totalorder %s15, 1
      %s189 = scalar_select %p188, %s15, 1
      %s190 = smul.addr %s189, 72
      %s191 = smul.addr %s190, 4
      %s192 = scalar_lea.vmem %s0, %s191
      %p193 = scmp.lt.s32.totalorder %s15, 1
      %s194 = scalar_select %p193, %s15, 1
      %s195 = smul.addr %s194, 8
      %s196 = smul.addr %s195, 4
      %s197 = scalar_lea.vmem %s4, %s196
      %v199 = vld [vmem:[%s192] sm:$0xf]
      %v200 = vld [vmem:[%s192 + $0x8] sm:$0xf]
      %v201 = vld [vmem:[%s192 + $0x10] sm:$0xf]
      %v202 = vld [vmem:[%s192 + $0x18] sm:$0xf]
      %v203 = vld [vmem:[%s192 + $0x20] sm:$0xf]
      %v204 = vld [vmem:[%s192 + $0x28] sm:$0xf]
      %v205 = vld [vmem:[%s192 + $0x30] sm:$0xf]
      %v206 = vld [vmem:[%s192 + $0x38] sm:$0xf]
      %v207 = vld [vmem:[%s1] sm:$0x3]
      %s208 = scalar_lea.vmem %s192, 72
      %v209 = vld [vmem:[%s208] sm:$0xf]
      %v210 = vld [vmem:[%s208 + $0x8] sm:$0xf]
      %v211 = vld [vmem:[%s208 + $0x10] sm:$0xf]
      %v212 = vld [vmem:[%s208 + $0x18] sm:$0xf]
      %v213 = vld [vmem:[%s208 + $0x20] sm:$0xf]
      %v214 = vld [vmem:[%s208 + $0x28] sm:$0xf]
      %v215 = vld [vmem:[%s208 + $0x30] sm:$0xf]
      %v216 = vld [vmem:[%s208 + $0x38] sm:$0xf]
      %s217 = scalar_lea.vmem %s1, 2
      %v218 = vld [vmem:[%s217] sm:$0x3]
      %v227 = vunpack.c.l.b16 %v209
      %v228 = vunpack.c.l.b16 %v210
      %v229 = vunpack.c.l.b16 %v211
      %v230 = vunpack.c.l.b16 %v212
      %v231 = vunpack.c.l.b16 %v213
      %v232 = vunpack.c.l.b16 %v214
      %v233 = vunpack.c.l.b16 %v215
      %v234 = vunpack.c.l.b16 %v216
      %v235 = vpack.c.b16 %v228, %v227
      %v236 = vpack.c.b16 %v230, %v229
      %v237 = vpack.c.b16 %v232, %v231
      %v238 = vpack.c.b16 %v234, %v233
      %vm239 = vcmask 31744
      %v241 = vsel %vm239, %v235, 0
      %v244 = vsel %vm239, %v236, 0
      %v247 = vsel %vm239, %v237, 0
      %v250 = vsel %vm239, %v238, 0
      %vm252 = vcmask 1041408
      %v254 = vsel %vm252, %v218, 0
      %256 = vmatprep.subr.bf16.mxu0 0
      %257 = vmatpush1.bf16.msra.mxu0 0
      %258 = vmatprep.subr.bf16.mxu0 0
      %259 = vmatpush1.bf16.msra.mxu0 0
      %260 = vmatprep.subr.bf16.mxu0 0
      %261 = vmatpush1.bf16.msra.mxu0 0
      %262 = vmatprep.subr.bf16.mxu0 0
      %263 = vmatpush1.bf16.msra.mxu0 0
      %264 = vmatprep.subr.bf16.mxu0 0
      %265 = vmatpush1.bf16.msra.mxu0 0
      %266 = vmatprep.subr.bf16.mxu0 0
      %267 = vmatpush1.bf16.msra.mxu0 0
      %268 = vmatprep.subr.bf16.mxu0 0
      %269 = vmatpush1.bf16.msra.mxu0 0
      %270 = vmatprep.subr.bf16.mxu0 0
      %271 = vmatpush1.bf16.msra.mxu0 %v254
      %272 = vmatprep.subr.bf16.mxu0 0
      %273 = vmatpush2.bf16.msra.mxu0 0
      %274 = vmatprep.subr.bf16.mxu0 0
      %275 = vmatpush2.bf16.msra.mxu0 0
      %276 = vmatprep.subr.bf16.mxu0 0
      %277 = vmatpush2.bf16.msra.mxu0 0
      %278 = vmatprep.subr.bf16.mxu0 0
      %279 = vmatpush2.bf16.msra.mxu0 0
      %280 = vmatprep.subr.bf16.mxu0 0
      %281 = vmatpush2.bf16.msra.mxu0 0
      %282 = vmatprep.subr.bf16.mxu0 0
      %283 = vmatpush2.bf16.msra.mxu0 0
      %284 = vmatprep.subr.bf16.mxu0 0
      %285 = vmatpush2.bf16.msra.mxu0 0
      %286 = vmatprep.subr.bf16.mxu0 0
      %287 = vmatpush2.bf16.msra.mxu0 0
      %288 = vmatprep.mubr.bf16.mxu0 0
      %289 = vmatmul.mubr.bf16.gmra.mxu0 %v241
      %v290 = vpop.f32.mrf.mxu0
      %v291 = vadd.f32 0.0, %v290
      %v292 = vpop.f32.mrf.mxu0
      %v293 = vpop.f32.mrf.mxu0
      %v294 = vadd.f32 0.0, %v293
      %v295 = vpop.f32.mrf.mxu0
      %296 = vmatprep.mubr.bf16.mxu0 0
      %297 = vmatmul.mubr.bf16.gmra.mxu0 %v244
      %v298 = vpop.f32.mrf.mxu0
      %v299 = vadd.f32 0.0, %v298
      %v300 = vpop.f32.mrf.mxu0
      %v301 = vpop.f32.mrf.mxu0
      %v302 = vadd.f32 0.0, %v301
      %v303 = vpop.f32.mrf.mxu0
      %304 = vmatprep.mubr.bf16.mxu0 0
      %305 = vmatmul.mubr.bf16.gmra.mxu0 %v247
      %v306 = vpop.f32.mrf.mxu0
      %v307 = vadd.f32 0.0, %v306
      %v308 = vpop.f32.mrf.mxu0
      %v309 = vpop.f32.mrf.mxu0
      %v310 = vadd.f32 0.0, %v309
      %v311 = vpop.f32.mrf.mxu0
      %312 = vmatprep.mubr.bf16.mxu0 0
      %313 = vmatmul.mubr.bf16.gmra.mxu0 %v250
      %v314 = vpop.f32.mrf.mxu0
      %v315 = vadd.f32 0.0, %v314
      %v316 = vpop.f32.mrf.mxu0
      %v317 = vpop.f32.mrf.mxu0
      %v318 = vadd.f32 0.0, %v317
      %v319 = vpop.f32.mrf.mxu0
      %320 = vdwg.mxu0
      %v329 = vunpack.c.l.b16 %v199
      %v330 = vunpack.c.l.b16 %v200
      %v331 = vunpack.c.l.b16 %v201
      %v332 = vunpack.c.l.b16 %v202
      %v333 = vunpack.c.l.b16 %v203
      %v334 = vunpack.c.l.b16 %v204
      %v335 = vunpack.c.l.b16 %v205
      %v336 = vunpack.c.l.b16 %v206
      %v337 = vpack.c.b16 %v330, %v329
      %v338 = vpack.c.b16 %v332, %v331
      %v339 = vpack.c.b16 %v334, %v333
      %v340 = vpack.c.b16 %v336, %v335
      %v342 = vsel %vm239, %v337, 0
      %v345 = vsel %vm239, %v338, 0
      %v348 = vsel %vm239, %v339, 0
      %v351 = vsel %vm239, %v340, 0
      %v354 = vsel %vm252, %v207, 0
      %356 = vmatprep.subr.bf16.mxu0 0
      %357 = vmatpush1.bf16.msra.mxu0 0
      %358 = vmatprep.subr.bf16.mxu0 0
      %359 = vmatpush1.bf16.msra.mxu0 0
      %360 = vmatprep.subr.bf16.mxu0 0
      %361 = vmatpush1.bf16.msra.mxu0 0
      %362 = vmatprep.subr.bf16.mxu0 0
      %363 = vmatpush1.bf16.msra.mxu0 0
      %364 = vmatprep.subr.bf16.mxu0 0
      %365 = vmatpush1.bf16.msra.mxu0 0
      %366 = vmatprep.subr.bf16.mxu0 0
      %367 = vmatpush1.bf16.msra.mxu0 0
      %368 = vmatprep.subr.bf16.mxu0 0
      %369 = vmatpush1.bf16.msra.mxu0 0
      %370 = vmatprep.subr.bf16.mxu0 0
      %371 = vmatpush1.bf16.msra.mxu0 %v354
      %372 = vmatprep.subr.bf16.mxu0 0
      %373 = vmatpush2.bf16.msra.mxu0 0
      %374 = vmatprep.subr.bf16.mxu0 0
      %375 = vmatpush2.bf16.msra.mxu0 0
      %376 = vmatprep.subr.bf16.mxu0 0
      %377 = vmatpush2.bf16.msra.mxu0 0
      %378 = vmatprep.subr.bf16.mxu0 0
      %379 = vmatpush2.bf16.msra.mxu0 0
      %380 = vmatprep.subr.bf16.mxu0 0
      %381 = vmatpush2.bf16.msra.mxu0 0
      %382 = vmatprep.subr.bf16.mxu0 0
      %383 = vmatpush2.bf16.msra.mxu0 0
      %384 = vmatprep.subr.bf16.mxu0 0
      %385 = vmatpush2.bf16.msra.mxu0 0
      %386 = vmatprep.subr.bf16.mxu0 0
      %387 = vmatpush2.bf16.msra.mxu0 0
      %388 = vmatprep.mubr.bf16.mxu0 0
      %389 = vmatmul.mubr.bf16.gmra.mxu0 %v342
      %v390 = vpop.f32.mrf.mxu0
      %v391 = vadd.f32 %v291, %v390
      %v392 = vpop.f32.mrf.mxu0
      %v393 = vpop.f32.mrf.mxu0
      %v394 = vadd.f32 %v294, %v393
      %v395 = vpop.f32.mrf.mxu0
      %396 = vmatprep.mubr.bf16.mxu0 0
      %397 = vmatmul.mubr.bf16.gmra.mxu0 %v345
      %v398 = vpop.f32.mrf.mxu0
      %v399 = vadd.f32 %v299, %v398
      %v400 = vpop.f32.mrf.mxu0
      %v401 = vpop.f32.mrf.mxu0
      %v402 = vadd.f32 %v302, %v401
      %v403 = vpop.f32.mrf.mxu0
      %404 = vmatprep.mubr.bf16.mxu0 0
      %405 = vmatmul.mubr.bf16.gmra.mxu0 %v348
      %v406 = vpop.f32.mrf.mxu0
      %v407 = vadd.f32 %v307, %v406
      %v408 = vpop.f32.mrf.mxu0
      %v409 = vpop.f32.mrf.mxu0
      %v410 = vadd.f32 %v310, %v409
      %v411 = vpop.f32.mrf.mxu0
      %412 = vmatprep.mubr.bf16.mxu0 0
      %413 = vmatmul.mubr.bf16.gmra.mxu0 %v351
      %v414 = vpop.f32.mrf.mxu0
      %v415 = vadd.f32 %v315, %v414
      %v416 = vpop.f32.mrf.mxu0
      %v417 = vpop.f32.mrf.mxu0
      %v418 = vadd.f32 %v318, %v417
      %v419 = vpop.f32.mrf.mxu0
      %420 = vdwg.mxu0
      %v421 = vld [vmem:[%s192] sm:$0xf]
      %v422 = vld [vmem:[%s192 + $0x4] sm:$0x1]
      %v423 = vld [vmem:[%s192 + $0x8] sm:$0xf]
      %v424 = vld [vmem:[%s192 + $0xc] sm:$0x1]
      %v425 = vld [vmem:[%s192 + $0x10] sm:$0xf]
      %v426 = vld [vmem:[%s192 + $0x14] sm:$0x1]
      %v427 = vld [vmem:[%s192 + $0x18] sm:$0xf]
      %v428 = vld [vmem:[%s192 + $0x1c] sm:$0x1]
      %v429 = vld [vmem:[%s192 + $0x20] sm:$0xf]
      %v430 = vld [vmem:[%s192 + $0x24] sm:$0x1]
      %v431 = vld [vmem:[%s192 + $0x28] sm:$0xf]
      %v432 = vld [vmem:[%s192 + $0x2c] sm:$0x1]
      %v433 = vld [vmem:[%s192 + $0x30] sm:$0xf]
      %v434 = vld [vmem:[%s192 + $0x34] sm:$0x1]
      %v435 = vld [vmem:[%s192 + $0x38] sm:$0xf]
      %v436 = vld [vmem:[%s192 + $0x3c] sm:$0x1]
      %vm437 = vsmask.f32 3328
      %vm438 = vsmask.f32 7440
      %vm439 = vmor %vm437, %vm438
      %v441 = vshrl.u32 %v421, 16
      %v443 = vrot.slane %v441, 4
      %v444 = vshll.u32 %v421, 16
      %v446 = vrot.slane %v444, 5
      %v447 = vor.u32 %v443, %v446
      %v448 = vrot.slane %v447, 4
      %v450 = vshll.u32 %v422, 16
      %v452 = vrot.slane %v450, 5
      %v453 = vsel %vm439, %v448, %v452
      %v455 = vshrl.u32 %v423, 16
      %v457 = vrot.slane %v455, 4
      %v458 = vshll.u32 %v423, 16
      %v460 = vrot.slane %v458, 5
      %v461 = vor.u32 %v457, %v460
      %v462 = vrot.slane %v461, 4
      %v464 = vshll.u32 %v424, 16
      %v466 = vrot.slane %v464, 5
      %v467 = vsel %vm439, %v462, %v466
      %v469 = vshrl.u32 %v425, 16
      %v471 = vrot.slane %v469, 4
      %v472 = vshll.u32 %v425, 16
      %v474 = vrot.slane %v472, 5
      %v475 = vor.u32 %v471, %v474
      %v476 = vrot.slane %v475, 4
      %v478 = vshll.u32 %v426, 16
      %v480 = vrot.slane %v478, 5
      %v481 = vsel %vm439, %v476, %v480
      %v483 = vshrl.u32 %v427, 16
      %v485 = vrot.slane %v483, 4
      %v486 = vshll.u32 %v427, 16
      %v488 = vrot.slane %v486, 5
      %v489 = vor.u32 %v485, %v488
      %v490 = vrot.slane %v489, 4
      %v492 = vshll.u32 %v428, 16
      %v494 = vrot.slane %v492, 5
      %v495 = vsel %vm439, %v490, %v494
      %v497 = vshrl.u32 %v429, 16
      %v499 = vrot.slane %v497, 4
      %v500 = vshll.u32 %v429, 16
      %v502 = vrot.slane %v500, 5
      %v503 = vor.u32 %v499, %v502
      %v504 = vrot.slane %v503, 4
      %v506 = vshll.u32 %v430, 16
      %v508 = vrot.slane %v506, 5
      %v509 = vsel %vm439, %v504, %v508
      %v511 = vshrl.u32 %v431, 16
      %v513 = vrot.slane %v511, 4
      %v514 = vshll.u32 %v431, 16
      %v516 = vrot.slane %v514, 5
      %v517 = vor.u32 %v513, %v516
      %v518 = vrot.slane %v517, 4
      %v520 = vshll.u32 %v432, 16
      %v522 = vrot.slane %v520, 5
      %v523 = vsel %vm439, %v518, %v522
      %v525 = vshrl.u32 %v433, 16
      %v527 = vrot.slane %v525, 4
      %v528 = vshll.u32 %v433, 16
      %v530 = vrot.slane %v528, 5
      %v531 = vor.u32 %v527, %v530
      %v532 = vrot.slane %v531, 4
      %v534 = vshll.u32 %v434, 16
      %v536 = vrot.slane %v534, 5
      %v537 = vsel %vm439, %v532, %v536
      %v539 = vshrl.u32 %v435, 16
      %v541 = vrot.slane %v539, 4
      %v542 = vshll.u32 %v435, 16
      %v544 = vrot.slane %v542, 5
      %v545 = vor.u32 %v541, %v544
      %v546 = vrot.slane %v545, 4
      %v548 = vshll.u32 %v436, 16
      %v550 = vrot.slane %v548, 5
      %v551 = vsel %vm439, %v546, %v550
      %s552 = scalar_lea.vmem %s1, 4
      %v553 = vld [vmem:[%s552] sm:$0x3]
      %v554 = vunpack.c.l.b16 %v453
      %v555 = vunpack.c.l.b16 %v467
      %v556 = vunpack.c.l.b16 %v481
      %v557 = vunpack.c.l.b16 %v495
      %v558 = vunpack.c.l.b16 %v509
      %v559 = vunpack.c.l.b16 %v523
      %v560 = vunpack.c.l.b16 %v537
      %v561 = vunpack.c.l.b16 %v551
      %v562 = vpack.c.b16 %v555, %v554
      %v563 = vpack.c.b16 %v557, %v556
      %v564 = vpack.c.b16 %v559, %v558
      %v565 = vpack.c.b16 %v561, %v560
      %v567 = vsel %vm239, %v562, 0
      %v570 = vsel %vm239, %v563, 0
      %v573 = vsel %vm239, %v564, 0
      %v576 = vsel %vm239, %v565, 0
      %v579 = vsel %vm252, %v553, 0
      %581 = vmatprep.subr.bf16.mxu0 0
      %582 = vmatpush1.bf16.msra.mxu0 0
      %583 = vmatprep.subr.bf16.mxu0 0
      %584 = vmatpush1.bf16.msra.mxu0 0
      %585 = vmatprep.subr.bf16.mxu0 0
      %586 = vmatpush1.bf16.msra.mxu0 0
      %587 = vmatprep.subr.bf16.mxu0 0
      %588 = vmatpush1.bf16.msra.mxu0 0
      %589 = vmatprep.subr.bf16.mxu0 0
      %590 = vmatpush1.bf16.msra.mxu0 0
      %591 = vmatprep.subr.bf16.mxu0 0
      %592 = vmatpush1.bf16.msra.mxu0 0
      %593 = vmatprep.subr.bf16.mxu0 0
      %594 = vmatpush1.bf16.msra.mxu0 0
      %595 = vmatprep.subr.bf16.mxu0 0
      %596 = vmatpush1.bf16.msra.mxu0 %v579
      %597 = vmatprep.subr.bf16.mxu0 0
      %598 = vmatpush2.bf16.msra.mxu0 0
      %599 = vmatprep.subr.bf16.mxu0 0
      %600 = vmatpush2.bf16.msra.mxu0 0
      %601 = vmatprep.subr.bf16.mxu0 0
      %602 = vmatpush2.bf16.msra.mxu0 0
      %603 = vmatprep.subr.bf16.mxu0 0
      %604 = vmatpush2.bf16.msra.mxu0 0
      %605 = vmatprep.subr.bf16.mxu0 0
      %606 = vmatpush2.bf16.msra.mxu0 0
      %607 = vmatprep.subr.bf16.mxu0 0
      %608 = vmatpush2.bf16.msra.mxu0 0
      %609 = vmatprep.subr.bf16.mxu0 0
      %610 = vmatpush2.bf16.msra.mxu0 0
      %611 = vmatprep.subr.bf16.mxu0 0
      %612 = vmatpush2.bf16.msra.mxu0 0
      %613 = vmatprep.mubr.bf16.mxu0 0
      %614 = vmatmul.mubr.bf16.gmra.mxu0 %v567
      %v615 = vpop.f32.mrf.mxu0
      %v616 = vadd.f32 0.0, %v615
      %v617 = vpop.f32.mrf.mxu0
      %v618 = vpop.f32.mrf.mxu0
      %v619 = vadd.f32 0.0, %v618
      %v620 = vpop.f32.mrf.mxu0
      %621 = vmatprep.mubr.bf16.mxu0 0
      %622 = vmatmul.mubr.bf16.gmra.mxu0 %v570
      %v623 = vpop.f32.mrf.mxu0
      %v624 = vadd.f32 0.0, %v623
      %v625 = vpop.f32.mrf.mxu0
      %v626 = vpop.f32.mrf.mxu0
      %v627 = vadd.f32 0.0, %v626
      %v628 = vpop.f32.mrf.mxu0
      %629 = vmatprep.mubr.bf16.mxu0 0
      %630 = vmatmul.mubr.bf16.gmra.mxu0 %v573
      %v631 = vpop.f32.mrf.mxu0
      %v632 = vadd.f32 0.0, %v631
      %v633 = vpop.f32.mrf.mxu0
      %v634 = vpop.f32.mrf.mxu0
      %v635 = vadd.f32 0.0, %v634
      %v636 = vpop.f32.mrf.mxu0
      %637 = vmatprep.mubr.bf16.mxu0 0
      %638 = vmatmul.mubr.bf16.gmra.mxu0 %v576
      %v639 = vpop.f32.mrf.mxu0
      %v640 = vadd.f32 0.0, %v639
      %v641 = vpop.f32.mrf.mxu0
      %v642 = vpop.f32.mrf.mxu0
      %v643 = vadd.f32 0.0, %v642
      %v644 = vpop.f32.mrf.mxu0
      %645 = vdwg.mxu0
      %v646 = vadd.f32 %v391, %v616
      %v647 = vadd.f32 %v394, %v619
      %v648 = vadd.f32 %v399, %v624
      %v649 = vadd.f32 %v402, %v627
      %v650 = vadd.f32 %v407, %v632
      %v651 = vadd.f32 %v410, %v635
      %v652 = vadd.f32 %v415, %v640
      %v653 = vadd.f32 %v418, %v643
      %s654 = scalar_lea.vmem %s192, 144
      %v655 = vld [vmem:[%s654] sm:$0xf]
      %v656 = vld [vmem:[%s654 + $0x8] sm:$0xf]
      %v657 = vld [vmem:[%s654 + $0x10] sm:$0xf]
      %v658 = vld [vmem:[%s654 + $0x18] sm:$0xf]
      %v659 = vld [vmem:[%s654 + $0x20] sm:$0xf]
      %v660 = vld [vmem:[%s654 + $0x28] sm:$0xf]
      %v661 = vld [vmem:[%s654 + $0x30] sm:$0xf]
      %v662 = vld [vmem:[%s654 + $0x38] sm:$0xf]
      %s663 = scalar_lea.vmem %s1, 6
      %v664 = vld [vmem:[%s663] sm:$0x3]
      %v673 = vunpack.c.l.b16 %v655
      %v674 = vunpack.c.l.b16 %v656
      %v675 = vunpack.c.l.b16 %v657
      %v676 = vunpack.c.l.b16 %v658
      %v677 = vunpack.c.l.b16 %v659
      %v678 = vunpack.c.l.b16 %v660
      %v679 = vunpack.c.l.b16 %v661
      %v680 = vunpack.c.l.b16 %v662
      %v681 = vpack.c.b16 %v674, %v673
      %v682 = vpack.c.b16 %v676, %v675
      %v683 = vpack.c.b16 %v678, %v677
      %v684 = vpack.c.b16 %v680, %v679
      %v686 = vsel %vm239, %v681, 0
      %v689 = vsel %vm239, %v682, 0
      %v692 = vsel %vm239, %v683, 0
      %v695 = vsel %vm239, %v684, 0
      %v698 = vsel %vm252, %v664, 0
      %700 = vmatprep.subr.bf16.mxu0 0
      %701 = vmatpush1.bf16.msra.mxu0 0
      %702 = vmatprep.subr.bf16.mxu0 0
      %703 = vmatpush1.bf16.msra.mxu0 0
      %704 = vmatprep.subr.bf16.mxu0 0
      %705 = vmatpush1.bf16.msra.mxu0 0
      %706 = vmatprep.subr.bf16.mxu0 0
      %707 = vmatpush1.bf16.msra.mxu0 0
      %708 = vmatprep.subr.bf16.mxu0 0
      %709 = vmatpush1.bf16.msra.mxu0 0
      %710 = vmatprep.subr.bf16.mxu0 0
      %711 = vmatpush1.bf16.msra.mxu0 0
      %712 = vmatprep.subr.bf16.mxu0 0
      %713 = vmatpush1.bf16.msra.mxu0 0
      %714 = vmatprep.subr.bf16.mxu0 0
      %715 = vmatpush1.bf16.msra.mxu0 %v698
      %716 = vmatprep.subr.bf16.mxu0 0
      %717 = vmatpush2.bf16.msra.mxu0 0
      %718 = vmatprep.subr.bf16.mxu0 0
      %719 = vmatpush2.bf16.msra.mxu0 0
      %720 = vmatprep.subr.bf16.mxu0 0
      %721 = vmatpush2.bf16.msra.mxu0 0
      %722 = vmatprep.subr.bf16.mxu0 0
      %723 = vmatpush2.bf16.msra.mxu0 0
      %724 = vmatprep.subr.bf16.mxu0 0
      %725 = vmatpush2.bf16.msra.mxu0 0
      %726 = vmatprep.subr.bf16.mxu0 0
      %727 = vmatpush2.bf16.msra.mxu0 0
      %728 = vmatprep.subr.bf16.mxu0 0
      %729 = vmatpush2.bf16.msra.mxu0 0
      %730 = vmatprep.subr.bf16.mxu0 0
      %731 = vmatpush2.bf16.msra.mxu0 0
      %732 = vmatprep.mubr.bf16.mxu0 0
      %733 = vmatmul.mubr.bf16.gmra.mxu0 %v686
      %v734 = vpop.f32.mrf.mxu0
      %v735 = vadd.f32 0.0, %v734
      %v736 = vpop.f32.mrf.mxu0
      %v737 = vpop.f32.mrf.mxu0
      %v738 = vadd.f32 0.0, %v737
      %v739 = vpop.f32.mrf.mxu0
      %740 = vmatprep.mubr.bf16.mxu0 0
      %741 = vmatmul.mubr.bf16.gmra.mxu0 %v689
      %v742 = vpop.f32.mrf.mxu0
      %v743 = vadd.f32 0.0, %v742
      %v744 = vpop.f32.mrf.mxu0
      %v745 = vpop.f32.mrf.mxu0
      %v746 = vadd.f32 0.0, %v745
      %v747 = vpop.f32.mrf.mxu0
      %748 = vmatprep.mubr.bf16.mxu0 0
      %749 = vmatmul.mubr.bf16.gmra.mxu0 %v692
      %v750 = vpop.f32.mrf.mxu0
      %v751 = vadd.f32 0.0, %v750
      %v752 = vpop.f32.mrf.mxu0
      %v753 = vpop.f32.mrf.mxu0
      %v754 = vadd.f32 0.0, %v753
      %v755 = vpop.f32.mrf.mxu0
      %756 = vmatprep.mubr.bf16.mxu0 0
      %757 = vmatmul.mubr.bf16.gmra.mxu0 %v695
      %v758 = vpop.f32.mrf.mxu0
      %v759 = vadd.f32 0.0, %v758
      %v760 = vpop.f32.mrf.mxu0
      %v761 = vpop.f32.mrf.mxu0
      %v762 = vadd.f32 0.0, %v761
      %v763 = vpop.f32.mrf.mxu0
      %764 = vdwg.mxu0
      %v765 = vadd.f32 %v646, %v735
      %v766 = vadd.f32 %v647, %v738
      %v767 = vadd.f32 %v648, %v743
      %v768 = vadd.f32 %v649, %v746
      %v769 = vadd.f32 %v650, %v751
      %v770 = vadd.f32 %v651, %v754
      %v771 = vadd.f32 %v652, %v759
      %v772 = vadd.f32 %v653, %v762
      %s773 = scalar_lea.vmem %s192, 216
      %v774 = vld [vmem:[%s773] sm:$0xf]
      %v775 = vld [vmem:[%s773 + $0x8] sm:$0xf]
      %v776 = vld [vmem:[%s773 + $0x10] sm:$0xf]
      %v777 = vld [vmem:[%s773 + $0x18] sm:$0xf]
      %v778 = vld [vmem:[%s773 + $0x20] sm:$0xf]
      %v779 = vld [vmem:[%s773 + $0x28] sm:$0xf]
      %v780 = vld [vmem:[%s773 + $0x30] sm:$0xf]
      %v781 = vld [vmem:[%s773 + $0x38] sm:$0xf]
      %s782 = scalar_lea.vmem %s1, 8
      %v783 = vld [vmem:[%s782] sm:$0x3]
      %v792 = vunpack.c.l.b16 %v774
      %v793 = vunpack.c.l.b16 %v775
      %v794 = vunpack.c.l.b16 %v776
      %v795 = vunpack.c.l.b16 %v777
      %v796 = vunpack.c.l.b16 %v778
      %v797 = vunpack.c.l.b16 %v779
      %v798 = vunpack.c.l.b16 %v780
      %v799 = vunpack.c.l.b16 %v781
      %v800 = vpack.c.b16 %v793, %v792
      %v801 = vpack.c.b16 %v795, %v794
      %v802 = vpack.c.b16 %v797, %v796
      %v803 = vpack.c.b16 %v799, %v798
      %v805 = vsel %vm239, %v800, 0
      %v808 = vsel %vm239, %v801, 0
      %v811 = vsel %vm239, %v802, 0
      %v814 = vsel %vm239, %v803, 0
      %v817 = vsel %vm252, %v783, 0
      %819 = vmatprep.subr.bf16.mxu0 0
      %820 = vmatpush1.bf16.msra.mxu0 0
      %821 = vmatprep.subr.bf16.mxu0 0
      %822 = vmatpush1.bf16.msra.mxu0 0
      %823 = vmatprep.subr.bf16.mxu0 0
      %824 = vmatpush1.bf16.msra.mxu0 0
      %825 = vmatprep.subr.bf16.mxu0 0
      %826 = vmatpush1.bf16.msra.mxu0 0
      %827 = vmatprep.subr.bf16.mxu0 0
      %828 = vmatpush1.bf16.msra.mxu0 0
      %829 = vmatprep.subr.bf16.mxu0 0
      %830 = vmatpush1.bf16.msra.mxu0 0
      %831 = vmatprep.subr.bf16.mxu0 0
      %832 = vmatpush1.bf16.msra.mxu0 0
      %833 = vmatprep.subr.bf16.mxu0 0
      %834 = vmatpush1.bf16.msra.mxu0 %v817
      %835 = vmatprep.subr.bf16.mxu0 0
      %836 = vmatpush2.bf16.msra.mxu0 0
      %837 = vmatprep.subr.bf16.mxu0 0
      %838 = vmatpush2.bf16.msra.mxu0 0
      %839 = vmatprep.subr.bf16.mxu0 0
      %840 = vmatpush2.bf16.msra.mxu0 0
      %841 = vmatprep.subr.bf16.mxu0 0
      %842 = vmatpush2.bf16.msra.mxu0 0
      %843 = vmatprep.subr.bf16.mxu0 0
      %844 = vmatpush2.bf16.msra.mxu0 0
      %845 = vmatprep.subr.bf16.mxu0 0
      %846 = vmatpush2.bf16.msra.mxu0 0
      %847 = vmatprep.subr.bf16.mxu0 0
      %848 = vmatpush2.bf16.msra.mxu0 0
      %849 = vmatprep.subr.bf16.mxu0 0
      %850 = vmatpush2.bf16.msra.mxu0 0
      %851 = vmatprep.mubr.bf16.mxu0 0
      %852 = vmatmul.mubr.bf16.gmra.mxu0 %v805
      %v853 = vpop.f32.mrf.mxu0
      %v854 = vadd.f32 0.0, %v853
      %v855 = vpop.f32.mrf.mxu0
      %v856 = vpop.f32.mrf.mxu0
      %v857 = vadd.f32 0.0, %v856
      %v858 = vpop.f32.mrf.mxu0
      %859 = vmatprep.mubr.bf16.mxu0 0
      %860 = vmatmul.mubr.bf16.gmra.mxu0 %v808
      %v861 = vpop.f32.mrf.mxu0
      %v862 = vadd.f32 0.0, %v861
      %v863 = vpop.f32.mrf.mxu0
      %v864 = vpop.f32.mrf.mxu0
      %v865 = vadd.f32 0.0, %v864
      %v866 = vpop.f32.mrf.mxu0
      %867 = vmatprep.mubr.bf16.mxu0 0
      %868 = vmatmul.mubr.bf16.gmra.mxu0 %v811
      %v869 = vpop.f32.mrf.mxu0
      %v870 = vadd.f32 0.0, %v869
      %v871 = vpop.f32.mrf.mxu0
      %v872 = vpop.f32.mrf.mxu0
      %v873 = vadd.f32 0.0, %v872
      %v874 = vpop.f32.mrf.mxu0
      %875 = vmatprep.mubr.bf16.mxu0 0
      %876 = vmatmul.mubr.bf16.gmra.mxu0 %v814
      %v877 = vpop.f32.mrf.mxu0
      %v878 = vadd.f32 0.0, %v877
      %v879 = vpop.f32.mrf.mxu0
      %v880 = vpop.f32.mrf.mxu0
      %v881 = vadd.f32 0.0, %v880
      %v882 = vpop.f32.mrf.mxu0
      %883 = vdwg.mxu0
      %v884 = vadd.f32 %v765, %v854
      %v885 = vadd.f32 %v766, %v857
      %v886 = vadd.f32 %v767, %v862
      %v887 = vadd.f32 %v768, %v865
      %v888 = vadd.f32 %v769, %v870
      %v889 = vadd.f32 %v770, %v873
      %v890 = vadd.f32 %v771, %v878
      %v891 = vadd.f32 %v772, %v881
      %v892 = vld [vmem:[%s654] sm:$0xf]
      %v893 = vld [vmem:[%s654 + $0x4] sm:$0x1]
      %v894 = vld [vmem:[%s654 + $0x8] sm:$0xf]
      %v895 = vld [vmem:[%s654 + $0xc] sm:$0x1]
      %v896 = vld [vmem:[%s654 + $0x10] sm:$0xf]
      %v897 = vld [vmem:[%s654 + $0x14] sm:$0x1]
      %v898 = vld [vmem:[%s654 + $0x18] sm:$0xf]
      %v899 = vld [vmem:[%s654 + $0x1c] sm:$0x1]
      %v900 = vld [vmem:[%s654 + $0x20] sm:$0xf]
      %v901 = vld [vmem:[%s654 + $0x24] sm:$0x1]
      %v902 = vld [vmem:[%s654 + $0x28] sm:$0xf]
      %v903 = vld [vmem:[%s654 + $0x2c] sm:$0x1]
      %v904 = vld [vmem:[%s654 + $0x30] sm:$0xf]
      %v905 = vld [vmem:[%s654 + $0x34] sm:$0x1]
      %v906 = vld [vmem:[%s654 + $0x38] sm:$0xf]
      %v907 = vld [vmem:[%s654 + $0x3c] sm:$0x1]
      %v909 = vshrl.u32 %v892, 16
      %v911 = vrot.slane %v909, 4
      %v912 = vshll.u32 %v892, 16
      %v914 = vrot.slane %v912, 5
      %v915 = vor.u32 %v911, %v914
      %v916 = vrot.slane %v915, 4
      %v918 = vshll.u32 %v893, 16
      %v920 = vrot.slane %v918, 5
      %v921 = vsel %vm439, %v916, %v920
      %v923 = vshrl.u32 %v894, 16
      %v925 = vrot.slane %v923, 4
      %v926 = vshll.u32 %v894, 16
      %v928 = vrot.slane %v926, 5
      %v929 = vor.u32 %v925, %v928
      %v930 = vrot.slane %v929, 4
      %v932 = vshll.u32 %v895, 16
      %v934 = vrot.slane %v932, 5
      %v935 = vsel %vm439, %v930, %v934
      %v937 = vshrl.u32 %v896, 16
      %v939 = vrot.slane %v937, 4
      %v940 = vshll.u32 %v896, 16
      %v942 = vrot.slane %v940, 5
      %v943 = vor.u32 %v939, %v942
      %v944 = vrot.slane %v943, 4
      %v946 = vshll.u32 %v897, 16
      %v948 = vrot.slane %v946, 5
      %v949 = vsel %vm439, %v944, %v948
      %v951 = vshrl.u32 %v898, 16
      %v953 = vrot.slane %v951, 4
      %v954 = vshll.u32 %v898, 16
      %v956 = vrot.slane %v954, 5
      %v957 = vor.u32 %v953, %v956
      %v958 = vrot.slane %v957, 4
      %v960 = vshll.u32 %v899, 16
      %v962 = vrot.slane %v960, 5
      %v963 = vsel %vm439, %v958, %v962
      %v965 = vshrl.u32 %v900, 16
      %v967 = vrot.slane %v965, 4
      %v968 = vshll.u32 %v900, 16
      %v970 = vrot.slane %v968, 5
      %v971 = vor.u32 %v967, %v970
      %v972 = vrot.slane %v971, 4
      %v974 = vshll.u32 %v901, 16
      %v976 = vrot.slane %v974, 5
      %v977 = vsel %vm439, %v972, %v976
      %v979 = vshrl.u32 %v902, 16
      %v981 = vrot.slane %v979, 4
      %v982 = vshll.u32 %v902, 16
      %v984 = vrot.slane %v982, 5
      %v985 = vor.u32 %v981, %v984
      %v986 = vrot.slane %v985, 4
      %v988 = vshll.u32 %v903, 16
      %v990 = vrot.slane %v988, 5
      %v991 = vsel %vm439, %v986, %v990
      %v993 = vshrl.u32 %v904, 16
      %v995 = vrot.slane %v993, 4
      %v996 = vshll.u32 %v904, 16
      %v998 = vrot.slane %v996, 5
      %v999 = vor.u32 %v995, %v998
      %v1000 = vrot.slane %v999, 4
      %v1002 = vshll.u32 %v905, 16
      %v1004 = vrot.slane %v1002, 5
      %v1005 = vsel %vm439, %v1000, %v1004
      %v1007 = vshrl.u32 %v906, 16
      %v1009 = vrot.slane %v1007, 4
      %v1010 = vshll.u32 %v906, 16
      %v1012 = vrot.slane %v1010, 5
      %v1013 = vor.u32 %v1009, %v1012
      %v1014 = vrot.slane %v1013, 4
      %v1016 = vshll.u32 %v907, 16
      %v1018 = vrot.slane %v1016, 5
      %v1019 = vsel %vm439, %v1014, %v1018
      %s1020 = scalar_lea.vmem %s1, 10
      %v1021 = vld [vmem:[%s1020] sm:$0x3]
      %v1022 = vunpack.c.l.b16 %v921
      %v1023 = vunpack.c.l.b16 %v935
      %v1024 = vunpack.c.l.b16 %v949
      %v1025 = vunpack.c.l.b16 %v963
      %v1026 = vunpack.c.l.b16 %v977
      %v1027 = vunpack.c.l.b16 %v991
      %v1028 = vunpack.c.l.b16 %v1005
      %v1029 = vunpack.c.l.b16 %v1019
      %v1030 = vpack.c.b16 %v1023, %v1022
      %v1031 = vpack.c.b16 %v1025, %v1024
      %v1032 = vpack.c.b16 %v1027, %v1026
      %v1033 = vpack.c.b16 %v1029, %v1028
      %v1035 = vsel %vm239, %v1030, 0
      %v1038 = vsel %vm239, %v1031, 0
      %v1041 = vsel %vm239, %v1032, 0
      %v1044 = vsel %vm239, %v1033, 0
      %v1047 = vsel %vm252, %v1021, 0
      %1049 = vmatprep.subr.bf16.mxu0 0
      %1050 = vmatpush1.bf16.msra.mxu0 0
      %1051 = vmatprep.subr.bf16.mxu0 0
      %1052 = vmatpush1.bf16.msra.mxu0 0
      %1053 = vmatprep.subr.bf16.mxu0 0
      %1054 = vmatpush1.bf16.msra.mxu0 0
      %1055 = vmatprep.subr.bf16.mxu0 0
      %1056 = vmatpush1.bf16.msra.mxu0 0
      %1057 = vmatprep.subr.bf16.mxu0 0
      %1058 = vmatpush1.bf16.msra.mxu0 0
      %1059 = vmatprep.subr.bf16.mxu0 0
      %1060 = vmatpush1.bf16.msra.mxu0 0
      %1061 = vmatprep.subr.bf16.mxu0 0
      %1062 = vmatpush1.bf16.msra.mxu0 0
      %1063 = vmatprep.subr.bf16.mxu0 0
      %1064 = vmatpush1.bf16.msra.mxu0 %v1047
      %1065 = vmatprep.subr.bf16.mxu0 0
      %1066 = vmatpush2.bf16.msra.mxu0 0
      %1067 = vmatprep.subr.bf16.mxu0 0
      %1068 = vmatpush2.bf16.msra.mxu0 0
      %1069 = vmatprep.subr.bf16.mxu0 0
      %1070 = vmatpush2.bf16.msra.mxu0 0
      %1071 = vmatprep.subr.bf16.mxu0 0
      %1072 = vmatpush2.bf16.msra.mxu0 0
      %1073 = vmatprep.subr.bf16.mxu0 0
      %1074 = vmatpush2.bf16.msra.mxu0 0
      %1075 = vmatprep.subr.bf16.mxu0 0
      %1076 = vmatpush2.bf16.msra.mxu0 0
      %1077 = vmatprep.subr.bf16.mxu0 0
      %1078 = vmatpush2.bf16.msra.mxu0 0
      %1079 = vmatprep.subr.bf16.mxu0 0
      %1080 = vmatpush2.bf16.msra.mxu0 0
      %1081 = vmatprep.mubr.bf16.mxu0 0
      %1082 = vmatmul.mubr.bf16.gmra.mxu0 %v1035
      %v1083 = vpop.f32.mrf.mxu0
      %v1084 = vadd.f32 0.0, %v1083
      %v1085 = vpop.f32.mrf.mxu0
      %v1086 = vpop.f32.mrf.mxu0
      %v1087 = vadd.f32 0.0, %v1086
      %v1088 = vpop.f32.mrf.mxu0
      %1089 = vmatprep.mubr.bf16.mxu0 0
      %1090 = vmatmul.mubr.bf16.gmra.mxu0 %v1038
      %v1091 = vpop.f32.mrf.mxu0
      %v1092 = vadd.f32 0.0, %v1091
      %v1093 = vpop.f32.mrf.mxu0
      %v1094 = vpop.f32.mrf.mxu0
      %v1095 = vadd.f32 0.0, %v1094
      %v1096 = vpop.f32.mrf.mxu0
      %1097 = vmatprep.mubr.bf16.mxu0 0
      %1098 = vmatmul.mubr.bf16.gmra.mxu0 %v1041
      %v1099 = vpop.f32.mrf.mxu0
      %v1100 = vadd.f32 0.0, %v1099
      %v1101 = vpop.f32.mrf.mxu0
      %v1102 = vpop.f32.mrf.mxu0
      %v1103 = vadd.f32 0.0, %v1102
      %v1104 = vpop.f32.mrf.mxu0
      %1105 = vmatprep.mubr.bf16.mxu0 0
      %1106 = vmatmul.mubr.bf16.gmra.mxu0 %v1044
      %v1107 = vpop.f32.mrf.mxu0
      %v1108 = vadd.f32 0.0, %v1107
      %v1109 = vpop.f32.mrf.mxu0
      %v1110 = vpop.f32.mrf.mxu0
      %v1111 = vadd.f32 0.0, %v1110
      %v1112 = vpop.f32.mrf.mxu0
      %1113 = vdwg.mxu0
      %v1114 = vadd.f32 %v884, %v1084
      %v1115 = vadd.f32 %v885, %v1087
      %v1116 = vadd.f32 %v886, %v1092
      %v1117 = vadd.f32 %v887, %v1095
      %v1118 = vadd.f32 %v888, %v1100
      %v1119 = vadd.f32 %v889, %v1103
      %v1120 = vadd.f32 %v890, %v1108
      %v1121 = vadd.f32 %v891, %v1111
      %s1122 = scalar_lea.vmem %s192, 8
      %v1123 = vld [vmem:[%s1122] sm:$0xf]
      %v1124 = vld [vmem:[%s1122 + $0x8] sm:$0xf]
      %v1125 = vld [vmem:[%s1122 + $0x10] sm:$0xf]
      %v1126 = vld [vmem:[%s1122 + $0x18] sm:$0xf]
      %v1127 = vld [vmem:[%s1122 + $0x20] sm:$0xf]
      %v1128 = vld [vmem:[%s1122 + $0x28] sm:$0xf]
      %v1129 = vld [vmem:[%s1122 + $0x30] sm:$0xf]
      %v1130 = vld [vmem:[%s1122 + $0x38] sm:$0xf]
      %s1131 = scalar_lea.vmem %s1, 12
      %v1132 = vld [vmem:[%s1131] sm:$0x3]
      %v1141 = vunpack.c.l.b16 %v1123
      %v1142 = vunpack.c.l.b16 %v1124
      %v1143 = vunpack.c.l.b16 %v1125
      %v1144 = vunpack.c.l.b16 %v1126
      %v1145 = vunpack.c.l.b16 %v1127
      %v1146 = vunpack.c.l.b16 %v1128
      %v1147 = vunpack.c.l.b16 %v1129
      %v1148 = vunpack.c.l.b16 %v1130
      %v1149 = vpack.c.b16 %v1142, %v1141
      %v1150 = vpack.c.b16 %v1144, %v1143
      %v1151 = vpack.c.b16 %v1146, %v1145
      %v1152 = vpack.c.b16 %v1148, %v1147
      %v1154 = vsel %vm239, %v1149, 0
      %v1157 = vsel %vm239, %v1150, 0
      %v1160 = vsel %vm239, %v1151, 0
      %v1163 = vsel %vm239, %v1152, 0
      %v1166 = vsel %vm252, %v1132, 0
      %1168 = vmatprep.subr.bf16.mxu0 0
      %1169 = vmatpush1.bf16.msra.mxu0 0
      %1170 = vmatprep.subr.bf16.mxu0 0
      %1171 = vmatpush1.bf16.msra.mxu0 0
      %1172 = vmatprep.subr.bf16.mxu0 0
      %1173 = vmatpush1.bf16.msra.mxu0 0
      %1174 = vmatprep.subr.bf16.mxu0 0
      %1175 = vmatpush1.bf16.msra.mxu0 0
      %1176 = vmatprep.subr.bf16.mxu0 0
      %1177 = vmatpush1.bf16.msra.mxu0 0
      %1178 = vmatprep.subr.bf16.mxu0 0
      %1179 = vmatpush1.bf16.msra.mxu0 0
      %1180 = vmatprep.subr.bf16.mxu0 0
      %1181 = vmatpush1.bf16.msra.mxu0 0
      %1182 = vmatprep.subr.bf16.mxu0 0
      %1183 = vmatpush1.bf16.msra.mxu0 %v1166
      %1184 = vmatprep.subr.bf16.mxu0 0
      %1185 = vmatpush2.bf16.msra.mxu0 0
      %1186 = vmatprep.subr.bf16.mxu0 0
      %1187 = vmatpush2.bf16.msra.mxu0 0
      %1188 = vmatprep.subr.bf16.mxu0 0
      %1189 = vmatpush2.bf16.msra.mxu0 0
      %1190 = vmatprep.subr.bf16.mxu0 0
      %1191 = vmatpush2.bf16.msra.mxu0 0
      %1192 = vmatprep.subr.bf16.mxu0 0
      %1193 = vmatpush2.bf16.msra.mxu0 0
      %1194 = vmatprep.subr.bf16.mxu0 0
      %1195 = vmatpush2.bf16.msra.mxu0 0
      %1196 = vmatprep.subr.bf16.mxu0 0
      %1197 = vmatpush2.bf16.msra.mxu0 0
      %1198 = vmatprep.subr.bf16.mxu0 0
      %1199 = vmatpush2.bf16.msra.mxu0 0
      %1200 = vmatprep.mubr.bf16.mxu0 0
      %1201 = vmatmul.mubr.bf16.gmra.mxu0 %v1154
      %v1202 = vpop.f32.mrf.mxu0
      %v1203 = vadd.f32 0.0, %v1202
      %v1204 = vpop.f32.mrf.mxu0
      %v1205 = vpop.f32.mrf.mxu0
      %v1206 = vadd.f32 0.0, %v1205
      %v1207 = vpop.f32.mrf.mxu0
      %1208 = vmatprep.mubr.bf16.mxu0 0
      %1209 = vmatmul.mubr.bf16.gmra.mxu0 %v1157
      %v1210 = vpop.f32.mrf.mxu0
      %v1211 = vadd.f32 0.0, %v1210
      %v1212 = vpop.f32.mrf.mxu0
      %v1213 = vpop.f32.mrf.mxu0
      %v1214 = vadd.f32 0.0, %v1213
      %v1215 = vpop.f32.mrf.mxu0
      %1216 = vmatprep.mubr.bf16.mxu0 0
      %1217 = vmatmul.mubr.bf16.gmra.mxu0 %v1160
      %v1218 = vpop.f32.mrf.mxu0
      %v1219 = vadd.f32 0.0, %v1218
      %v1220 = vpop.f32.mrf.mxu0
      %v1221 = vpop.f32.mrf.mxu0
      %v1222 = vadd.f32 0.0, %v1221
      %v1223 = vpop.f32.mrf.mxu0
      %1224 = vmatprep.mubr.bf16.mxu0 0
      %1225 = vmatmul.mubr.bf16.gmra.mxu0 %v1163
      %v1226 = vpop.f32.mrf.mxu0
      %v1227 = vadd.f32 0.0, %v1226
      %v1228 = vpop.f32.mrf.mxu0
      %v1229 = vpop.f32.mrf.mxu0
      %v1230 = vadd.f32 0.0, %v1229
      %v1231 = vpop.f32.mrf.mxu0
      %1232 = vdwg.mxu0
      %v1233 = vadd.f32 %v1114, %v1203
      %v1234 = vadd.f32 %v1115, %v1206
      %v1235 = vadd.f32 %v1116, %v1211
      %v1236 = vadd.f32 %v1117, %v1214
      %v1237 = vadd.f32 %v1118, %v1219
      %v1238 = vadd.f32 %v1119, %v1222
      %v1239 = vadd.f32 %v1120, %v1227
      %v1240 = vadd.f32 %v1121, %v1230
      %s1241 = scalar_lea.vmem %s192, 80
      %v1242 = vld [vmem:[%s1241] sm:$0xf]
      %v1243 = vld [vmem:[%s1241 + $0x8] sm:$0xf]
      %v1244 = vld [vmem:[%s1241 + $0x10] sm:$0xf]
      %v1245 = vld [vmem:[%s1241 + $0x18] sm:$0xf]
      %v1246 = vld [vmem:[%s1241 + $0x20] sm:$0xf]
      %v1247 = vld [vmem:[%s1241 + $0x28] sm:$0xf]
      %v1248 = vld [vmem:[%s1241 + $0x30] sm:$0xf]
      %v1249 = vld [vmem:[%s1241 + $0x38] sm:$0xf]
      %s1250 = scalar_lea.vmem %s1, 14
      %v1251 = vld [vmem:[%s1250] sm:$0x3]
      %v1260 = vunpack.c.l.b16 %v1242
      %v1261 = vunpack.c.l.b16 %v1243
      %v1262 = vunpack.c.l.b16 %v1244
      %v1263 = vunpack.c.l.b16 %v1245
      %v1264 = vunpack.c.l.b16 %v1246
      %v1265 = vunpack.c.l.b16 %v1247
      %v1266 = vunpack.c.l.b16 %v1248
      %v1267 = vunpack.c.l.b16 %v1249
      %v1268 = vpack.c.b16 %v1261, %v1260
      %v1269 = vpack.c.b16 %v1263, %v1262
      %v1270 = vpack.c.b16 %v1265, %v1264
      %v1271 = vpack.c.b16 %v1267, %v1266
      %v1273 = vsel %vm239, %v1268, 0
      %v1276 = vsel %vm239, %v1269, 0
      %v1279 = vsel %vm239, %v1270, 0
      %v1282 = vsel %vm239, %v1271, 0
      %v1285 = vsel %vm252, %v1251, 0
      %1287 = vmatprep.subr.bf16.mxu0 0
      %1288 = vmatpush1.bf16.msra.mxu0 0
      %1289 = vmatprep.subr.bf16.mxu0 0
      %1290 = vmatpush1.bf16.msra.mxu0 0
      %1291 = vmatprep.subr.bf16.mxu0 0
      %1292 = vmatpush1.bf16.msra.mxu0 0
      %1293 = vmatprep.subr.bf16.mxu0 0
      %1294 = vmatpush1.bf16.msra.mxu0 0
      %1295 = vmatprep.subr.bf16.mxu0 0
      %1296 = vmatpush1.bf16.msra.mxu0 0
      %1297 = vmatprep.subr.bf16.mxu0 0
      %1298 = vmatpush1.bf16.msra.mxu0 0
      %1299 = vmatprep.subr.bf16.mxu0 0
      %1300 = vmatpush1.bf16.msra.mxu0 0
      %1301 = vmatprep.subr.bf16.mxu0 0
      %1302 = vmatpush1.bf16.msra.mxu0 %v1285
      %1303 = vmatprep.subr.bf16.mxu0 0
      %1304 = vmatpush2.bf16.msra.mxu0 0
      %1305 = vmatprep.subr.bf16.mxu0 0
      %1306 = vmatpush2.bf16.msra.mxu0 0
      %1307 = vmatprep.subr.bf16.mxu0 0
      %1308 = vmatpush2.bf16.msra.mxu0 0
      %1309 = vmatprep.subr.bf16.mxu0 0
      %1310 = vmatpush2.bf16.msra.mxu0 0
      %1311 = vmatprep.subr.bf16.mxu0 0
      %1312 = vmatpush2.bf16.msra.mxu0 0
      %1313 = vmatprep.subr.bf16.mxu0 0
      %1314 = vmatpush2.bf16.msra.mxu0 0
      %1315 = vmatprep.subr.bf16.mxu0 0
      %1316 = vmatpush2.bf16.msra.mxu0 0
      %1317 = vmatprep.subr.bf16.mxu0 0
      %1318 = vmatpush2.bf16.msra.mxu0 0
      %1319 = vmatprep.mubr.bf16.mxu0 0
      %1320 = vmatmul.mubr.bf16.gmra.mxu0 %v1273
      %v1321 = vpop.f32.mrf.mxu0
      %v1322 = vadd.f32 0.0, %v1321
      %v1323 = vpop.f32.mrf.mxu0
      %v1324 = vpop.f32.mrf.mxu0
      %v1325 = vadd.f32 0.0, %v1324
      %v1326 = vpop.f32.mrf.mxu0
      %1327 = vmatprep.mubr.bf16.mxu0 0
      %1328 = vmatmul.mubr.bf16.gmra.mxu0 %v1276
      %v1329 = vpop.f32.mrf.mxu0
      %v1330 = vadd.f32 0.0, %v1329
      %v1331 = vpop.f32.mrf.mxu0
      %v1332 = vpop.f32.mrf.mxu0
      %v1333 = vadd.f32 0.0, %v1332
      %v1334 = vpop.f32.mrf.mxu0
      %1335 = vmatprep.mubr.bf16.mxu0 0
      %1336 = vmatmul.mubr.bf16.gmra.mxu0 %v1279
      %v1337 = vpop.f32.mrf.mxu0
      %v1338 = vadd.f32 0.0, %v1337
      %v1339 = vpop.f32.mrf.mxu0
      %v1340 = vpop.f32.mrf.mxu0
      %v1341 = vadd.f32 0.0, %v1340
      %v1342 = vpop.f32.mrf.mxu0
      %1343 = vmatprep.mubr.bf16.mxu0 0
      %1344 = vmatmul.mubr.bf16.gmra.mxu0 %v1282
      %v1345 = vpop.f32.mrf.mxu0
      %v1346 = vadd.f32 0.0, %v1345
      %v1347 = vpop.f32.mrf.mxu0
      %v1348 = vpop.f32.mrf.mxu0
      %v1349 = vadd.f32 0.0, %v1348
      %v1350 = vpop.f32.mrf.mxu0
      %1351 = vdwg.mxu0
      %v1352 = vadd.f32 %v1233, %v1322
      %v1353 = vadd.f32 %v1234, %v1325
      %v1354 = vadd.f32 %v1235, %v1330
      %v1355 = vadd.f32 %v1236, %v1333
      %v1356 = vadd.f32 %v1237, %v1338
      %v1357 = vadd.f32 %v1238, %v1341
      %v1358 = vadd.f32 %v1239, %v1346
      %v1359 = vadd.f32 %v1240, %v1349
      %v1360 = vld [vmem:[%s1122] sm:$0xf]
      %v1361 = vld [vmem:[%s1122 + $0x4] sm:$0x1]
      %v1362 = vld [vmem:[%s1122 + $0x8] sm:$0xf]
      %v1363 = vld [vmem:[%s1122 + $0xc] sm:$0x1]
      %v1364 = vld [vmem:[%s1122 + $0x10] sm:$0xf]
      %v1365 = vld [vmem:[%s1122 + $0x14] sm:$0x1]
      %v1366 = vld [vmem:[%s1122 + $0x18] sm:$0xf]
      %v1367 = vld [vmem:[%s1122 + $0x1c] sm:$0x1]
      %v1368 = vld [vmem:[%s1122 + $0x20] sm:$0xf]
      %v1369 = vld [vmem:[%s1122 + $0x24] sm:$0x1]
      %v1370 = vld [vmem:[%s1122 + $0x28] sm:$0xf]
      %v1371 = vld [vmem:[%s1122 + $0x2c] sm:$0x1]
      %v1372 = vld [vmem:[%s1122 + $0x30] sm:$0xf]
      %v1373 = vld [vmem:[%s1122 + $0x34] sm:$0x1]
      %v1374 = vld [vmem:[%s1122 + $0x38] sm:$0xf]
      %v1375 = vld [vmem:[%s1122 + $0x3c] sm:$0x1]
      %v1377 = vshrl.u32 %v1360, 16
      %v1379 = vrot.slane %v1377, 4
      %v1380 = vshll.u32 %v1360, 16
      %v1382 = vrot.slane %v1380, 5
      %v1383 = vor.u32 %v1379, %v1382
      %v1384 = vrot.slane %v1383, 4
      %v1386 = vshll.u32 %v1361, 16
      %v1388 = vrot.slane %v1386, 5
      %v1389 = vsel %vm439, %v1384, %v1388
      %v1391 = vshrl.u32 %v1362, 16
      %v1393 = vrot.slane %v1391, 4
      %v1394 = vshll.u32 %v1362, 16
      %v1396 = vrot.slane %v1394, 5
      %v1397 = vor.u32 %v1393, %v1396
      %v1398 = vrot.slane %v1397, 4
      %v1400 = vshll.u32 %v1363, 16
      %v1402 = vrot.slane %v1400, 5
      %v1403 = vsel %vm439, %v1398, %v1402
      %v1405 = vshrl.u32 %v1364, 16
      %v1407 = vrot.slane %v1405, 4
      %v1408 = vshll.u32 %v1364, 16
      %v1410 = vrot.slane %v1408, 5
      %v1411 = vor.u32 %v1407, %v1410
      %v1412 = vrot.slane %v1411, 4
      %v1414 = vshll.u32 %v1365, 16
      %v1416 = vrot.slane %v1414, 5
      %v1417 = vsel %vm439, %v1412, %v1416
      %v1419 = vshrl.u32 %v1366, 16
      %v1421 = vrot.slane %v1419, 4
      %v1422 = vshll.u32 %v1366, 16
      %v1424 = vrot.slane %v1422, 5
      %v1425 = vor.u32 %v1421, %v1424
      %v1426 = vrot.slane %v1425, 4
      %v1428 = vshll.u32 %v1367, 16
      %v1430 = vrot.slane %v1428, 5
      %v1431 = vsel %vm439, %v1426, %v1430
      %v1433 = vshrl.u32 %v1368, 16
      %v1435 = vrot.slane %v1433, 4
      %v1436 = vshll.u32 %v1368, 16
      %v1438 = vrot.slane %v1436, 5
      %v1439 = vor.u32 %v1435, %v1438
      %v1440 = vrot.slane %v1439, 4
      %v1442 = vshll.u32 %v1369, 16
      %v1444 = vrot.slane %v1442, 5
      %v1445 = vsel %vm439, %v1440, %v1444
      %v1447 = vshrl.u32 %v1370, 16
      %v1449 = vrot.slane %v1447, 4
      %v1450 = vshll.u32 %v1370, 16
      %v1452 = vrot.slane %v1450, 5
      %v1453 = vor.u32 %v1449, %v1452
      %v1454 = vrot.slane %v1453, 4
      %v1456 = vshll.u32 %v1371, 16
      %v1458 = vrot.slane %v1456, 5
      %v1459 = vsel %vm439, %v1454, %v1458
      %v1461 = vshrl.u32 %v1372, 16
      %v1463 = vrot.slane %v1461, 4
      %v1464 = vshll.u32 %v1372, 16
      %v1466 = vrot.slane %v1464, 5
      %v1467 = vor.u32 %v1463, %v1466
      %v1468 = vrot.slane %v1467, 4
      %v1470 = vshll.u32 %v1373, 16
      %v1472 = vrot.slane %v1470, 5
      %v1473 = vsel %vm439, %v1468, %v1472
      %v1475 = vshrl.u32 %v1374, 16
      %v1477 = vrot.slane %v1475, 4
      %v1478 = vshll.u32 %v1374, 16
      %v1480 = vrot.slane %v1478, 5
      %v1481 = vor.u32 %v1477, %v1480
      %v1482 = vrot.slane %v1481, 4
      %v1484 = vshll.u32 %v1375, 16
      %v1486 = vrot.slane %v1484, 5
      %v1487 = vsel %vm439, %v1482, %v1486
      %s1488 = scalar_lea.vmem %s1, 16
      %v1489 = vld [vmem:[%s1488] sm:$0x3]
      %v1490 = vunpack.c.l.b16 %v1389
      %v1491 = vunpack.c.l.b16 %v1403
      %v1492 = vunpack.c.l.b16 %v1417
      %v1493 = vunpack.c.l.b16 %v1431
      %v1494 = vunpack.c.l.b16 %v1445
      %v1495 = vunpack.c.l.b16 %v1459
      %v1496 = vunpack.c.l.b16 %v1473
      %v1497 = vunpack.c.l.b16 %v1487
      %v1498 = vpack.c.b16 %v1491, %v1490
      %v1499 = vpack.c.b16 %v1493, %v1492
      %v1500 = vpack.c.b16 %v1495, %v1494
      %v1501 = vpack.c.b16 %v1497, %v1496
      %v1503 = vsel %vm239, %v1498, 0
      %v1506 = vsel %vm239, %v1499, 0
      %v1509 = vsel %vm239, %v1500, 0
      %v1512 = vsel %vm239, %v1501, 0
      %v1515 = vsel %vm252, %v1489, 0
      %1517 = vmatprep.subr.bf16.mxu0 0
      %1518 = vmatpush1.bf16.msra.mxu0 0
      %1519 = vmatprep.subr.bf16.mxu0 0
      %1520 = vmatpush1.bf16.msra.mxu0 0
      %1521 = vmatprep.subr.bf16.mxu0 0
      %1522 = vmatpush1.bf16.msra.mxu0 0
      %1523 = vmatprep.subr.bf16.mxu0 0
      %1524 = vmatpush1.bf16.msra.mxu0 0
      %1525 = vmatprep.subr.bf16.mxu0 0
      %1526 = vmatpush1.bf16.msra.mxu0 0
      %1527 = vmatprep.subr.bf16.mxu0 0
      %1528 = vmatpush1.bf16.msra.mxu0 0
      %1529 = vmatprep.subr.bf16.mxu0 0
      %1530 = vmatpush1.bf16.msra.mxu0 0
      %1531 = vmatprep.subr.bf16.mxu0 0
      %1532 = vmatpush1.bf16.msra.mxu0 %v1515
      %1533 = vmatprep.subr.bf16.mxu0 0
      %1534 = vmatpush2.bf16.msra.mxu0 0
      %1535 = vmatprep.subr.bf16.mxu0 0
      %1536 = vmatpush2.bf16.msra.mxu0 0
      %1537 = vmatprep.subr.bf16.mxu0 0
      %1538 = vmatpush2.bf16.msra.mxu0 0
      %1539 = vmatprep.subr.bf16.mxu0 0
      %1540 = vmatpush2.bf16.msra.mxu0 0
      %1541 = vmatprep.subr.bf16.mxu0 0
      %1542 = vmatpush2.bf16.msra.mxu0 0
      %1543 = vmatprep.subr.bf16.mxu0 0
      %1544 = vmatpush2.bf16.msra.mxu0 0
      %1545 = vmatprep.subr.bf16.mxu0 0
      %1546 = vmatpush2.bf16.msra.mxu0 0
      %1547 = vmatprep.subr.bf16.mxu0 0
      %1548 = vmatpush2.bf16.msra.mxu0 0
      %1549 = vmatprep.mubr.bf16.mxu0 0
      %1550 = vmatmul.mubr.bf16.gmra.mxu0 %v1503
      %v1551 = vpop.f32.mrf.mxu0
      %v1552 = vadd.f32 0.0, %v1551
      %v1553 = vpop.f32.mrf.mxu0
      %v1554 = vpop.f32.mrf.mxu0
      %v1555 = vadd.f32 0.0, %v1554
      %v1556 = vpop.f32.mrf.mxu0
      %1557 = vmatprep.mubr.bf16.mxu0 0
      %1558 = vmatmul.mubr.bf16.gmra.mxu0 %v1506
      %v1559 = vpop.f32.mrf.mxu0
      %v1560 = vadd.f32 0.0, %v1559
      %v1561 = vpop.f32.mrf.mxu0
      %v1562 = vpop.f32.mrf.mxu0
      %v1563 = vadd.f32 0.0, %v1562
      %v1564 = vpop.f32.mrf.mxu0
      %1565 = vmatprep.mubr.bf16.mxu0 0
      %1566 = vmatmul.mubr.bf16.gmra.mxu0 %v1509
      %v1567 = vpop.f32.mrf.mxu0
      %v1568 = vadd.f32 0.0, %v1567
      %v1569 = vpop.f32.mrf.mxu0
      %v1570 = vpop.f32.mrf.mxu0
      %v1571 = vadd.f32 0.0, %v1570
      %v1572 = vpop.f32.mrf.mxu0
      %1573 = vmatprep.mubr.bf16.mxu0 0
      %1574 = vmatmul.mubr.bf16.gmra.mxu0 %v1512
      %v1575 = vpop.f32.mrf.mxu0
      %v1576 = vadd.f32 0.0, %v1575
      %v1577 = vpop.f32.mrf.mxu0
      %v1578 = vpop.f32.mrf.mxu0
      %v1579 = vadd.f32 0.0, %v1578
      %v1580 = vpop.f32.mrf.mxu0
      %1581 = vdwg.mxu0
      %v1582 = vadd.f32 %v1352, %v1552
      %v1583 = vadd.f32 %v1353, %v1555
      %v1584 = vadd.f32 %v1354, %v1560
      %v1585 = vadd.f32 %v1355, %v1563
      %v1586 = vadd.f32 %v1356, %v1568
      %v1587 = vadd.f32 %v1357, %v1571
      %v1588 = vadd.f32 %v1358, %v1576
      %v1589 = vadd.f32 %v1359, %v1579
      %v1590 = vld [vmem:[%s2] sm:$0x1]
      %v1592 = vlaneseq
      %v1593 = vshrl.u32 %v1592, 7
      %v1594 = vsub.s32 0, %v1593
      %v1595 = vrot.slane %v1590, %v1594
      %v1597 = vmul.f32 %v1582, %v1595
      %v1598 = vmul.f32 %v1583, %v1595
      %v1599 = vmul.f32 %v1584, %v1595
      %v1600 = vmul.f32 %v1585, %v1595
      %v1601 = vmul.f32 %v1586, %v1595
      %v1602 = vmul.f32 %v1587, %v1595
      %v1603 = vmul.f32 %v1588, %v1595
      %v1604 = vmul.f32 %v1589, %v1595
      %v1605 = vld [vmem:[%s3] sm:$0x1]
      %v1607 = vlaneseq
      %v1608 = vshrl.u32 %v1607, 7
      %v1609 = vsub.s32 0, %v1608
      %v1610 = vrot.slane %v1605, %v1609
      %v1612 = vadd.f32 %v1597, %v1610
      %v1613 = vadd.f32 %v1598, %v1610
      %v1614 = vadd.f32 %v1599, %v1610
      %v1615 = vadd.f32 %v1600, %v1610
      %v1616 = vadd.f32 %v1601, %v1610
      %v1617 = vadd.f32 %v1602, %v1610
      %v1618 = vadd.f32 %v1603, %v1610
      %v1619 = vadd.f32 %v1604, %v1610
      %v1620 = vmax.f32 %v1612, 0.0
      %v1621 = vmax.f32 %v1613, 0.0
      %v1622 = vmax.f32 %v1614, 0.0
      %v1623 = vmax.f32 %v1615, 0.0
      %v1624 = vmax.f32 %v1616, 0.0
      %v1625 = vmax.f32 %v1617, 0.0
      %v1626 = vmax.f32 %v1618, 0.0
      %v1627 = vmax.f32 %v1619, 0.0
      %v1628 = vpack.c.bf16 %v1620, %v1620
      %v1629 = vpack.c.bf16 %v1621, %v1621
      %v1630 = vpack.c.bf16 %v1622, %v1622
      %v1631 = vpack.c.bf16 %v1623, %v1623
      %v1632 = vpack.c.bf16 %v1624, %v1624
      %v1633 = vpack.c.bf16 %v1625, %v1625
      %v1634 = vpack.c.bf16 %v1626, %v1626
      %v1635 = vpack.c.bf16 %v1627, %v1627
      %1636 = vst [vmem:[%s197] sm:$0xf] %v1628
      %1637 = vst [vmem:[%s197 + $0x4] sm:$0xf] %v1629
      %1638 = vst [vmem:[%s197 + $0x8] sm:$0xf] %v1630
      %1639 = vst [vmem:[%s197 + $0xc] sm:$0xf] %v1631
      %1640 = vst [vmem:[%s197 + $0x10] sm:$0xf] %v1632
      %1641 = vst [vmem:[%s197 + $0x14] sm:$0xf] %v1633
      %1642 = vst [vmem:[%s197 + $0x18] sm:$0xf] %v1634
      %1643 = vst [vmem:[%s197 + $0x1c] sm:$0xf] %v1635
      %p1644 = scmp.lt.s32.totalorder %s15, 1
      %s1645 = scalar_select %p1644, %s15, 1
      %s1646 = smul.addr %s1645, 8
      %s1647 = smul.addr %s1646, 4
      %s1648 = scalar_lea.vmem %s4, %s1647
      // Predicated region
      $region37: #{resnet_block_forward.2} parent=35 // pred_check
        %p1649 = pneg %p122
      $region38: #{resnet_block_forward.2} parent=35 // pred_check_branch
        %1651 = sbr.rel (%p1649) target = $region40
      $region39: #{resnet_block_forward.2} parent=35 // pred_region
        _
      $region40: #{resnet_block_forward.2} parent=35 // pred_fallthru
        _
    $region36: #{resnet_block_forward.2} parent=5 // pred_fallthru
      _
    %p1652 = scmp.le.s32.totalorder 2, %s10
    // Predicated region
    $region41: #{resnet_block_forward.2} parent=5 // pred_check
      %p1653 = pneg %p1652
    $region42: #{resnet_block_forward.2} parent=5 // pred_check_branch
      %1655 = sbr.rel (%p1653) target = $region44
    $region43: #{resnet_block_forward.2} parent=5 // pred_region
      %s1656 = ssub.s32 %s10, 2
      // Predicated region
      $region45: #{resnet_block_forward.2} parent=43 // pred_check
        %p1657 = pneg %p128
      $region46: #{resnet_block_forward.2} parent=43 // pred_check_branch
        %1659 = sbr.rel (%p1657) target = $region48
      $region47: #{resnet_block_forward.2} parent=43 // pred_region
        %p1660 = scmp.lt.s32.totalorder %s16, 1
        %s1661 = scalar_select %p1660, %s16, 1
        %s1662 = smul.addr %s1661, 8
        %s1663 = smul.addr %s1662, 4
        %s1664 = scalar_lea.vmem %s4, %s1663
      $region48: #{resnet_block_forward.2} parent=43 // pred_fallthru
        _
    $region44: #{resnet_block_forward.2} parent=5 // pred_fallthru
      _
  $region6: #{resnet_block_forward.2} parent=0 // loop_footer
    %s14 = sadd.s32 1, %s10
  $region7: #{resnet_block_forward.2} parent=0 // loop_footer_branch
    %9 = sbr.rel target = $region3
  $region8: #{resnet_block_forward.2} parent=0 // loop_exit
    _

// kernel: resnet_block_forward.3
$region0: #{resnet_block_forward.3}
  #allocation0 [shape = 'u32[]', space=smem, size = 0x4, offset = 0x4, fixed_abs, tag = 'smem constant byte address 0x4 - core index']
  #allocation1 [shape = 'u32[144,128]{1,0:T(1,128)}', space=vmem, size = 0x12000, scoped, tag = 'internal scratch']
  %s0 = inlined_call_operand.vmem [shape: bf16[2,10,10,128], index: 0, kind: input, shape index: {}]
  %s1 = inlined_call_operand.vmem [shape: bf16[9,128,128], index: 1, kind: input, shape index: {}]
  %s2 = inlined_call_operand.vmem [shape: f32[1,128], index: 2, kind: input, shape index: {}]
  %s3 = inlined_call_operand.vmem [shape: f32[1,128], index: 3, kind: input, shape index: {}]
  %s4 = inlined_call_operand.vmem [shape: bf16[2,8,8,4], index: 4, kind: input, shape index: {}]
  %s5 = inlined_call_operand.vmem [shape: bf16[4,128], index: 5, kind: input, shape index: {}]
  %s6 = inlined_call_operand.vmem [shape: f32[1,128], index: 6, kind: input, shape index: {}]
  %s7 = inlined_call_operand.vmem [shape: bf16[2,8,8,128], index: 7, kind: output, shape index: {}]
  %s8 = sld [smem:[#allocation0]]
  $region61: #{resnet_block_forward.3} parent=0
    _
  %s10 = ssub.s32 1, %s8
  %s11 = scalar_select 0, %s10, %s8
  loop: start=0, step=1, limit=4
  $region2: #{resnet_block_forward.3} parent=0 // loop_pre_header
    _
  $region3: #{resnet_block_forward.3} parent=0 // loop_header
    %s13 = sphi 0, %s17
    %p14 = scmp.ge.s32.totalorder %s13, 4
    %s23 = sphi 0, %s25
    %s26 = sphi 0, %s23
    %s27 = sphi 0, %s26
    %s43 = sphi 0, %s27
    %s47 = sphi 0, %s47
    %s49 = sphi 0, %s47
    %s50 = sphi 0, %s49
    %s64 = sphi 0, %s50
    %s68 = sphi 0, %s68
    %s70 = sphi 0, %s68
    %s71 = sphi 0, %s70
    %s85 = sphi 0, %s71
    %s89 = sphi 0, %s89
    %s91 = sphi 0, %s89
    %s92 = sphi 0, %s91
    %s106 = sphi 0, %s92
    %s112 = sphi 0, %s114
    %s115 = sphi 0, %s112
    %s116 = sphi 0, %s115
    %s132 = sphi 0, %s116
    %s136 = sphi 0, %s136
    %s138 = sphi 0, %s136
    %s139 = sphi 0, %s138
    %s153 = sphi 0, %s139
    %s157 = sphi 0, %s157
    %s159 = sphi 0, %s157
    %s160 = sphi 0, %s159
    %s174 = sphi 0, %s160
    %s180 = sphi 0, %s182
    %s183 = sphi 0, %s180
    %s184 = sphi 0, %s183
    %s200 = sphi 0, %s184
  $region4: #{resnet_block_forward.3} parent=0 // loop_header_branch
    %16 = sbr.rel (%p14) target = $region8
  $region5: #{resnet_block_forward.3} parent=0 // loop_body
    %s18 = ssub.s32 %s13, 1
    %s19 = ssub.s32 %s13, 2
    %s20 = sadd.s32 %s13, 1
    %s21 = ssub.s32 %s13, %s20
    %p22 = scmp.eq.s32.totalorder %s21, 0
    %s24 = sadd.s32 %s23, 1
    %s25 = scalar_select %p22, %s23, %s24
    %p28 = pneg %p22
    %p29 = scmp.eq.s32.totalorder %s13, 1
    %p30 = por %p28, %p29
    %p31 = scmp.ne.s32.totalorder %s23, %s26
    %p32 = scmp.eq.s32.totalorder %s13, 0
    %p33 = por %p31, %p32
    %p34 = scmp.ne.s32.totalorder %s23, %s26
    %p35 = scmp.eq.s32.totalorder %s18, 1
    %p36 = por %p34, %p35
    %p37 = scmp.ne.s32.totalorder %s26, %s27
    %p38 = scmp.eq.s32.totalorder %s18, 0
    %p39 = por %p37, %p38
    %p40 = scmp.ne.s32.totalorder %s26, %s27
    %p41 = scmp.eq.s32.totalorder %s19, 1
    %p42 = por %p40, %p41
    %p44 = scmp.ne.s32.totalorder %s27, %s43
    %p45 = scmp.eq.s32.totalorder %s19, 0
    %p46 = por %p44, %p45
    %s48 = sadd.s32 %s47, 1
    %p51 = scmp.eq.s32.totalorder %s13, 1
    %p52 = scmp.ne.s32.totalorder %s47, %s49
    %p53 = scmp.eq.s32.totalorder %s13, 0
    %p54 = por %p52, %p53
    %p55 = scmp.ne.s32.totalorder %s47, %s49
    %p56 = scmp.eq.s32.totalorder %s18, 1
    %p57 = por %p55, %p56
    %p58 = scmp.ne.s32.totalorder %s49, %s50
    %p59 = scmp.eq.s32.totalorder %s18, 0
    %p60 = por %p58, %p59
    %p61 = scmp.ne.s32.totalorder %s49, %s50
    %p62 = scmp.eq.s32.totalorder %s19, 1
    %p63 = por %p61, %p62
    %p65 = scmp.ne.s32.totalorder %s50, %s64
    %p66 = scmp.eq.s32.totalorder %s19, 0
    %p67 = por %p65, %p66
    %s69 = sadd.s32 %s68, 1
    %p72 = scmp.eq.s32.totalorder %s13, 1
    %p73 = scmp.ne.s32.totalorder %s68, %s70
    %p74 = scmp.eq.s32.totalorder %s13, 0
    %p75 = por %p73, %p74
    %p76 = scmp.ne.s32.totalorder %s68, %s70
    %p77 = scmp.eq.s32.totalorder %s18, 1
    %p78 = por %p76, %p77
    %p79 = scmp.ne.s32.totalorder %s70, %s71
    %p80 = scmp.eq.s32.totalorder %s18, 0
    %p81 = por %p79, %p80
    %p82 = scmp.ne.s32.totalorder %s70, %s71
    %p83 = scmp.eq.s32.totalorder %s19, 1
    %p84 = por %p82, %p83
    %p86 = scmp.ne.s32.totalorder %s71, %s85
    %p87 = scmp.eq.s32.totalorder %s19, 0
    %p88 = por %p86, %p87
    %s90 = sadd.s32 %s89, 1
    %p93 = scmp.eq.s32.totalorder %s13, 1
    %p94 = scmp.ne.s32.totalorder %s89, %s91
    %p95 = scmp.eq.s32.totalorder %s13, 0
    %p96 = por %p94, %p95
    %p97 = scmp.ne.s32.totalorder %s89, %s91
    %p98 = scmp.eq.s32.totalorder %s18, 1
    %p99 = por %p97, %p98
    %p100 = scmp.ne.s32.totalorder %s91, %s92
    %p101 = scmp.eq.s32.totalorder %s18, 0
    %p102 = por %p100, %p101
    %p103 = scmp.ne.s32.totalorder %s91, %s92
    %p104 = scmp.eq.s32.totalorder %s19, 1
    %p105 = por %p103, %p104
    %p107 = scmp.ne.s32.totalorder %s92, %s106
    %p108 = scmp.eq.s32.totalorder %s19, 0
    %p109 = por %p107, %p108
    %s110 = ssub.s32 %s13, %s20
    %p111 = scmp.eq.s32.totalorder %s110, 0
    %s113 = sadd.s32 %s112, 1
    %s114 = scalar_select %p111, %s112, %s113
    %p117 = pneg %p111
    %p118 = scmp.eq.s32.totalorder %s13, 1
    %p119 = por %p117, %p118
    %p120 = scmp.ne.s32.totalorder %s112, %s115
    %p121 = scmp.eq.s32.totalorder %s13, 0
    %p122 = por %p120, %p121
    %p123 = scmp.ne.s32.totalorder %s112, %s115
    %p124 = scmp.eq.s32.totalorder %s18, 1
    %p125 = por %p123, %p124
    %p126 = scmp.ne.s32.totalorder %s115, %s116
    %p127 = scmp.eq.s32.totalorder %s18, 0
    %p128 = por %p126, %p127
    %p129 = scmp.ne.s32.totalorder %s115, %s116
    %p130 = scmp.eq.s32.totalorder %s19, 1
    %p131 = por %p129, %p130
    %p133 = scmp.ne.s32.totalorder %s116, %s132
    %p134 = scmp.eq.s32.totalorder %s19, 0
    %p135 = por %p133, %p134
    %s137 = sadd.s32 %s136, 1
    %p140 = scmp.eq.s32.totalorder %s13, 1
    %p141 = scmp.ne.s32.totalorder %s136, %s138
    %p142 = scmp.eq.s32.totalorder %s13, 0
    %p143 = por %p141, %p142
    %p144 = scmp.ne.s32.totalorder %s136, %s138
    %p145 = scmp.eq.s32.totalorder %s18, 1
    %p146 = por %p144, %p145
    %p147 = scmp.ne.s32.totalorder %s138, %s139
    %p148 = scmp.eq.s32.totalorder %s18, 0
    %p149 = por %p147, %p148
    %p150 = scmp.ne.s32.totalorder %s138, %s139
    %p151 = scmp.eq.s32.totalorder %s19, 1
    %p152 = por %p150, %p151
    %p154 = scmp.ne.s32.totalorder %s139, %s153
    %p155 = scmp.eq.s32.totalorder %s19, 0
    %p156 = por %p154, %p155
    %s158 = sadd.s32 %s157, 1
    %p161 = scmp.eq.s32.totalorder %s13, 1
    %p162 = scmp.ne.s32.totalorder %s157, %s159
    %p163 = scmp.eq.s32.totalorder %s13, 0
    %p164 = por %p162, %p163
    %p165 = scmp.ne.s32.totalorder %s157, %s159
    %p166 = scmp.eq.s32.totalorder %s18, 1
    %p167 = por %p165, %p166
    %p168 = scmp.ne.s32.totalorder %s159, %s160
    %p169 = scmp.eq.s32.totalorder %s18, 0
    %p170 = por %p168, %p169
    %p171 = scmp.ne.s32.totalorder %s159, %s160
    %p172 = scmp.eq.s32.totalorder %s19, 1
    %p173 = por %p171, %p172
    %p175 = scmp.ne.s32.totalorder %s160, %s174
    %p176 = scmp.eq.s32.totalorder %s19, 0
    %p177 = por %p175, %p176
    %s178 = ssub.s32 %s13, %s20
    %p179 = scmp.eq.s32.totalorder %s178, 0
    %s181 = sadd.s32 %s180, 1
    %s182 = scalar_select %p179, %s180, %s181
    %p185 = pneg %p179
    %p186 = scmp.eq.s32.totalorder %s13, 1
    %p187 = por %p185, %p186
    %p188 = scmp.ne.s32.totalorder %s180, %s183
    %p189 = scmp.eq.s32.totalorder %s13, 0
    %p190 = por %p188, %p189
    %p191 = scmp.ne.s32.totalorder %s180, %s183
    %p192 = scmp.eq.s32.totalorder %s18, 1
    %p193 = por %p191, %p192
    %p194 = scmp.ne.s32.totalorder %s183, %s184
    %p195 = scmp.eq.s32.totalorder %s18, 0
    %p196 = por %p194, %p195
    %p197 = scmp.ne.s32.totalorder %s183, %s184
    %p198 = scmp.eq.s32.totalorder %s19, 1
    %p199 = por %p197, %p198
    %p201 = scmp.ne.s32.totalorder %s184, %s200
    %p202 = scmp.eq.s32.totalorder %s19, 0
    %p203 = por %p201, %p202
    %p204 = scmp.le.s32.totalorder 1, %s13
    %p205 = scmp.lt.s32.totalorder %s13, 3
    %p206 = pnand %p204, %p205
    %p207 = pneg %p206
    // Predicated region
    $region9: #{resnet_block_forward.3} parent=5 // pred_check
      _
    $region10: #{resnet_block_forward.3} parent=5 // pred_check_branch
      %209 = sbr.rel (%p206) target = $region12
    $region11: #{resnet_block_forward.3} parent=5 // pred_region
      %s210 = ssub.s32 %s13, 1
      // Predicated region
      $region13: #{resnet_block_forward.3} parent=11 // pred_check
        %p211 = pneg %p60
      $region14: #{resnet_block_forward.3} parent=11 // pred_check_branch
        %213 = sbr.rel (%p211) target = $region16
      $region15: #{resnet_block_forward.3} parent=11 // pred_region
        _
      $region16: #{resnet_block_forward.3} parent=11 // pred_fallthru
        _
      // Predicated region
      $region17: #{resnet_block_forward.3} parent=11 // pred_check
        %p214 = pneg %p81
      $region18: #{resnet_block_forward.3} parent=11 // pred_check_branch
        %216 = sbr.rel (%p214) target = $region20
      $region19: #{resnet_block_forward.3} parent=11 // pred_region
        _
      $region20: #{resnet_block_forward.3} parent=11 // pred_fallthru
        _
      // Predicated region
      $region21: #{resnet_block_forward.3} parent=11 // pred_check
        %p217 = pneg %p102
      $region22: #{resnet_block_forward.3} parent=11 // pred_check_branch
        %219 = sbr.rel (%p217) target = $region24
      $region23: #{resnet_block_forward.3} parent=11 // pred_region
        _
      $region24: #{resnet_block_forward.3} parent=11 // pred_fallthru
        _
      // Predicated region
      $region25: #{resnet_block_forward.3} parent=11 // pred_check
        %p220 = pneg %p149
      $region26: #{resnet_block_forward.3} parent=11 // pred_check_branch
        %222 = sbr.rel (%p220) target = $region28
      $region27: #{resnet_block_forward.3} parent=11 // pred_region
        _
      $region28: #{resnet_block_forward.3} parent=11 // pred_fallthru
        _
      // Predicated region
      $region29: #{resnet_block_forward.3} parent=11 // pred_check
        %p223 = pneg %p170
      $region30: #{resnet_block_forward.3} parent=11 // pred_check_branch
        %225 = sbr.rel (%p223) target = $region32
      $region31: #{resnet_block_forward.3} parent=11 // pred_region
        _
      $region32: #{resnet_block_forward.3} parent=11 // pred_fallthru
        _
    $region12: #{resnet_block_forward.3} parent=5 // pred_fallthru
      _
    %p226 = scmp.lt.s32.totalorder %s13, 2
    // Predicated region
    $region33: #{resnet_block_forward.3} parent=5 // pred_check
      %p227 = pneg %p226
    $region34: #{resnet_block_forward.3} parent=5 // pred_check_branch
      %229 = sbr.rel (%p227) target = $region36
    $region35: #{resnet_block_forward.3} parent=5 // pred_region
      // Predicated region
      $region37: #{resnet_block_forward.3} parent=35 // pred_check
        %p230 = pneg %p33
      $region38: #{resnet_block_forward.3} parent=35 // pred_check_branch
        %232 = sbr.rel (%p230) target = $region40
      $region39: #{resnet_block_forward.3} parent=35 // pred_region
        %p233 = scmp.lt.s32.totalorder %s13, 1
        %s234 = scalar_select %p233, %s13, 1
        %s235 = smul.addr %s234, 20
        %s236 = smul.addr %s235, 4
        %s237 = scalar_lea.vmem %s0, %s236
      $region40: #{resnet_block_forward.3} parent=35 // pred_fallthru
        _
      // Predicated region
      $region41: #{resnet_block_forward.3} parent=35 // pred_check
        %p238 = pneg %p122
      $region42: #{resnet_block_forward.3} parent=35 // pred_check_branch
        %240 = sbr.rel (%p238) target = $region44
      $region43: #{resnet_block_forward.3} parent=35 // pred_region
        %p241 = scmp.lt.s32.totalorder %s13, 1
        %s242 = scalar_select %p241, %s13, 1
        %s243 = smul.addr %s242, 8
        %s244 = smul.addr %s243, 4
        %s245 = scalar_lea.vmem %s4, %s244
      $region44: #{resnet_block_forward.3} parent=35 // pred_fallthru
        _
    $region36: #{resnet_block_forward.3} parent=5 // pred_fallthru
      _
    %p246 = scmp.le.s32.totalorder 1, %s13
    %p247 = scmp.lt.s32.totalorder %s13, 3
    %p248 = pnand %p246, %p247
    %p249 = pneg %p248
    // Predicated region
    $region45: #{resnet_block_forward.3} parent=5 // pred_check
      _
    $region46: #{resnet_block_forward.3} parent=5 // pred_check_branch
      %251 = sbr.rel (%p248) target = $region48
    $region47: #{resnet_block_forward.3} parent=5 // pred_region
      %s252 = ssub.s32 %s13, 1
      %p253 = scmp.lt.s32.totalorder %s18, 1
      %s254 = scalar_select %p253, %s18, 1
      %s255 = smul.addr %s254, 20
      %s256 = smul.addr %s255, 4
      %s257 = scalar_lea.vmem %s0, %s256
      %p258 = pneg %p39
      %p259 = pneg %p36
      %p260 = pneg %p60
      %p261 = pneg %p57
      %p262 = pneg %p81
      %p263 = pneg %p78
      %p264 = pneg %p102
      %p265 = pneg %p99
      %p266 = scmp.lt.s32.totalorder %s18, 1
      %s267 = scalar_select %p266, %s18, 1
      %s268 = smul.addr %s267, 8
      %s269 = smul.addr %s268, 4
      %s270 = scalar_lea.vmem %s4, %s269
      %p271 = pneg %p128
      %p272 = pneg %p125
      %p273 = pneg %p149
      %p274 = pneg %p146
      %p275 = pneg %p170
      %p276 = pneg %p167
      %p277 = pneg %p196
      %p278 = pneg %p193
      %p279 = scmp.lt.s32.totalorder %s18, 1
      %s280 = scalar_select %p279, %s18, 1
      %s281 = smul.addr %s280, 8
      %s282 = smul.addr %s281, 4
      %s283 = scalar_lea.vmem %s7, %s282
      %p284 = scmp.lt.s32.totalorder %s18, 1
      %s285 = scalar_select %p284, %s18, 1
      %s286 = smul.addr %s285, 20
      %s287 = smul.addr %s286, 4
      %s288 = scalar_lea.vmem %s0, %s287
      %p289 = scmp.lt.s32.totalorder %s18, 1
      %s290 = scalar_select %p289, %s18, 1
      %s291 = smul.addr %s290, 8
      %s292 = smul.addr %s291, 4
      %s293 = scalar_lea.vmem %s4, %s292
      %p294 = scmp.lt.s32.totalorder %s18, 1
      %s295 = scalar_select %p294, %s18, 1
      %s296 = smul.addr %s295, 8
      %s297 = smul.addr %s296, 4
      %s298 = scalar_lea.vmem %s7, %s297
      %v300 = vld [vmem:[%s288] sm:$0xf]
      %v301 = vld [vmem:[%s288 + $0x8] sm:$0xf]
      %v302 = vld [vmem:[%s288 + $0x10] sm:$0xf]
      %v303 = vld [vmem:[%s288 + $0x18] sm:$0xf]
      %v304 = vld [vmem:[%s288 + $0x20] sm:$0xf]
      %v305 = vld [vmem:[%s288 + $0x28] sm:$0xf]
      %v306 = vld [vmem:[%s288 + $0x30] sm:$0xf]
      %v307 = vld [vmem:[%s288 + $0x38] sm:$0xf]
      %v308 = vld [vmem:[%s1] sm:$0xf]
      %v309 = vld [vmem:[%s1 + $0x4] sm:$0xf]
      %v310 = vld [vmem:[%s1 + $0x8] sm:$0xf]
      %v311 = vld [vmem:[%s1 + $0xc] sm:$0xf]
      %v312 = vld [vmem:[%s1 + $0x10] sm:$0xf]
      %v313 = vld [vmem:[%s1 + $0x14] sm:$0xf]
      %v314 = vld [vmem:[%s1 + $0x18] sm:$0xf]
      %v315 = vld [vmem:[%s1 + $0x1c] sm:$0xf]
      %v316 = vld [vmem:[%s1 + $0x20] sm:$0xf]
      %v317 = vld [vmem:[%s1 + $0x24] sm:$0xf]
      %v318 = vld [vmem:[%s1 + $0x28] sm:$0xf]
      %v319 = vld [vmem:[%s1 + $0x2c] sm:$0xf]
      %v320 = vld [vmem:[%s1 + $0x30] sm:$0xf]
      %v321 = vld [vmem:[%s1 + $0x34] sm:$0xf]
      %v322 = vld [vmem:[%s1 + $0x38] sm:$0xf]
      %v323 = vld [vmem:[%s1 + $0x3c] sm:$0xf]
      %v324 = vld [vmem:[%s288 + $0x4] sm:$0x1]
      %v325 = vld [vmem:[%s288 + $0xc] sm:$0x1]
      %v326 = vld [vmem:[%s288 + $0x14] sm:$0x1]
      %v327 = vld [vmem:[%s288 + $0x1c] sm:$0x1]
      %v328 = vld [vmem:[%s288 + $0x24] sm:$0x1]
      %v329 = vld [vmem:[%s288 + $0x2c] sm:$0x1]
      %v330 = vld [vmem:[%s288 + $0x34] sm:$0x1]
      %v331 = vld [vmem:[%s288 + $0x3c] sm:$0x1]
      %vm332 = vsmask.f32 3328
      %vm333 = vsmask.f32 7440
      %vm334 = vmor %vm332, %vm333
      %v336 = vshrl.u32 %v300, 16
      %v338 = vrot.slane %v336, 4
      %v339 = vshll.u32 %v300, 16
      %v341 = vrot.slane %v339, 5
      %v342 = vor.u32 %v338, %v341
      %v343 = vrot.slane %v342, 4
      %v345 = vshll.u32 %v324, 16
      %v347 = vrot.slane %v345, 5
      %v348 = vsel %vm334, %v343, %v347
      %v350 = vshrl.u32 %v301, 16
      %v352 = vrot.slane %v350, 4
      %v353 = vshll.u32 %v301, 16
      %v355 = vrot.slane %v353, 5
      %v356 = vor.u32 %v352, %v355
      %v357 = vrot.slane %v356, 4
      %v359 = vshll.u32 %v325, 16
      %v361 = vrot.slane %v359, 5
      %v362 = vsel %vm334, %v357, %v361
      %v364 = vshrl.u32 %v302, 16
      %v366 = vrot.slane %v364, 4
      %v367 = vshll.u32 %v302, 16
      %v369 = vrot.slane %v367, 5
      %v370 = vor.u32 %v366, %v369
      %v371 = vrot.slane %v370, 4
      %v373 = vshll.u32 %v326, 16
      %v375 = vrot.slane %v373, 5
      %v376 = vsel %vm334, %v371, %v375
      %v378 = vshrl.u32 %v303, 16
      %v380 = vrot.slane %v378, 4
      %v381 = vshll.u32 %v303, 16
      %v383 = vrot.slane %v381, 5
      %v384 = vor.u32 %v380, %v383
      %v385 = vrot.slane %v384, 4
      %v387 = vshll.u32 %v327, 16
      %v389 = vrot.slane %v387, 5
      %v390 = vsel %vm334, %v385, %v389
      %v392 = vshrl.u32 %v304, 16
      %v394 = vrot.slane %v392, 4
      %v395 = vshll.u32 %v304, 16
      %v397 = vrot.slane %v395, 5
      %v398 = vor.u32 %v394, %v397
      %v399 = vrot.slane %v398, 4
      %v401 = vshll.u32 %v328, 16
      %v403 = vrot.slane %v401, 5
      %v404 = vsel %vm334, %v399, %v403
      %v406 = vshrl.u32 %v305, 16
      %v408 = vrot.slane %v406, 4
      %v409 = vshll.u32 %v305, 16
      %v411 = vrot.slane %v409, 5
      %v412 = vor.u32 %v408, %v411
      %v413 = vrot.slane %v412, 4
      %v415 = vshll.u32 %v329, 16
      %v417 = vrot.slane %v415, 5
      %v418 = vsel %vm334, %v413, %v417
      %v420 = vshrl.u32 %v306, 16
      %v422 = vrot.slane %v420, 4
      %v423 = vshll.u32 %v306, 16
      %v425 = vrot.slane %v423, 5
      %v426 = vor.u32 %v422, %v425
      %v427 = vrot.slane %v426, 4
      %v429 = vshll.u32 %v330, 16
      %v431 = vrot.slane %v429, 5
      %v432 = vsel %vm334, %v427, %v431
      %v434 = vshrl.u32 %v307, 16
      %v436 = vrot.slane %v434, 4
      %v437 = vshll.u32 %v307, 16
      %v439 = vrot.slane %v437, 5
      %v440 = vor.u32 %v436, %v439
      %v441 = vrot.slane %v440, 4
      %v443 = vshll.u32 %v331, 16
      %v445 = vrot.slane %v443, 5
      %v446 = vsel %vm334, %v441, %v445
      %s447 = scalar_lea.vmem %s1, 64
      %v448 = vld [vmem:[%s447] sm:$0xf]
      %v449 = vld [vmem:[%s447 + $0x4] sm:$0xf]
      %v450 = vld [vmem:[%s447 + $0x8] sm:$0xf]
      %v451 = vld [vmem:[%s447 + $0xc] sm:$0xf]
      %v452 = vld [vmem:[%s447 + $0x10] sm:$0xf]
      %v453 = vld [vmem:[%s447 + $0x14] sm:$0xf]
      %v454 = vld [vmem:[%s447 + $0x18] sm:$0xf]
      %v455 = vld [vmem:[%s447 + $0x1c] sm:$0xf]
      %v456 = vld [vmem:[%s447 + $0x20] sm:$0xf]
      %v457 = vld [vmem:[%s447 + $0x24] sm:$0xf]
      %v458 = vld [vmem:[%s447 + $0x28] sm:$0xf]
      %v459 = vld [vmem:[%s447 + $0x2c] sm:$0xf]
      %v460 = vld [vmem:[%s447 + $0x30] sm:$0xf]
      %v461 = vld [vmem:[%s447 + $0x34] sm:$0xf]
      %v462 = vld [vmem:[%s447 + $0x38] sm:$0xf]
      %v463 = vld [vmem:[%s447 + $0x3c] sm:$0xf]
      %v464 = vunpack.c.l.b16 %v348
      %v465 = vunpack.c.l.b16 %v362
      %v466 = vunpack.c.l.b16 %v376
      %v467 = vunpack.c.l.b16 %v390
      %v468 = vunpack.c.l.b16 %v404
      %v469 = vunpack.c.l.b16 %v418
      %v470 = vunpack.c.l.b16 %v432
      %v471 = vunpack.c.l.b16 %v446
      %v472 = vpack.c.b16 %v465, %v464
      %v473 = vpack.c.b16 %v467, %v466
      %v474 = vpack.c.b16 %v469, %v468
      %v475 = vpack.c.b16 %v471, %v470
      %v496 = vunpack.c.l.b16 %v448
      %v497 = vunpack.c.l.b16 %v449
      %v498 = vunpack.c.l.b16 %v450
      %v499 = vunpack.c.l.b16 %v451
      %v500 = vunpack.c.l.b16 %v452
      %v501 = vunpack.c.l.b16 %v453
      %v502 = vunpack.c.l.b16 %v454
      %v503 = vunpack.c.l.b16 %v455
      %v504 = vunpack.c.l.b16 %v456
      %v505 = vunpack.c.l.b16 %v457
      %v506 = vunpack.c.l.b16 %v458
      %v507 = vunpack.c.l.b16 %v459
      %v508 = vunpack.c.l.b16 %v460
      %v509 = vunpack.c.l.b16 %v461
      %v510 = vunpack.c.l.b16 %v462
      %v511 = vunpack.c.l.b16 %v463
      %v512 = vpack.c.b16 %v497, %v496
      %v513 = vpack.c.b16 %v499, %v498
      %v514 = vpack.c.b16 %v501, %v500
      %v515 = vpack.c.b16 %v503, %v502
      %v516 = vpack.c.b16 %v505, %v504
      %v517 = vpack.c.b16 %v507, %v506
      %v518 = vpack.c.b16 %v509, %v508
      %v519 = vpack.c.b16 %v511, %v510
      %528 = vmatprep.subr.bf16.mxu0 0
      %529 = vmatpush1.bf16.msra.mxu0 %v519
      %530 = vmatprep.subr.bf16.mxu0 0
      %531 = vmatpush1.bf16.msra.mxu0 %v518
      %532 = vmatprep.subr.bf16.mxu0 0
      %533 = vmatpush1.bf16.msra.mxu0 %v517
      %534 = vmatprep.subr.bf16.mxu0 0
      %535 = vmatpush1.bf16.msra.mxu0 %v516
      %536 = vmatprep.subr.bf16.mxu0 0
      %537 = vmatpush1.bf16.msra.mxu0 %v515
      %538 = vmatprep.subr.bf16.mxu0 0
      %539 = vmatpush1.bf16.msra.mxu0 %v514
      %540 = vmatprep.subr.bf16.mxu0 0
      %541 = vmatpush1.bf16.msra.mxu0 %v513
      %542 = vmatprep.subr.bf16.mxu0 0
      %543 = vmatpush1.bf16.msra.mxu0 %v512
      %544 = vmatprep.subr.bf16.mxu0 0
      %545 = vmatpush2.bf16.msra.mxu0 0
      %546 = vmatprep.subr.bf16.mxu0 0
      %547 = vmatpush2.bf16.msra.mxu0 0
      %548 = vmatprep.subr.bf16.mxu0 0
      %549 = vmatpush2.bf16.msra.mxu0 0
      %550 = vmatprep.subr.bf16.mxu0 0
      %551 = vmatpush2.bf16.msra.mxu0 0
      %552 = vmatprep.subr.bf16.mxu0 0
      %553 = vmatpush2.bf16.msra.mxu0 0
      %554 = vmatprep.subr.bf16.mxu0 0
      %555 = vmatpush2.bf16.msra.mxu0 0
      %556 = vmatprep.subr.bf16.mxu0 0
      %557 = vmatpush2.bf16.msra.mxu0 0
      %558 = vmatprep.subr.bf16.mxu0 0
      %559 = vmatpush2.bf16.msra.mxu0 0
      %560 = vmatprep.mubr.bf16.mxu0 0
      %561 = vmatmul.mubr.bf16.gmra.mxu0 %v472
      %v562 = vpop.f32.mrf.mxu0
      %v563 = vadd.f32 0.0, %v562
      %v564 = vpop.f32.mrf.mxu0
      %v565 = vpop.f32.mrf.mxu0
      %v566 = vadd.f32 0.0, %v565
      %v567 = vpop.f32.mrf.mxu0
      %568 = vmatprep.mubr.bf16.mxu0 0
      %569 = vmatmul.mubr.bf16.gmra.mxu0 %v473
      %v570 = vpop.f32.mrf.mxu0
      %v571 = vadd.f32 0.0, %v570
      %v572 = vpop.f32.mrf.mxu0
      %v573 = vpop.f32.mrf.mxu0
      %v574 = vadd.f32 0.0, %v573
      %v575 = vpop.f32.mrf.mxu0
      %576 = vmatprep.mubr.bf16.mxu0 0
      %577 = vmatmul.mubr.bf16.gmra.mxu0 %v474
      %v578 = vpop.f32.mrf.mxu0
      %v579 = vadd.f32 0.0, %v578
      %v580 = vpop.f32.mrf.mxu0
      %v581 = vpop.f32.mrf.mxu0
      %v582 = vadd.f32 0.0, %v581
      %v583 = vpop.f32.mrf.mxu0
      %584 = vmatprep.mubr.bf16.mxu0 0
      %585 = vmatmul.mubr.bf16.gmra.mxu0 %v475
      %v586 = vpop.f32.mrf.mxu0
      %v587 = vadd.f32 0.0, %v586
      %v588 = vpop.f32.mrf.mxu0
      %v589 = vpop.f32.mrf.mxu0
      %v590 = vadd.f32 0.0, %v589
      %v591 = vpop.f32.mrf.mxu0
      %592 = vdwg.mxu0
      %v601 = vunpack.c.l.b16 %v300
      %v602 = vunpack.c.l.b16 %v301
      %v603 = vunpack.c.l.b16 %v302
      %v604 = vunpack.c.l.b16 %v303
      %v605 = vunpack.c.l.b16 %v304
      %v606 = vunpack.c.l.b16 %v305
      %v607 = vunpack.c.l.b16 %v306
      %v608 = vunpack.c.l.b16 %v307
      %v609 = vpack.c.b16 %v602, %v601
      %v610 = vpack.c.b16 %v604, %v603
      %v611 = vpack.c.b16 %v606, %v605
      %v612 = vpack.c.b16 %v608, %v607
      %v633 = vunpack.c.l.b16 %v308
      %v634 = vunpack.c.l.b16 %v309
      %v635 = vunpack.c.l.b16 %v310
      %v636 = vunpack.c.l.b16 %v311
      %v637 = vunpack.c.l.b16 %v312
      %v638 = vunpack.c.l.b16 %v313
      %v639 = vunpack.c.l.b16 %v314
      %v640 = vunpack.c.l.b16 %v315
      %v641 = vunpack.c.l.b16 %v316
      %v642 = vunpack.c.l.b16 %v317
      %v643 = vunpack.c.l.b16 %v318
      %v644 = vunpack.c.l.b16 %v319
      %v645 = vunpack.c.l.b16 %v320
      %v646 = vunpack.c.l.b16 %v321
      %v647 = vunpack.c.l.b16 %v322
      %v648 = vunpack.c.l.b16 %v323
      %v649 = vpack.c.b16 %v634, %v633
      %v650 = vpack.c.b16 %v636, %v635
      %v651 = vpack.c.b16 %v638, %v637
      %v652 = vpack.c.b16 %v640, %v639
      %v653 = vpack.c.b16 %v642, %v641
      %v654 = vpack.c.b16 %v644, %v643
      %v655 = vpack.c.b16 %v646, %v645
      %v656 = vpack.c.b16 %v648, %v647
      %665 = vmatprep.subr.bf16.mxu0 0
      %666 = vmatpush1.bf16.msra.mxu0 %v656
      %667 = vmatprep.subr.bf16.mxu0 0
      %668 = vmatpush1.bf16.msra.mxu0 %v655
      %669 = vmatprep.subr.bf16.mxu0 0
      %670 = vmatpush1.bf16.msra.mxu0 %v654
      %671 = vmatprep.subr.bf16.mxu0 0
      %672 = vmatpush1.bf16.msra.mxu0 %v653
      %673 = vmatprep.subr.bf16.mxu0 0
      %674 = vmatpush1.bf16.msra.mxu0 %v652
      %675 = vmatprep.subr.bf16.mxu0 0
      %676 = vmatpush1.bf16.msra.mxu0 %v651
      %677 = vmatprep.subr.bf16.mxu0 0
      %678 = vmatpush1.bf16.msra.mxu0 %v650
      %679 = vmatprep.subr.bf16.mxu0 0
      %680 = vmatpush1.bf16.msra.mxu0 %v649
      %681 = vmatprep.subr.bf16.mxu0 0
      %682 = vmatpush2.bf16.msra.mxu0 0
      %683 = vmatprep.subr.bf16.mxu0 0
      %684 = vmatpush2.bf16.msra.mxu0 0
      %685 = vmatprep.subr.bf16.mxu0 0
      %686 = vmatpush2.bf16.msra.mxu0 0
      %687 = vmatprep.subr.bf16.mxu0 0
      %688 = vmatpush2.bf16.msra.mxu0 0
      %689 = vmatprep.subr.bf16.mxu0 0
      %690 = vmatpush2.bf16.msra.mxu0 0
      %691 = vmatprep.subr.bf16.mxu0 0
      %692 = vmatpush2.bf16.msra.mxu0 0
      %693 = vmatprep.subr.bf16.mxu0 0
      %694 = vmatpush2.bf16.msra.mxu0 0
      %695 = vmatprep.subr.bf16.mxu0 0
      %696 = vmatpush2.bf16.msra.mxu0 0
      %697 = vmatprep.mubr.bf16.mxu0 0
      %698 = vmatmul.mubr.bf16.gmra.mxu0 %v609
      %v699 = vpop.f32.mrf.mxu0
      %v700 = vadd.f32 %v563, %v699
      %v701 = vpop.f32.mrf.mxu0
      %v702 = vpop.f32.mrf.mxu0
      %v703 = vadd.f32 %v566, %v702
      %v704 = vpop.f32.mrf.mxu0
      %705 = vmatprep.mubr.bf16.mxu0 0
      %706 = vmatmul.mubr.bf16.gmra.mxu0 %v610
      %v707 = vpop.f32.mrf.mxu0
      %v708 = vadd.f32 %v571, %v707
      %v709 = vpop.f32.mrf.mxu0
      %v710 = vpop.f32.mrf.mxu0
      %v711 = vadd.f32 %v574, %v710
      %v712 = vpop.f32.mrf.mxu0
      %713 = vmatprep.mubr.bf16.mxu0 0
      %714 = vmatmul.mubr.bf16.gmra.mxu0 %v611
      %v715 = vpop.f32.mrf.mxu0
      %v716 = vadd.f32 %v579, %v715
      %v717 = vpop.f32.mrf.mxu0
      %v718 = vpop.f32.mrf.mxu0
      %v719 = vadd.f32 %v582, %v718
      %v720 = vpop.f32.mrf.mxu0
      %721 = vmatprep.mubr.bf16.mxu0 0
      %722 = vmatmul.mubr.bf16.gmra.mxu0 %v612
      %v723 = vpop.f32.mrf.mxu0
      %v724 = vadd.f32 %v587, %v723
      %v725 = vpop.f32.mrf.mxu0
      %v726 = vpop.f32.mrf.mxu0
      %v727 = vadd.f32 %v590, %v726
      %v728 = vpop.f32.mrf.mxu0
      %729 = vdwg.mxu0
      %v730 = vld [vmem:[%s288] sm:$0xe]
      %v731 = vld [vmem:[%s288 + $0x8] sm:$0xe]
      %v732 = vld [vmem:[%s288 + $0x10] sm:$0xe]
      %v733 = vld [vmem:[%s288 + $0x18] sm:$0xe]
      %v734 = vld [vmem:[%s288 + $0x20] sm:$0xe]
      %v735 = vld [vmem:[%s288 + $0x28] sm:$0xe]
      %v736 = vld [vmem:[%s288 + $0x30] sm:$0xe]
      %v737 = vld [vmem:[%s288 + $0x38] sm:$0xe]
      %vm754 = vcmask 1042432
      %vm755 = vcmask 1046532
      %vm756 = vmor %vm754, %vm755
      %v757 = vrot.slane %v730, 5
      %v758 = vrot.slane %v757, 4
      %v759 = vrot.slane %v324, 5
      %v760 = vsel %vm756, %v758, %v759
      %v761 = vrot.slane %v731, 5
      %v762 = vrot.slane %v761, 4
      %v763 = vrot.slane %v325, 5
      %v764 = vsel %vm756, %v762, %v763
      %v765 = vrot.slane %v732, 5
      %v766 = vrot.slane %v765, 4
      %v767 = vrot.slane %v326, 5
      %v768 = vsel %vm756, %v766, %v767
      %v769 = vrot.slane %v733, 5
      %v770 = vrot.slane %v769, 4
      %v771 = vrot.slane %v327, 5
      %v772 = vsel %vm756, %v770, %v771
      %v773 = vrot.slane %v734, 5
      %v774 = vrot.slane %v773, 4
      %v775 = vrot.slane %v328, 5
      %v776 = vsel %vm756, %v774, %v775
      %v777 = vrot.slane %v735, 5
      %v778 = vrot.slane %v777, 4
      %v779 = vrot.slane %v329, 5
      %v780 = vsel %vm756, %v778, %v779
      %v781 = vrot.slane %v736, 5
      %v782 = vrot.slane %v781, 4
      %v783 = vrot.slane %v330, 5
      %v784 = vsel %vm756, %v782, %v783
      %v785 = vrot.slane %v737, 5
      %v786 = vrot.slane %v785, 4
      %v787 = vrot.slane %v331, 5
      %v788 = vsel %vm756, %v786, %v787
      %s789 = scalar_lea.vmem %s1, 128
      %v790 = vld [vmem:[%s789] sm:$0xf]
      %v791 = vld [vmem:[%s789 + $0x4] sm:$0xf]
      %v792 = vld [vmem:[%s789 + $0x8] sm:$0xf]
      %v793 = vld [vmem:[%s789 + $0xc] sm:$0xf]
      %v794 = vld [vmem:[%s789 + $0x10] sm:$0xf]
      %v795 = vld [vmem:[%s789 + $0x14] sm:$0xf]
      %v796 = vld [vmem:[%s789 + $0x18] sm:$0xf]
      %v797 = vld [vmem:[%s789 + $0x1c] sm:$0xf]
      %v798 = vld [vmem:[%s789 + $0x20] sm:$0xf]
      %v799 = vld [vmem:[%s789 + $0x24] sm:$0xf]
      %v800 = vld [vmem:[%s789 + $0x28] sm:$0xf]
      %v801 = vld [vmem:[%s789 + $0x2c] sm:$0xf]
      %v802 = vld [vmem:[%s789 + $0x30] sm:$0xf]
      %v803 = vld [vmem:[%s789 + $0x34] sm:$0xf]
      %v804 = vld [vmem:[%s789 + $0x38] sm:$0xf]
      %v805 = vld [vmem:[%s789 + $0x3c] sm:$0xf]
      %v806 = vunpack.c.l.b16 %v760
      %v807 = vunpack.c.l.b16 %v764
      %v808 = vunpack.c.l.b16 %v768
      %v809 = vunpack.c.l.b16 %v772
      %v810 = vunpack.c.l.b16 %v776
      %v811 = vunpack.c.l.b16 %v780
      %v812 = vunpack.c.l.b16 %v784
      %v813 = vunpack.c.l.b16 %v788
      %v814 = vpack.c.b16 %v807, %v806
      %v815 = vpack.c.b16 %v809, %v808
      %v816 = vpack.c.b16 %v811, %v810
      %v817 = vpack.c.b16 %v813, %v812
      %v838 = vunpack.c.l.b16 %v790
      %v839 = vunpack.c.l.b16 %v791
      %v840 = vunpack.c.l.b16 %v792
      %v841 = vunpack.c.l.b16 %v793
      %v842 = vunpack.c.l.b16 %v794
      %v843 = vunpack.c.l.b16 %v795
      %v844 = vunpack.c.l.b16 %v796
      %v845 = vunpack.c.l.b16 %v797
      %v846 = vunpack.c.l.b16 %v798
      %v847 = vunpack.c.l.b16 %v799
      %v848 = vunpack.c.l.b16 %v800
      %v849 = vunpack.c.l.b16 %v801
      %v850 = vunpack.c.l.b16 %v802
      %v851 = vunpack.c.l.b16 %v803
      %v852 = vunpack.c.l.b16 %v804
      %v853 = vunpack.c.l.b16 %v805
      %v854 = vpack.c.b16 %v839, %v838
      %v855 = vpack.c.b16 %v841, %v840
      %v856 = vpack.c.b16 %v843, %v842
      %v857 = vpack.c.b16 %v845, %v844
      %v858 = vpack.c.b16 %v847, %v846
      %v859 = vpack.c.b16 %v849, %v848
      %v860 = vpack.c.b16 %v851, %v850
      %v861 = vpack.c.b16 %v853, %v852
      %870 = vmatprep.subr.bf16.mxu0 0
      %871 = vmatpush1.bf16.msra.mxu0 %v861
      %872 = vmatprep.subr.bf16.mxu0 0
      %873 = vmatpush1.bf16.msra.mxu0 %v860
      %874 = vmatprep.subr.bf16.mxu0 0
      %875 = vmatpush1.bf16.msra.mxu0 %v859
      %876 = vmatprep.subr.bf16.mxu0 0
      %877 = vmatpush1.bf16.msra.mxu0 %v858
      %878 = vmatprep.subr.bf16.mxu0 0
      %879 = vmatpush1.bf16.msra.mxu0 %v857
      %880 = vmatprep.subr.bf16.mxu0 0
      %881 = vmatpush1.bf16.msra.mxu0 %v856
      %882 = vmatprep.subr.bf16.mxu0 0
      %883 = vmatpush1.bf16.msra.mxu0 %v855
      %884 = vmatprep.subr.bf16.mxu0 0
      %885 = vmatpush1.bf16.msra.mxu0 %v854
      %886 = vmatprep.subr.bf16.mxu0 0
      %887 = vmatpush2.bf16.msra.mxu0 0
      %888 = vmatprep.subr.bf16.mxu0 0
      %889 = vmatpush2.bf16.msra.mxu0 0
      %890 = vmatprep.subr.bf16.mxu0 0
      %891 = vmatpush2.bf16.msra.mxu0 0
      %892 = vmatprep.subr.bf16.mxu0 0
      %893 = vmatpush2.bf16.msra.mxu0 0
      %894 = vmatprep.subr.bf16.mxu0 0
      %895 = vmatpush2.bf16.msra.mxu0 0
      %896 = vmatprep.subr.bf16.mxu0 0
      %897 = vmatpush2.bf16.msra.mxu0 0
      %898 = vmatprep.subr.bf16.mxu0 0
      %899 = vmatpush2.bf16.msra.mxu0 0
      %900 = vmatprep.subr.bf16.mxu0 0
      %901 = vmatpush2.bf16.msra.mxu0 0
      %902 = vmatprep.mubr.bf16.mxu0 0
      %903 = vmatmul.mubr.bf16.gmra.mxu0 %v814
      %v904 = vpop.f32.mrf.mxu0
      %v905 = vadd.f32 0.0, %v904
      %v906 = vpop.f32.mrf.mxu0
      %v907 = vpop.f32.mrf.mxu0
      %v908 = vadd.f32 0.0, %v907
      %v909 = vpop.f32.mrf.mxu0
      %910 = vmatprep.mubr.bf16.mxu0 0
      %911 = vmatmul.mubr.bf16.gmra.mxu0 %v815
      %v912 = vpop.f32.mrf.mxu0
      %v913 = vadd.f32 0.0, %v912
      %v914 = vpop.f32.mrf.mxu0
      %v915 = vpop.f32.mrf.mxu0
      %v916 = vadd.f32 0.0, %v915
      %v917 = vpop.f32.mrf.mxu0
      %918 = vmatprep.mubr.bf16.mxu0 0
      %919 = vmatmul.mubr.bf16.gmra.mxu0 %v816
      %v920 = vpop.f32.mrf.mxu0
      %v921 = vadd.f32 0.0, %v920
      %v922 = vpop.f32.mrf.mxu0
      %v923 = vpop.f32.mrf.mxu0
      %v924 = vadd.f32 0.0, %v923
      %v925 = vpop.f32.mrf.mxu0
      %926 = vmatprep.mubr.bf16.mxu0 0
      %927 = vmatmul.mubr.bf16.gmra.mxu0 %v817
      %v928 = vpop.f32.mrf.mxu0
      %v929 = vadd.f32 0.0, %v928
      %v930 = vpop.f32.mrf.mxu0
      %v931 = vpop.f32.mrf.mxu0
      %v932 = vadd.f32 0.0, %v931
      %v933 = vpop.f32.mrf.mxu0
      %934 = vdwg.mxu0
      %v935 = vadd.f32 %v700, %v905
      %v936 = vadd.f32 %v703, %v908
      %v937 = vadd.f32 %v708, %v913
      %v938 = vadd.f32 %v711, %v916
      %v939 = vadd.f32 %v716, %v921
      %v940 = vadd.f32 %v719, %v924
      %v941 = vadd.f32 %v724, %v929
      %v942 = vadd.f32 %v727, %v932
      %s943 = scalar_lea.vmem %s288, 8
      %v944 = vld [vmem:[%s943] sm:$0xf]
      %v945 = vld [vmem:[%s943 + $0x8] sm:$0xf]
      %v946 = vld [vmem:[%s943 + $0x10] sm:$0xf]
      %v947 = vld [vmem:[%s943 + $0x18] sm:$0xf]
      %v948 = vld [vmem:[%s943 + $0x20] sm:$0xf]
      %v949 = vld [vmem:[%s943 + $0x28] sm:$0xf]
      %v950 = vld [vmem:[%s943 + $0x30] sm:$0xf]
      %v951 = vld [vmem:[%s943 + $0x38] sm:$0xf]
      %s952 = scalar_lea.vmem %s1, 192
      %v953 = vld [vmem:[%s952] sm:$0xf]
      %v954 = vld [vmem:[%s952 + $0x4] sm:$0xf]
      %v955 = vld [vmem:[%s952 + $0x8] sm:$0xf]
      %v956 = vld [vmem:[%s952 + $0xc] sm:$0xf]
      %v957 = vld [vmem:[%s952 + $0x10] sm:$0xf]
      %v958 = vld [vmem:[%s952 + $0x14] sm:$0xf]
      %v959 = vld [vmem:[%s952 + $0x18] sm:$0xf]
      %v960 = vld [vmem:[%s952 + $0x1c] sm:$0xf]
      %v961 = vld [vmem:[%s952 + $0x20] sm:$0xf]
      %v962 = vld [vmem:[%s952 + $0x24] sm:$0xf]
      %v963 = vld [vmem:[%s952 + $0x28] sm:$0xf]
      %v964 = vld [vmem:[%s952 + $0x2c] sm:$0xf]
      %v965 = vld [vmem:[%s952 + $0x30] sm:$0xf]
      %v966 = vld [vmem:[%s952 + $0x34] sm:$0xf]
      %v967 = vld [vmem:[%s952 + $0x38] sm:$0xf]
      %v968 = vld [vmem:[%s952 + $0x3c] sm:$0xf]
      %v977 = vunpack.c.l.b16 %v944
      %v978 = vunpack.c.l.b16 %v945
      %v979 = vunpack.c.l.b16 %v946
      %v980 = vunpack.c.l.b16 %v947
      %v981 = vunpack.c.l.b16 %v948
      %v982 = vunpack.c.l.b16 %v949
      %v983 = vunpack.c.l.b16 %v950
      %v984 = vunpack.c.l.b16 %v951
      %v985 = vpack.c.b16 %v978, %v977
      %v986 = vpack.c.b16 %v980, %v979
      %v987 = vpack.c.b16 %v982, %v981
      %v988 = vpack.c.b16 %v984, %v983
      %v1009 = vunpack.c.l.b16 %v953
      %v1010 = vunpack.c.l.b16 %v954
      %v1011 = vunpack.c.l.b16 %v955
      %v1012 = vunpack.c.l.b16 %v956
      %v1013 = vunpack.c.l.b16 %v957
      %v1014 = vunpack.c.l.b16 %v958
      %v1015 = vunpack.c.l.b16 %v959
      %v1016 = vunpack.c.l.b16 %v960
      %v1017 = vunpack.c.l.b16 %v961
      %v1018 = vunpack.c.l.b16 %v962
      %v1019 = vunpack.c.l.b16 %v963
      %v1020 = vunpack.c.l.b16 %v964
      %v1021 = vunpack.c.l.b16 %v965
      %v1022 = vunpack.c.l.b16 %v966
      %v1023 = vunpack.c.l.b16 %v967
      %v1024 = vunpack.c.l.b16 %v968
      %v1025 = vpack.c.b16 %v1010, %v1009
      %v1026 = vpack.c.b16 %v1012, %v1011
      %v1027 = vpack.c.b16 %v1014, %v1013
      %v1028 = vpack.c.b16 %v1016, %v1015
      %v1029 = vpack.c.b16 %v1018, %v1017
      %v1030 = vpack.c.b16 %v1020, %v1019
      %v1031 = vpack.c.b16 %v1022, %v1021
      %v1032 = vpack.c.b16 %v1024, %v1023
      %1041 = vmatprep.subr.bf16.mxu0 0
      %1042 = vmatpush1.bf16.msra.mxu0 %v1032
      %1043 = vmatprep.subr.bf16.mxu0 0
      %1044 = vmatpush1.bf16.msra.mxu0 %v1031
      %1045 = vmatprep.subr.bf16.mxu0 0
      %1046 = vmatpush1.bf16.msra.mxu0 %v1030
      %1047 = vmatprep.subr.bf16.mxu0 0
      %1048 = vmatpush1.bf16.msra.mxu0 %v1029
      %1049 = vmatprep.subr.bf16.mxu0 0
      %1050 = vmatpush1.bf16.msra.mxu0 %v1028
      %1051 = vmatprep.subr.bf16.mxu0 0
      %1052 = vmatpush1.bf16.msra.mxu0 %v1027
      %1053 = vmatprep.subr.bf16.mxu0 0
      %1054 = vmatpush1.bf16.msra.mxu0 %v1026
      %1055 = vmatprep.subr.bf16.mxu0 0
      %1056 = vmatpush1.bf16.msra.mxu0 %v1025
      %1057 = vmatprep.subr.bf16.mxu0 0
      %1058 = vmatpush2.bf16.msra.mxu0 0
      %1059 = vmatprep.subr.bf16.mxu0 0
      %1060 = vmatpush2.bf16.msra.mxu0 0
      %1061 = vmatprep.subr.bf16.mxu0 0
      %1062 = vmatpush2.bf16.msra.mxu0 0
      %1063 = vmatprep.subr.bf16.mxu0 0
      %1064 = vmatpush2.bf16.msra.mxu0 0
      %1065 = vmatprep.subr.bf16.mxu0 0
      %1066 = vmatpush2.bf16.msra.mxu0 0
      %1067 = vmatprep.subr.bf16.mxu0 0
      %1068 = vmatpush2.bf16.msra.mxu0 0
      %1069 = vmatprep.subr.bf16.mxu0 0
      %1070 = vmatpush2.bf16.msra.mxu0 0
      %1071 = vmatprep.subr.bf16.mxu0 0
      %1072 = vmatpush2.bf16.msra.mxu0 0
      %1073 = vmatprep.mubr.bf16.mxu0 0
      %1074 = vmatmul.mubr.bf16.gmra.mxu0 %v985
      %v1075 = vpop.f32.mrf.mxu0
      %v1076 = vadd.f32 0.0, %v1075
      %v1077 = vpop.f32.mrf.mxu0
      %v1078 = vpop.f32.mrf.mxu0
      %v1079 = vadd.f32 0.0, %v1078
      %v1080 = vpop.f32.mrf.mxu0
      %1081 = vmatprep.mubr.bf16.mxu0 0
      %1082 = vmatmul.mubr.bf16.gmra.mxu0 %v986
      %v1083 = vpop.f32.mrf.mxu0
      %v1084 = vadd.f32 0.0, %v1083
      %v1085 = vpop.f32.mrf.mxu0
      %v1086 = vpop.f32.mrf.mxu0
      %v1087 = vadd.f32 0.0, %v1086
      %v1088 = vpop.f32.mrf.mxu0
      %1089 = vmatprep.mubr.bf16.mxu0 0
      %1090 = vmatmul.mubr.bf16.gmra.mxu0 %v987
      %v1091 = vpop.f32.mrf.mxu0
      %v1092 = vadd.f32 0.0, %v1091
      %v1093 = vpop.f32.mrf.mxu0
      %v1094 = vpop.f32.mrf.mxu0
      %v1095 = vadd.f32 0.0, %v1094
      %v1096 = vpop.f32.mrf.mxu0
      %1097 = vmatprep.mubr.bf16.mxu0 0
      %1098 = vmatmul.mubr.bf16.gmra.mxu0 %v988
      %v1099 = vpop.f32.mrf.mxu0
      %v1100 = vadd.f32 0.0, %v1099
      %v1101 = vpop.f32.mrf.mxu0
      %v1102 = vpop.f32.mrf.mxu0
      %v1103 = vadd.f32 0.0, %v1102
      %v1104 = vpop.f32.mrf.mxu0
      %1105 = vdwg.mxu0
      %v1106 = vadd.f32 %v935, %v1076
      %v1107 = vadd.f32 %v936, %v1079
      %v1108 = vadd.f32 %v937, %v1084
      %v1109 = vadd.f32 %v938, %v1087
      %v1110 = vadd.f32 %v939, %v1092
      %v1111 = vadd.f32 %v940, %v1095
      %v1112 = vadd.f32 %v941, %v1100
      %v1113 = vadd.f32 %v942, %v1103
      %v1114 = vld [vmem:[%s943] sm:$0xf]
      %v1115 = vld [vmem:[%s943 + $0x4] sm:$0x1]
      %v1116 = vld [vmem:[%s943 + $0x8] sm:$0xf]
      %v1117 = vld [vmem:[%s943 + $0xc] sm:$0x1]
      %v1118 = vld [vmem:[%s943 + $0x10] sm:$0xf]
      %v1119 = vld [vmem:[%s943 + $0x14] sm:$0x1]
      %v1120 = vld [vmem:[%s943 + $0x18] sm:$0xf]
      %v1121 = vld [vmem:[%s943 + $0x1c] sm:$0x1]
      %v1122 = vld [vmem:[%s943 + $0x20] sm:$0xf]
      %v1123 = vld [vmem:[%s943 + $0x24] sm:$0x1]
      %v1124 = vld [vmem:[%s943 + $0x28] sm:$0xf]
      %v1125 = vld [vmem:[%s943 + $0x2c] sm:$0x1]
      %v1126 = vld [vmem:[%s943 + $0x30] sm:$0xf]
      %v1127 = vld [vmem:[%s943 + $0x34] sm:$0x1]
      %v1128 = vld [vmem:[%s943 + $0x38] sm:$0xf]
      %v1129 = vld [vmem:[%s943 + $0x3c] sm:$0x1]
      %v1131 = vshrl.u32 %v1114, 16
      %v1133 = vrot.slane %v1131, 4
      %v1134 = vshll.u32 %v1114, 16
      %v1136 = vrot.slane %v1134, 5
      %v1137 = vor.u32 %v1133, %v1136
      %v1138 = vrot.slane %v1137, 4
      %v1140 = vshll.u32 %v1115, 16
      %v1142 = vrot.slane %v1140, 5
      %v1143 = vsel %vm334, %v1138, %v1142
      %v1145 = vshrl.u32 %v1116, 16
      %v1147 = vrot.slane %v1145, 4
      %v1148 = vshll.u32 %v1116, 16
      %v1150 = vrot.slane %v1148, 5
      %v1151 = vor.u32 %v1147, %v1150
      %v1152 = vrot.slane %v1151, 4
      %v1154 = vshll.u32 %v1117, 16
      %v1156 = vrot.slane %v1154, 5
      %v1157 = vsel %vm334, %v1152, %v1156
      %v1159 = vshrl.u32 %v1118, 16
      %v1161 = vrot.slane %v1159, 4
      %v1162 = vshll.u32 %v1118, 16
      %v1164 = vrot.slane %v1162, 5
      %v1165 = vor.u32 %v1161, %v1164
      %v1166 = vrot.slane %v1165, 4
      %v1168 = vshll.u32 %v1119, 16
      %v1170 = vrot.slane %v1168, 5
      %v1171 = vsel %vm334, %v1166, %v1170
      %v1173 = vshrl.u32 %v1120, 16
      %v1175 = vrot.slane %v1173, 4
      %v1176 = vshll.u32 %v1120, 16
      %v1178 = vrot.slane %v1176, 5
      %v1179 = vor.u32 %v1175, %v1178
      %v1180 = vrot.slane %v1179, 4
      %v1182 = vshll.u32 %v1121, 16
      %v1184 = vrot.slane %v1182, 5
      %v1185 = vsel %vm334, %v1180, %v1184
      %v1187 = vshrl.u32 %v1122, 16
      %v1189 = vrot.slane %v1187, 4
      %v1190 = vshll.u32 %v1122, 16
      %v1192 = vrot.slane %v1190, 5
      %v1193 = vor.u32 %v1189, %v1192
      %v1194 = vrot.slane %v1193, 4
      %v1196 = vshll.u32 %v1123, 16
      %v1198 = vrot.slane %v1196, 5
      %v1199 = vsel %vm334, %v1194, %v1198
      %v1201 = vshrl.u32 %v1124, 16
      %v1203 = vrot.slane %v1201, 4
      %v1204 = vshll.u32 %v1124, 16
      %v1206 = vrot.slane %v1204, 5
      %v1207 = vor.u32 %v1203, %v1206
      %v1208 = vrot.slane %v1207, 4
      %v1210 = vshll.u32 %v1125, 16
      %v1212 = vrot.slane %v1210, 5
      %v1213 = vsel %vm334, %v1208, %v1212
      %v1215 = vshrl.u32 %v1126, 16
      %v1217 = vrot.slane %v1215, 4
      %v1218 = vshll.u32 %v1126, 16
      %v1220 = vrot.slane %v1218, 5
      %v1221 = vor.u32 %v1217, %v1220
      %v1222 = vrot.slane %v1221, 4
      %v1224 = vshll.u32 %v1127, 16
      %v1226 = vrot.slane %v1224, 5
      %v1227 = vsel %vm334, %v1222, %v1226
      %v1229 = vshrl.u32 %v1128, 16
      %v1231 = vrot.slane %v1229, 4
      %v1232 = vshll.u32 %v1128, 16
      %v1234 = vrot.slane %v1232, 5
      %v1235 = vor.u32 %v1231, %v1234
      %v1236 = vrot.slane %v1235, 4
      %v1238 = vshll.u32 %v1129, 16
      %v1240 = vrot.slane %v1238, 5
      %v1241 = vsel %vm334, %v1236, %v1240
      %s1242 = scalar_lea.vmem %s1, 256
      %v1243 = vld [vmem:[%s1242] sm:$0xf]
      %v1244 = vld [vmem:[%s1242 + $0x4] sm:$0xf]
      %v1245 = vld [vmem:[%s1242 + $0x8] sm:$0xf]
      %v1246 = vld [vmem:[%s1242 + $0xc] sm:$0xf]
      %v1247 = vld [vmem:[%s1242 + $0x10] sm:$0xf]
      %v1248 = vld [vmem:[%s1242 + $0x14] sm:$0xf]
      %v1249 = vld [vmem:[%s1242 + $0x18] sm:$0xf]
      %v1250 = vld [vmem:[%s1242 + $0x1c] sm:$0xf]
      %v1251 = vld [vmem:[%s1242 + $0x20] sm:$0xf]
      %v1252 = vld [vmem:[%s1242 + $0x24] sm:$0xf]
      %v1253 = vld [vmem:[%s1242 + $0x28] sm:$0xf]
      %v1254 = vld [vmem:[%s1242 + $0x2c] sm:$0xf]
      %v1255 = vld [vmem:[%s1242 + $0x30] sm:$0xf]
      %v1256 = vld [vmem:[%s1242 + $0x34] sm:$0xf]
      %v1257 = vld [vmem:[%s1242 + $0x38] sm:$0xf]
      %v1258 = vld [vmem:[%s1242 + $0x3c] sm:$0xf]
      %v1259 = vunpack.c.l.b16 %v1143
      %v1260 = vunpack.c.l.b16 %v1157
      %v1261 = vunpack.c.l.b16 %v1171
      %v1262 = vunpack.c.l.b16 %v1185
      %v1263 = vunpack.c.l.b16 %v1199
      %v1264 = vunpack.c.l.b16 %v1213
      %v1265 = vunpack.c.l.b16 %v1227
      %v1266 = vunpack.c.l.b16 %v1241
      %v1267 = vpack.c.b16 %v1260, %v1259
      %v1268 = vpack.c.b16 %v1262, %v1261
      %v1269 = vpack.c.b16 %v1264, %v1263
      %v1270 = vpack.c.b16 %v1266, %v1265
      %v1291 = vunpack.c.l.b16 %v1243
      %v1292 = vunpack.c.l.b16 %v1244
      %v1293 = vunpack.c.l.b16 %v1245
      %v1294 = vunpack.c.l.b16 %v1246
      %v1295 = vunpack.c.l.b16 %v1247
      %v1296 = vunpack.c.l.b16 %v1248
      %v1297 = vunpack.c.l.b16 %v1249
      %v1298 = vunpack.c.l.b16 %v1250
      %v1299 = vunpack.c.l.b16 %v1251
      %v1300 = vunpack.c.l.b16 %v1252
      %v1301 = vunpack.c.l.b16 %v1253
      %v1302 = vunpack.c.l.b16 %v1254
      %v1303 = vunpack.c.l.b16 %v1255
      %v1304 = vunpack.c.l.b16 %v1256
      %v1305 = vunpack.c.l.b16 %v1257
      %v1306 = vunpack.c.l.b16 %v1258
      %v1307 = vpack.c.b16 %v1292, %v1291
      %v1308 = vpack.c.b16 %v1294, %v1293
      %v1309 = vpack.c.b16 %v1296, %v1295
      %v1310 = vpack.c.b16 %v1298, %v1297
      %v1311 = vpack.c.b16 %v1300, %v1299
      %v1312 = vpack.c.b16 %v1302, %v1301
      %v1313 = vpack.c.b16 %v1304, %v1303
      %v1314 = vpack.c.b16 %v1306, %v1305
      %1323 = vmatprep.subr.bf16.mxu0 0
      %1324 = vmatpush1.bf16.msra.mxu0 %v1314
      %1325 = vmatprep.subr.bf16.mxu0 0
      %1326 = vmatpush1.bf16.msra.mxu0 %v1313
      %1327 = vmatprep.subr.bf16.mxu0 0
      %1328 = vmatpush1.bf16.msra.mxu0 %v1312
      %1329 = vmatprep.subr.bf16.mxu0 0
      %1330 = vmatpush1.bf16.msra.mxu0 %v1311
      %1331 = vmatprep.subr.bf16.mxu0 0
      %1332 = vmatpush1.bf16.msra.mxu0 %v1310
      %1333 = vmatprep.subr.bf16.mxu0 0
      %1334 = vmatpush1.bf16.msra.mxu0 %v1309
      %1335 = vmatprep.subr.bf16.mxu0 0
      %1336 = vmatpush1.bf16.msra.mxu0 %v1308
      %1337 = vmatprep.subr.bf16.mxu0 0
      %1338 = vmatpush1.bf16.msra.mxu0 %v1307
      %1339 = vmatprep.subr.bf16.mxu0 0
      %1340 = vmatpush2.bf16.msra.mxu0 0
      %1341 = vmatprep.subr.bf16.mxu0 0
      %1342 = vmatpush2.bf16.msra.mxu0 0
      %1343 = vmatprep.subr.bf16.mxu0 0
      %1344 = vmatpush2.bf16.msra.mxu0 0
      %1345 = vmatprep.subr.bf16.mxu0 0
      %1346 = vmatpush2.bf16.msra.mxu0 0
      %1347 = vmatprep.subr.bf16.mxu0 0
      %1348 = vmatpush2.bf16.msra.mxu0 0
      %1349 = vmatprep.subr.bf16.mxu0 0
      %1350 = vmatpush2.bf16.msra.mxu0 0
      %1351 = vmatprep.subr.bf16.mxu0 0
      %1352 = vmatpush2.bf16.msra.mxu0 0
      %1353 = vmatprep.subr.bf16.mxu0 0
      %1354 = vmatpush2.bf16.msra.mxu0 0
      %1355 = vmatprep.mubr.bf16.mxu0 0
      %1356 = vmatmul.mubr.bf16.gmra.mxu0 %v1267
      %v1357 = vpop.f32.mrf.mxu0
      %v1358 = vadd.f32 0.0, %v1357
      %v1359 = vpop.f32.mrf.mxu0
      %v1360 = vpop.f32.mrf.mxu0
      %v1361 = vadd.f32 0.0, %v1360
      %v1362 = vpop.f32.mrf.mxu0
      %1363 = vmatprep.mubr.bf16.mxu0 0
      %1364 = vmatmul.mubr.bf16.gmra.mxu0 %v1268
      %v1365 = vpop.f32.mrf.mxu0
      %v1366 = vadd.f32 0.0, %v1365
      %v1367 = vpop.f32.mrf.mxu0
      %v1368 = vpop.f32.mrf.mxu0
      %v1369 = vadd.f32 0.0, %v1368
      %v1370 = vpop.f32.mrf.mxu0
      %1371 = vmatprep.mubr.bf16.mxu0 0
      %1372 = vmatmul.mubr.bf16.gmra.mxu0 %v1269
      %v1373 = vpop.f32.mrf.mxu0
      %v1374 = vadd.f32 0.0, %v1373
      %v1375 = vpop.f32.mrf.mxu0
      %v1376 = vpop.f32.mrf.mxu0
      %v1377 = vadd.f32 0.0, %v1376
      %v1378 = vpop.f32.mrf.mxu0
      %1379 = vmatprep.mubr.bf16.mxu0 0
      %1380 = vmatmul.mubr.bf16.gmra.mxu0 %v1270
      %v1381 = vpop.f32.mrf.mxu0
      %v1382 = vadd.f32 0.0, %v1381
      %v1383 = vpop.f32.mrf.mxu0
      %v1384 = vpop.f32.mrf.mxu0
      %v1385 = vadd.f32 0.0, %v1384
      %v1386 = vpop.f32.mrf.mxu0
      %1387 = vdwg.mxu0
      %v1388 = vadd.f32 %v1106, %v1358
      %v1389 = vadd.f32 %v1107, %v1361
      %v1390 = vadd.f32 %v1108, %v1366
      %v1391 = vadd.f32 %v1109, %v1369
      %v1392 = vadd.f32 %v1110, %v1374
      %v1393 = vadd.f32 %v1111, %v1377
      %v1394 = vadd.f32 %v1112, %v1382
      %v1395 = vadd.f32 %v1113, %v1385
      %v1396 = vld [vmem:[%s943] sm:$0xe]
      %v1397 = vld [vmem:[%s943 + $0x8] sm:$0xe]
      %v1398 = vld [vmem:[%s943 + $0x10] sm:$0xe]
      %v1399 = vld [vmem:[%s943 + $0x18] sm:$0xe]
      %v1400 = vld [vmem:[%s943 + $0x20] sm:$0xe]
      %v1401 = vld [vmem:[%s943 + $0x28] sm:$0xe]
      %v1402 = vld [vmem:[%s943 + $0x30] sm:$0xe]
      %v1403 = vld [vmem:[%s943 + $0x38] sm:$0xe]
      %v1420 = vrot.slane %v1396, 5
      %v1421 = vrot.slane %v1420, 4
      %v1422 = vrot.slane %v1115, 5
      %v1423 = vsel %vm756, %v1421, %v1422
      %v1424 = vrot.slane %v1397, 5
      %v1425 = vrot.slane %v1424, 4
      %v1426 = vrot.slane %v1117, 5
      %v1427 = vsel %vm756, %v1425, %v1426
      %v1428 = vrot.slane %v1398, 5
      %v1429 = vrot.slane %v1428, 4
      %v1430 = vrot.slane %v1119, 5
      %v1431 = vsel %vm756, %v1429, %v1430
      %v1432 = vrot.slane %v1399, 5
      %v1433 = vrot.slane %v1432, 4
      %v1434 = vrot.slane %v1121, 5
      %v1435 = vsel %vm756, %v1433, %v1434
      %v1436 = vrot.slane %v1400, 5
      %v1437 = vrot.slane %v1436, 4
      %v1438 = vrot.slane %v1123, 5
      %v1439 = vsel %vm756, %v1437, %v1438
      %v1440 = vrot.slane %v1401, 5
      %v1441 = vrot.slane %v1440, 4
      %v1442 = vrot.slane %v1125, 5
      %v1443 = vsel %vm756, %v1441, %v1442
      %v1444 = vrot.slane %v1402, 5
      %v1445 = vrot.slane %v1444, 4
      %v1446 = vrot.slane %v1127, 5
      %v1447 = vsel %vm756, %v1445, %v1446
      %v1448 = vrot.slane %v1403, 5
      %v1449 = vrot.slane %v1448, 4
      %v1450 = vrot.slane %v1129, 5
      %v1451 = vsel %vm756, %v1449, %v1450
      %s1452 = scalar_lea.vmem %s1, 320
      %v1453 = vld [vmem:[%s1452] sm:$0xf]
      %v1454 = vld [vmem:[%s1452 + $0x4] sm:$0xf]
      %v1455 = vld [vmem:[%s1452 + $0x8] sm:$0xf]
      %v1456 = vld [vmem:[%s1452 + $0xc] sm:$0xf]
      %v1457 = vld [vmem:[%s1452 + $0x10] sm:$0xf]
      %v1458 = vld [vmem:[%s1452 + $0x14] sm:$0xf]
      %v1459 = vld [vmem:[%s1452 + $0x18] sm:$0xf]
      %v1460 = vld [vmem:[%s1452 + $0x1c] sm:$0xf]
      %v1461 = vld [vmem:[%s1452 + $0x20] sm:$0xf]
      %v1462 = vld [vmem:[%s1452 + $0x24] sm:$0xf]
      %v1463 = vld [vmem:[%s1452 + $0x28] sm:$0xf]
      %v1464 = vld [vmem:[%s1452 + $0x2c] sm:$0xf]
      %v1465 = vld [vmem:[%s1452 + $0x30] sm:$0xf]
      %v1466 = vld [vmem:[%s1452 + $0x34] sm:$0xf]
      %v1467 = vld [vmem:[%s1452 + $0x38] sm:$0xf]
      %v1468 = vld [vmem:[%s1452 + $0x3c] sm:$0xf]
      %v1469 = vunpack.c.l.b16 %v1423
      %v1470 = vunpack.c.l.b16 %v1427
      %v1471 = vunpack.c.l.b16 %v1431
      %v1472 = vunpack.c.l.b16 %v1435
      %v1473 = vunpack.c.l.b16 %v1439
      %v1474 = vunpack.c.l.b16 %v1443
      %v1475 = vunpack.c.l.b16 %v1447
      %v1476 = vunpack.c.l.b16 %v1451
      %v1477 = vpack.c.b16 %v1470, %v1469
      %v1478 = vpack.c.b16 %v1472, %v1471
      %v1479 = vpack.c.b16 %v1474, %v1473
      %v1480 = vpack.c.b16 %v1476, %v1475
      %v1501 = vunpack.c.l.b16 %v1453
      %v1502 = vunpack.c.l.b16 %v1454
      %v1503 = vunpack.c.l.b16 %v1455
      %v1504 = vunpack.c.l.b16 %v1456
      %v1505 = vunpack.c.l.b16 %v1457
      %v1506 = vunpack.c.l.b16 %v1458
      %v1507 = vunpack.c.l.b16 %v1459
      %v1508 = vunpack.c.l.b16 %v1460
      %v1509 = vunpack.c.l.b16 %v1461
      %v1510 = vunpack.c.l.b16 %v1462
      %v1511 = vunpack.c.l.b16 %v1463
      %v1512 = vunpack.c.l.b16 %v1464
      %v1513 = vunpack.c.l.b16 %v1465
      %v1514 = vunpack.c.l.b16 %v1466
      %v1515 = vunpack.c.l.b16 %v1467
      %v1516 = vunpack.c.l.b16 %v1468
      %v1517 = vpack.c.b16 %v1502, %v1501
      %v1518 = vpack.c.b16 %v1504, %v1503
      %v1519 = vpack.c.b16 %v1506, %v1505
      %v1520 = vpack.c.b16 %v1508, %v1507
      %v1521 = vpack.c.b16 %v1510, %v1509
      %v1522 = vpack.c.b16 %v1512, %v1511
      %v1523 = vpack.c.b16 %v1514, %v1513
      %v1524 = vpack.c.b16 %v1516, %v1515
      %1533 = vmatprep.subr.bf16.mxu0 0
      %1534 = vmatpush1.bf16.msra.mxu0 %v1524
      %1535 = vmatprep.subr.bf16.mxu0 0
      %1536 = vmatpush1.bf16.msra.mxu0 %v1523
      %1537 = vmatprep.subr.bf16.mxu0 0
      %1538 = vmatpush1.bf16.msra.mxu0 %v1522
      %1539 = vmatprep.subr.bf16.mxu0 0
      %1540 = vmatpush1.bf16.msra.mxu0 %v1521
      %1541 = vmatprep.subr.bf16.mxu0 0
      %1542 = vmatpush1.bf16.msra.mxu0 %v1520
      %1543 = vmatprep.subr.bf16.mxu0 0
      %1544 = vmatpush1.bf16.msra.mxu0 %v1519
      %1545 = vmatprep.subr.bf16.mxu0 0
      %1546 = vmatpush1.bf16.msra.mxu0 %v1518
      %1547 = vmatprep.subr.bf16.mxu0 0
      %1548 = vmatpush1.bf16.msra.mxu0 %v1517
      %1549 = vmatprep.subr.bf16.mxu0 0
      %1550 = vmatpush2.bf16.msra.mxu0 0
      %1551 = vmatprep.subr.bf16.mxu0 0
      %1552 = vmatpush2.bf16.msra.mxu0 0
      %1553 = vmatprep.subr.bf16.mxu0 0
      %1554 = vmatpush2.bf16.msra.mxu0 0
      %1555 = vmatprep.subr.bf16.mxu0 0
      %1556 = vmatpush2.bf16.msra.mxu0 0
      %1557 = vmatprep.subr.bf16.mxu0 0
      %1558 = vmatpush2.bf16.msra.mxu0 0
      %1559 = vmatprep.subr.bf16.mxu0 0
      %1560 = vmatpush2.bf16.msra.mxu0 0
      %1561 = vmatprep.subr.bf16.mxu0 0
      %1562 = vmatpush2.bf16.msra.mxu0 0
      %1563 = vmatprep.subr.bf16.mxu0 0
      %1564 = vmatpush2.bf16.msra.mxu0 0
      %1565 = vmatprep.mubr.bf16.mxu0 0
      %1566 = vmatmul.mubr.bf16.gmra.mxu0 %v1477
      %v1567 = vpop.f32.mrf.mxu0
      %v1568 = vadd.f32 0.0, %v1567
      %v1569 = vpop.f32.mrf.mxu0
      %v1570 = vpop.f32.mrf.mxu0
      %v1571 = vadd.f32 0.0, %v1570
      %v1572 = vpop.f32.mrf.mxu0
      %1573 = vmatprep.mubr.bf16.mxu0 0
      %1574 = vmatmul.mubr.bf16.gmra.mxu0 %v1478
      %v1575 = vpop.f32.mrf.mxu0
      %v1576 = vadd.f32 0.0, %v1575
      %v1577 = vpop.f32.mrf.mxu0
      %v1578 = vpop.f32.mrf.mxu0
      %v1579 = vadd.f32 0.0, %v1578
      %v1580 = vpop.f32.mrf.mxu0
      %1581 = vmatprep.mubr.bf16.mxu0 0
      %1582 = vmatmul.mubr.bf16.gmra.mxu0 %v1479
      %v1583 = vpop.f32.mrf.mxu0
      %v1584 = vadd.f32 0.0, %v1583
      %v1585 = vpop.f32.mrf.mxu0
      %v1586 = vpop.f32.mrf.mxu0
      %v1587 = vadd.f32 0.0, %v1586
      %v1588 = vpop.f32.mrf.mxu0
      %1589 = vmatprep.mubr.bf16.mxu0 0
      %1590 = vmatmul.mubr.bf16.gmra.mxu0 %v1480
      %v1591 = vpop.f32.mrf.mxu0
      %v1592 = vadd.f32 0.0, %v1591
      %v1593 = vpop.f32.mrf.mxu0
      %v1594 = vpop.f32.mrf.mxu0
      %v1595 = vadd.f32 0.0, %v1594
      %v1596 = vpop.f32.mrf.mxu0
      %1597 = vdwg.mxu0
      %v1598 = vadd.f32 %v1388, %v1568
      %v1599 = vadd.f32 %v1389, %v1571
      %v1600 = vadd.f32 %v1390, %v1576
      %v1601 = vadd.f32 %v1391, %v1579
      %v1602 = vadd.f32 %v1392, %v1584
      %v1603 = vadd.f32 %v1393, %v1587
      %v1604 = vadd.f32 %v1394, %v1592
      %v1605 = vadd.f32 %v1395, %v1595
      %s1606 = scalar_lea.vmem %s288, 16
      %v1607 = vld [vmem:[%s1606] sm:$0xf]
      %v1608 = vld [vmem:[%s1606 + $0x8] sm:$0xf]
      %v1609 = vld [vmem:[%s1606 + $0x10] sm:$0xf]
      %v1610 = vld [vmem:[%s1606 + $0x18] sm:$0xf]
      %v1611 = vld [vmem:[%s1606 + $0x20] sm:$0xf]
      %v1612 = vld [vmem:[%s1606 + $0x28] sm:$0xf]
      %v1613 = vld [vmem:[%s1606 + $0x30] sm:$0xf]
      %v1614 = vld [vmem:[%s1606 + $0x38] sm:$0xf]
      %s1615 = scalar_lea.vmem %s1, 384
      %v1616 = vld [vmem:[%s1615] sm:$0xf]
      %v1617 = vld [vmem:[%s1615 + $0x4] sm:$0xf]
      %v1618 = vld [vmem:[%s1615 + $0x8] sm:$0xf]
      %v1619 = vld [vmem:[%s1615 + $0xc] sm:$0xf]
      %v1620 = vld [vmem:[%s1615 + $0x10] sm:$0xf]
      %v1621 = vld [vmem:[%s1615 + $0x14] sm:$0xf]
      %v1622 = vld [vmem:[%s1615 + $0x18] sm:$0xf]
      %v1623 = vld [vmem:[%s1615 + $0x1c] sm:$0xf]
      %v1624 = vld [vmem:[%s1615 + $0x20] sm:$0xf]
      %v1625 = vld [vmem:[%s1615 + $0x24] sm:$0xf]
      %v1626 = vld [vmem:[%s1615 + $0x28] sm:$0xf]
      %v1627 = vld [vmem:[%s1615 + $0x2c] sm:$0xf]
      %v1628 = vld [vmem:[%s1615 + $0x30] sm:$0xf]
      %v1629 = vld [vmem:[%s1615 + $0x34] sm:$0xf]
      %v1630 = vld [vmem:[%s1615 + $0x38] sm:$0xf]
      %v1631 = vld [vmem:[%s1615 + $0x3c] sm:$0xf]
      %v1640 = vunpack.c.l.b16 %v1607
      %v1641 = vunpack.c.l.b16 %v1608
      %v1642 = vunpack.c.l.b16 %v1609
      %v1643 = vunpack.c.l.b16 %v1610
      %v1644 = vunpack.c.l.b16 %v1611
      %v1645 = vunpack.c.l.b16 %v1612
      %v1646 = vunpack.c.l.b16 %v1613
      %v1647 = vunpack.c.l.b16 %v1614
      %v1648 = vpack.c.b16 %v1641, %v1640
      %v1649 = vpack.c.b16 %v1643, %v1642
      %v1650 = vpack.c.b16 %v1645, %v1644
      %v1651 = vpack.c.b16 %v1647, %v1646
      %v1672 = vunpack.c.l.b16 %v1616
      %v1673 = vunpack.c.l.b16 %v1617
      %v1674 = vunpack.c.l.b16 %v1618
      %v1675 = vunpack.c.l.b16 %v1619
      %v1676 = vunpack.c.l.b16 %v1620
      %v1677 = vunpack.c.l.b16 %v1621
      %v1678 = vunpack.c.l.b16 %v1622
      %v1679 = vunpack.c.l.b16 %v1623
      %v1680 = vunpack.c.l.b16 %v1624
      %v1681 = vunpack.c.l.b16 %v1625
      %v1682 = vunpack.c.l.b16 %v1626
      %v1683 = vunpack.c.l.b16 %v1627
      %v1684 = vunpack.c.l.b16 %v1628
      %v1685 = vunpack.c.l.b16 %v1629
      %v1686 = vunpack.c.l.b16 %v1630
      %v1687 = vunpack.c.l.b16 %v1631
      %v1688 = vpack.c.b16 %v1673, %v1672
      %v1689 = vpack.c.b16 %v1675, %v1674
      %v1690 = vpack.c.b16 %v1677, %v1676
      %v1691 = vpack.c.b16 %v1679, %v1678
      %v1692 = vpack.c.b16 %v1681, %v1680
      %v1693 = vpack.c.b16 %v1683, %v1682
      %v1694 = vpack.c.b16 %v1685, %v1684
      %v1695 = vpack.c.b16 %v1687, %v1686
      %1704 = vmatprep.subr.bf16.mxu0 0
      %1705 = vmatpush1.bf16.msra.mxu0 %v1695
      %1706 = vmatprep.subr.bf16.mxu0 0
      %1707 = vmatpush1.bf16.msra.mxu0 %v1694
      %1708 = vmatprep.subr.bf16.mxu0 0
      %1709 = vmatpush1.bf16.msra.mxu0 %v1693
      %1710 = vmatprep.subr.bf16.mxu0 0
      %1711 = vmatpush1.bf16.msra.mxu0 %v1692
      %1712 = vmatprep.subr.bf16.mxu0 0
      %1713 = vmatpush1.bf16.msra.mxu0 %v1691
      %1714 = vmatprep.subr.bf16.mxu0 0
      %1715 = vmatpush1.bf16.msra.mxu0 %v1690
      %1716 = vmatprep.subr.bf16.mxu0 0
      %1717 = vmatpush1.bf16.msra.mxu0 %v1689
      %1718 = vmatprep.subr.bf16.mxu0 0
      %1719 = vmatpush1.bf16.msra.mxu0 %v1688
      %1720 = vmatprep.subr.bf16.mxu0 0
      %1721 = vmatpush2.bf16.msra.mxu0 0
      %1722 = vmatprep.subr.bf16.mxu0 0
      %1723 = vmatpush2.bf16.msra.mxu0 0
      %1724 = vmatprep.subr.bf16.mxu0 0
      %1725 = vmatpush2.bf16.msra.mxu0 0
      %1726 = vmatprep.subr.bf16.mxu0 0
      %1727 = vmatpush2.bf16.msra.mxu0 0
      %1728 = vmatprep.subr.bf16.mxu0 0
      %1729 = vmatpush2.bf16.msra.mxu0 0
      %1730 = vmatprep.subr.bf16.mxu0 0
      %1731 = vmatpush2.bf16.msra.mxu0 0
      %1732 = vmatprep.subr.bf16.mxu0 0
      %1733 = vmatpush2.bf16.msra.mxu0 0
      %1734 = vmatprep.subr.bf16.mxu0 0
      %1735 = vmatpush2.bf16.msra.mxu0 0
      %1736 = vmatprep.mubr.bf16.mxu0 0
      %1737 = vmatmul.mubr.bf16.gmra.mxu0 %v1648
      %v1738 = vpop.f32.mrf.mxu0
      %v1739 = vadd.f32 0.0, %v1738
      %v1740 = vpop.f32.mrf.mxu0
      %v1741 = vpop.f32.mrf.mxu0
      %v1742 = vadd.f32 0.0, %v1741
      %v1743 = vpop.f32.mrf.mxu0
      %1744 = vmatprep.mubr.bf16.mxu0 0
      %1745 = vmatmul.mubr.bf16.gmra.mxu0 %v1649
      %v1746 = vpop.f32.mrf.mxu0
      %v1747 = vadd.f32 0.0, %v1746
      %v1748 = vpop.f32.mrf.mxu0
      %v1749 = vpop.f32.mrf.mxu0
      %v1750 = vadd.f32 0.0, %v1749
      %v1751 = vpop.f32.mrf.mxu0
      %1752 = vmatprep.mubr.bf16.mxu0 0
      %1753 = vmatmul.mubr.bf16.gmra.mxu0 %v1650
      %v1754 = vpop.f32.mrf.mxu0
      %v1755 = vadd.f32 0.0, %v1754
      %v1756 = vpop.f32.mrf.mxu0
      %v1757 = vpop.f32.mrf.mxu0
      %v1758 = vadd.f32 0.0, %v1757
      %v1759 = vpop.f32.mrf.mxu0
      %1760 = vmatprep.mubr.bf16.mxu0 0
      %1761 = vmatmul.mubr.bf16.gmra.mxu0 %v1651
      %v1762 = vpop.f32.mrf.mxu0
      %v1763 = vadd.f32 0.0, %v1762
      %v1764 = vpop.f32.mrf.mxu0
      %v1765 = vpop.f32.mrf.mxu0
      %v1766 = vadd.f32 0.0, %v1765
      %v1767 = vpop.f32.mrf.mxu0
      %1768 = vdwg.mxu0
      %v1769 = vadd.f32 %v1598, %v1739
      %v1770 = vadd.f32 %v1599, %v1742
      %v1771 = vadd.f32 %v1600, %v1747
      %v1772 = vadd.f32 %v1601, %v1750
      %v1773 = vadd.f32 %v1602, %v1755
      %v1774 = vadd.f32 %v1603, %v1758
      %v1775 = vadd.f32 %v1604, %v1763
      %v1776 = vadd.f32 %v1605, %v1766
      %v1777 = vld [vmem:[%s1606] sm:$0xf]
      %v1778 = vld [vmem:[%s1606 + $0x4] sm:$0x1]
      %v1779 = vld [vmem:[%s1606 + $0x8] sm:$0xf]
      %v1780 = vld [vmem:[%s1606 + $0xc] sm:$0x1]
      %v1781 = vld [vmem:[%s1606 + $0x10] sm:$0xf]
      %v1782 = vld [vmem:[%s1606 + $0x14] sm:$0x1]
      %v1783 = vld [vmem:[%s1606 + $0x18] sm:$0xf]
      %v1784 = vld [vmem:[%s1606 + $0x1c] sm:$0x1]
      %v1785 = vld [vmem:[%s1606 + $0x20] sm:$0xf]
      %v1786 = vld [vmem:[%s1606 + $0x24] sm:$0x1]
      %v1787 = vld [vmem:[%s1606 + $0x28] sm:$0xf]
      %v1788 = vld [vmem:[%s1606 + $0x2c] sm:$0x1]
      %v1789 = vld [vmem:[%s1606 + $0x30] sm:$0xf]
      %v1790 = vld [vmem:[%s1606 + $0x34] sm:$0x1]
      %v1791 = vld [vmem:[%s1606 + $0x38] sm:$0xf]
      %v1792 = vld [vmem:[%s1606 + $0x3c] sm:$0x1]
      %v1794 = vshrl.u32 %v1777, 16
      %v1796 = vrot.slane %v1794, 4
      %v1797 = vshll.u32 %v1777, 16
      %v1799 = vrot.slane %v1797, 5
      %v1800 = vor.u32 %v1796, %v1799
      %v1801 = vrot.slane %v1800, 4
      %v1803 = vshll.u32 %v1778, 16
      %v1805 = vrot.slane %v1803, 5
      %v1806 = vsel %vm334, %v1801, %v1805
      %v1808 = vshrl.u32 %v1779, 16
      %v1810 = vrot.slane %v1808, 4
      %v1811 = vshll.u32 %v1779, 16
      %v1813 = vrot.slane %v1811, 5
      %v1814 = vor.u32 %v1810, %v1813
      %v1815 = vrot.slane %v1814, 4
      %v1817 = vshll.u32 %v1780, 16
      %v1819 = vrot.slane %v1817, 5
      %v1820 = vsel %vm334, %v1815, %v1819
      %v1822 = vshrl.u32 %v1781, 16
      %v1824 = vrot.slane %v1822, 4
      %v1825 = vshll.u32 %v1781, 16
      %v1827 = vrot.slane %v1825, 5
      %v1828 = vor.u32 %v1824, %v1827
      %v1829 = vrot.slane %v1828, 4
      %v1831 = vshll.u32 %v1782, 16
      %v1833 = vrot.slane %v1831, 5
      %v1834 = vsel %vm334, %v1829, %v1833
      %v1836 = vshrl.u32 %v1783, 16
      %v1838 = vrot.slane %v1836, 4
      %v1839 = vshll.u32 %v1783, 16
      %v1841 = vrot.slane %v1839, 5
      %v1842 = vor.u32 %v1838, %v1841
      %v1843 = vrot.slane %v1842, 4
      %v1845 = vshll.u32 %v1784, 16
      %v1847 = vrot.slane %v1845, 5
      %v1848 = vsel %vm334, %v1843, %v1847
      %v1850 = vshrl.u32 %v1785, 16
      %v1852 = vrot.slane %v1850, 4
      %v1853 = vshll.u32 %v1785, 16
      %v1855 = vrot.slane %v1853, 5
      %v1856 = vor.u32 %v1852, %v1855
      %v1857 = vrot.slane %v1856, 4
      %v1859 = vshll.u32 %v1786, 16
      %v1861 = vrot.slane %v1859, 5
      %v1862 = vsel %vm334, %v1857, %v1861
      %v1864 = vshrl.u32 %v1787, 16
      %v1866 = vrot.slane %v1864, 4
      %v1867 = vshll.u32 %v1787, 16
      %v1869 = vrot.slane %v1867, 5
      %v1870 = vor.u32 %v1866, %v1869
      %v1871 = vrot.slane %v1870, 4
      %v1873 = vshll.u32 %v1788, 16
      %v1875 = vrot.slane %v1873, 5
      %v1876 = vsel %vm334, %v1871, %v1875
      %v1878 = vshrl.u32 %v1789, 16
      %v1880 = vrot.slane %v1878, 4
      %v1881 = vshll.u32 %v1789, 16
      %v1883 = vrot.slane %v1881, 5
      %v1884 = vor.u32 %v1880, %v1883
      %v1885 = vrot.slane %v1884, 4
      %v1887 = vshll.u32 %v1790, 16
      %v1889 = vrot.slane %v1887, 5
      %v1890 = vsel %vm334, %v1885, %v1889
      %v1892 = vshrl.u32 %v1791, 16
      %v1894 = vrot.slane %v1892, 4
      %v1895 = vshll.u32 %v1791, 16
      %v1897 = vrot.slane %v1895, 5
      %v1898 = vor.u32 %v1894, %v1897
      %v1899 = vrot.slane %v1898, 4
      %v1901 = vshll.u32 %v1792, 16
      %v1903 = vrot.slane %v1901, 5
      %v1904 = vsel %vm334, %v1899, %v1903
      %s1905 = scalar_lea.vmem %s1, 448
      %v1906 = vld [vmem:[%s1905] sm:$0xf]
      %v1907 = vld [vmem:[%s1905 + $0x4] sm:$0xf]
      %v1908 = vld [vmem:[%s1905 + $0x8] sm:$0xf]
      %v1909 = vld [vmem:[%s1905 + $0xc] sm:$0xf]
      %v1910 = vld [vmem:[%s1905 + $0x10] sm:$0xf]
      %v1911 = vld [vmem:[%s1905 + $0x14] sm:$0xf]
      %v1912 = vld [vmem:[%s1905 + $0x18] sm:$0xf]
      %v1913 = vld [vmem:[%s1905 + $0x1c] sm:$0xf]
      %v1914 = vld [vmem:[%s1905 + $0x20] sm:$0xf]
      %v1915 = vld [vmem:[%s1905 + $0x24] sm:$0xf]
      %v1916 = vld [vmem:[%s1905 + $0x28] sm:$0xf]
      %v1917 = vld [vmem:[%s1905 + $0x2c] sm:$0xf]
      %v1918 = vld [vmem:[%s1905 + $0x30] sm:$0xf]
      %v1919 = vld [vmem:[%s1905 + $0x34] sm:$0xf]
      %v1920 = vld [vmem:[%s1905 + $0x38] sm:$0xf]
      %v1921 = vld [vmem:[%s1905 + $0x3c] sm:$0xf]
      %v1922 = vunpack.c.l.b16 %v1806
      %v1923 = vunpack.c.l.b16 %v1820
      %v1924 = vunpack.c.l.b16 %v1834
      %v1925 = vunpack.c.l.b16 %v1848
      %v1926 = vunpack.c.l.b16 %v1862
      %v1927 = vunpack.c.l.b16 %v1876
      %v1928 = vunpack.c.l.b16 %v1890
      %v1929 = vunpack.c.l.b16 %v1904
      %v1930 = vpack.c.b16 %v1923, %v1922
      %v1931 = vpack.c.b16 %v1925, %v1924
      %v1932 = vpack.c.b16 %v1927, %v1926
      %v1933 = vpack.c.b16 %v1929, %v1928
      %v1954 = vunpack.c.l.b16 %v1906
      %v1955 = vunpack.c.l.b16 %v1907
      %v1956 = vunpack.c.l.b16 %v1908
      %v1957 = vunpack.c.l.b16 %v1909
      %v1958 = vunpack.c.l.b16 %v1910
      %v1959 = vunpack.c.l.b16 %v1911
      %v1960 = vunpack.c.l.b16 %v1912
      %v1961 = vunpack.c.l.b16 %v1913
      %v1962 = vunpack.c.l.b16 %v1914
      %v1963 = vunpack.c.l.b16 %v1915
      %v1964 = vunpack.c.l.b16 %v1916
      %v1965 = vunpack.c.l.b16 %v1917
      %v1966 = vunpack.c.l.b16 %v1918
      %v1967 = vunpack.c.l.b16 %v1919
      %v1968 = vunpack.c.l.b16 %v1920
      %v1969 = vunpack.c.l.b16 %v1921
      %v1970 = vpack.c.b16 %v1955, %v1954
      %v1971 = vpack.c.b16 %v1957, %v1956
      %v1972 = vpack.c.b16 %v1959, %v1958
      %v1973 = vpack.c.b16 %v1961, %v1960
      %v1974 = vpack.c.b16 %v1963, %v1962
      %v1975 = vpack.c.b16 %v1965, %v1964
      %v1976 = vpack.c.b16 %v1967, %v1966
      %v1977 = vpack.c.b16 %v1969, %v1968
      %1986 = vmatprep.subr.bf16.mxu0 0
      %1987 = vmatpush1.bf16.msra.mxu0 %v1977
      %1988 = vmatprep.subr.bf16.mxu0 0
      %1989 = vmatpush1.bf16.msra.mxu0 %v1976
      %1990 = vmatprep.subr.bf16.mxu0 0
      %1991 = vmatpush1.bf16.msra.mxu0 %v1975
      %1992 = vmatprep.subr.bf16.mxu0 0
      %1993 = vmatpush1.bf16.msra.mxu0 %v1974
      %1994 = vmatprep.subr.bf16.mxu0 0
      %1995 = vmatpush1.bf16.msra.mxu0 %v1973
      %1996 = vmatprep.subr.bf16.mxu0 0
      %1997 = vmatpush1.bf16.msra.mxu0 %v1972
      %1998 = vmatprep.subr.bf16.mxu0 0
      %1999 = vmatpush1.bf16.msra.mxu0 %v1971
      %2000 = vmatprep.subr.bf16.mxu0 0
      %2001 = vmatpush1.bf16.msra.mxu0 %v1970
      %2002 = vmatprep.subr.bf16.mxu0 0
      %2003 = vmatpush2.bf16.msra.mxu0 0
      %2004 = vmatprep.subr.bf16.mxu0 0
      %2005 = vmatpush2.bf16.msra.mxu0 0
      %2006 = vmatprep.subr.bf16.mxu0 0
      %2007 = vmatpush2.bf16.msra.mxu0 0
      %2008 = vmatprep.subr.bf16.mxu0 0
      %2009 = vmatpush2.bf16.msra.mxu0 0
      %2010 = vmatprep.subr.bf16.mxu0 0
      %2011 = vmatpush2.bf16.msra.mxu0 0
      %2012 = vmatprep.subr.bf16.mxu0 0
      %2013 = vmatpush2.bf16.msra.mxu0 0
      %2014 = vmatprep.subr.bf16.mxu0 0
      %2015 = vmatpush2.bf16.msra.mxu0 0
      %2016 = vmatprep.subr.bf16.mxu0 0
      %2017 = vmatpush2.bf16.msra.mxu0 0
      %2018 = vmatprep.mubr.bf16.mxu0 0
      %2019 = vmatmul.mubr.bf16.gmra.mxu0 %v1930
      %v2020 = vpop.f32.mrf.mxu0
      %v2021 = vadd.f32 0.0, %v2020
      %v2022 = vpop.f32.mrf.mxu0
      %v2023 = vpop.f32.mrf.mxu0
      %v2024 = vadd.f32 0.0, %v2023
      %v2025 = vpop.f32.mrf.mxu0
      %2026 = vmatprep.mubr.bf16.mxu0 0
      %2027 = vmatmul.mubr.bf16.gmra.mxu0 %v1931
      %v2028 = vpop.f32.mrf.mxu0
      %v2029 = vadd.f32 0.0, %v2028
      %v2030 = vpop.f32.mrf.mxu0
      %v2031 = vpop.f32.mrf.mxu0
      %v2032 = vadd.f32 0.0, %v2031
      %v2033 = vpop.f32.mrf.mxu0
      %2034 = vmatprep.mubr.bf16.mxu0 0
      %2035 = vmatmul.mubr.bf16.gmra.mxu0 %v1932
      %v2036 = vpop.f32.mrf.mxu0
      %v2037 = vadd.f32 0.0, %v2036
      %v2038 = vpop.f32.mrf.mxu0
      %v2039 = vpop.f32.mrf.mxu0
      %v2040 = vadd.f32 0.0, %v2039
      %v2041 = vpop.f32.mrf.mxu0
      %2042 = vmatprep.mubr.bf16.mxu0 0
      %2043 = vmatmul.mubr.bf16.gmra.mxu0 %v1933
      %v2044 = vpop.f32.mrf.mxu0
      %v2045 = vadd.f32 0.0, %v2044
      %v2046 = vpop.f32.mrf.mxu0
      %v2047 = vpop.f32.mrf.mxu0
      %v2048 = vadd.f32 0.0, %v2047
      %v2049 = vpop.f32.mrf.mxu0
      %2050 = vdwg.mxu0
      %v2051 = vadd.f32 %v1769, %v2021
      %v2052 = vadd.f32 %v1770, %v2024
      %v2053 = vadd.f32 %v1771, %v2029
      %v2054 = vadd.f32 %v1772, %v2032
      %v2055 = vadd.f32 %v1773, %v2037
      %v2056 = vadd.f32 %v1774, %v2040
      %v2057 = vadd.f32 %v1775, %v2045
      %v2058 = vadd.f32 %v1776, %v2048
      %v2059 = vld [vmem:[%s1606] sm:$0xe]
      %v2060 = vld [vmem:[%s1606 + $0x8] sm:$0xe]
      %v2061 = vld [vmem:[%s1606 + $0x10] sm:$0xe]
      %v2062 = vld [vmem:[%s1606 + $0x18] sm:$0xe]
      %v2063 = vld [vmem:[%s1606 + $0x20] sm:$0xe]
      %v2064 = vld [vmem:[%s1606 + $0x28] sm:$0xe]
      %v2065 = vld [vmem:[%s1606 + $0x30] sm:$0xe]
      %v2066 = vld [vmem:[%s1606 + $0x38] sm:$0xe]
      %v2083 = vrot.slane %v2059, 5
      %v2084 = vrot.slane %v2083, 4
      %v2085 = vrot.slane %v1778, 5
      %v2086 = vsel %vm756, %v2084, %v2085
      %v2087 = vrot.slane %v2060, 5
      %v2088 = vrot.slane %v2087, 4
      %v2089 = vrot.slane %v1780, 5
      %v2090 = vsel %vm756, %v2088, %v2089
      %v2091 = vrot.slane %v2061, 5
      %v2092 = vrot.slane %v2091, 4
      %v2093 = vrot.slane %v1782, 5
      %v2094 = vsel %vm756, %v2092, %v2093
      %v2095 = vrot.slane %v2062, 5
      %v2096 = vrot.slane %v2095, 4
      %v2097 = vrot.slane %v1784, 5
      %v2098 = vsel %vm756, %v2096, %v2097
      %v2099 = vrot.slane %v2063, 5
      %v2100 = vrot.slane %v2099, 4
      %v2101 = vrot.slane %v1786, 5
      %v2102 = vsel %vm756, %v2100, %v2101
      %v2103 = vrot.slane %v2064, 5
      %v2104 = vrot.slane %v2103, 4
      %v2105 = vrot.slane %v1788, 5
      %v2106 = vsel %vm756, %v2104, %v2105
      %v2107 = vrot.slane %v2065, 5
      %v2108 = vrot.slane %v2107, 4
      %v2109 = vrot.slane %v1790, 5
      %v2110 = vsel %vm756, %v2108, %v2109
      %v2111 = vrot.slane %v2066, 5
      %v2112 = vrot.slane %v2111, 4
      %v2113 = vrot.slane %v1792, 5
      %v2114 = vsel %vm756, %v2112, %v2113
      %s2115 = scalar_lea.vmem %s1, 512
      %v2116 = vld [vmem:[%s2115] sm:$0xf]
      %v2117 = vld [vmem:[%s2115 + $0x4] sm:$0xf]
      %v2118 = vld [vmem:[%s2115 + $0x8] sm:$0xf]
      %v2119 = vld [vmem:[%s2115 + $0xc] sm:$0xf]
      %v2120 = vld [vmem:[%s2115 + $0x10] sm:$0xf]
      %v2121 = vld [vmem:[%s2115 + $0x14] sm:$0xf]
      %v2122 = vld [vmem:[%s2115 + $0x18] sm:$0xf]
      %v2123 = vld [vmem:[%s2115 + $0x1c] sm:$0xf]
      %v2124 = vld [vmem:[%s2115 + $0x20] sm:$0xf]
      %v2125 = vld [vmem:[%s2115 + $0x24] sm:$0xf]
      %v2126 = vld [vmem:[%s2115 + $0x28] sm:$0xf]
      %v2127 = vld [vmem:[%s2115 + $0x2c] sm:$0xf]
      %v2128 = vld [vmem:[%s2115 + $0x30] sm:$0xf]
      %v2129 = vld [vmem:[%s2115 + $0x34] sm:$0xf]
      %v2130 = vld [vmem:[%s2115 + $0x38] sm:$0xf]
      %v2131 = vld [vmem:[%s2115 + $0x3c] sm:$0xf]
      %v2132 = vunpack.c.l.b16 %v2086
      %v2133 = vunpack.c.l.b16 %v2090
      %v2134 = vunpack.c.l.b16 %v2094
      %v2135 = vunpack.c.l.b16 %v2098
      %v2136 = vunpack.c.l.b16 %v2102
      %v2137 = vunpack.c.l.b16 %v2106
      %v2138 = vunpack.c.l.b16 %v2110
      %v2139 = vunpack.c.l.b16 %v2114
      %v2140 = vpack.c.b16 %v2133, %v2132
      %v2141 = vpack.c.b16 %v2135, %v2134
      %v2142 = vpack.c.b16 %v2137, %v2136
      %v2143 = vpack.c.b16 %v2139, %v2138
      %v2164 = vunpack.c.l.b16 %v2116
      %v2165 = vunpack.c.l.b16 %v2117
      %v2166 = vunpack.c.l.b16 %v2118
      %v2167 = vunpack.c.l.b16 %v2119
      %v2168 = vunpack.c.l.b16 %v2120
      %v2169 = vunpack.c.l.b16 %v2121
      %v2170 = vunpack.c.l.b16 %v2122
      %v2171 = vunpack.c.l.b16 %v2123
      %v2172 = vunpack.c.l.b16 %v2124
      %v2173 = vunpack.c.l.b16 %v2125
      %v2174 = vunpack.c.l.b16 %v2126
      %v2175 = vunpack.c.l.b16 %v2127
      %v2176 = vunpack.c.l.b16 %v2128
      %v2177 = vunpack.c.l.b16 %v2129
      %v2178 = vunpack.c.l.b16 %v2130
      %v2179 = vunpack.c.l.b16 %v2131
      %v2180 = vpack.c.b16 %v2165, %v2164
      %v2181 = vpack.c.b16 %v2167, %v2166
      %v2182 = vpack.c.b16 %v2169, %v2168
      %v2183 = vpack.c.b16 %v2171, %v2170
      %v2184 = vpack.c.b16 %v2173, %v2172
      %v2185 = vpack.c.b16 %v2175, %v2174
      %v2186 = vpack.c.b16 %v2177, %v2176
      %v2187 = vpack.c.b16 %v2179, %v2178
      %2196 = vmatprep.subr.bf16.mxu0 0
      %2197 = vmatpush1.bf16.msra.mxu0 %v2187
      %2198 = vmatprep.subr.bf16.mxu0 0
      %2199 = vmatpush1.bf16.msra.mxu0 %v2186
      %2200 = vmatprep.subr.bf16.mxu0 0
      %2201 = vmatpush1.bf16.msra.mxu0 %v2185
      %2202 = vmatprep.subr.bf16.mxu0 0
      %2203 = vmatpush1.bf16.msra.mxu0 %v2184
      %2204 = vmatprep.subr.bf16.mxu0 0
      %2205 = vmatpush1.bf16.msra.mxu0 %v2183
      %2206 = vmatprep.subr.bf16.mxu0 0
      %2207 = vmatpush1.bf16.msra.mxu0 %v2182
      %2208 = vmatprep.subr.bf16.mxu0 0
      %2209 = vmatpush1.bf16.msra.mxu0 %v2181
      %2210 = vmatprep.subr.bf16.mxu0 0
      %2211 = vmatpush1.bf16.msra.mxu0 %v2180
      %2212 = vmatprep.subr.bf16.mxu0 0
      %2213 = vmatpush2.bf16.msra.mxu0 0
      %2214 = vmatprep.subr.bf16.mxu0 0
      %2215 = vmatpush2.bf16.msra.mxu0 0
      %2216 = vmatprep.subr.bf16.mxu0 0
      %2217 = vmatpush2.bf16.msra.mxu0 0
      %2218 = vmatprep.subr.bf16.mxu0 0
      %2219 = vmatpush2.bf16.msra.mxu0 0
      %2220 = vmatprep.subr.bf16.mxu0 0
      %2221 = vmatpush2.bf16.msra.mxu0 0
      %2222 = vmatprep.subr.bf16.mxu0 0
      %2223 = vmatpush2.bf16.msra.mxu0 0
      %2224 = vmatprep.subr.bf16.mxu0 0
      %2225 = vmatpush2.bf16.msra.mxu0 0
      %2226 = vmatprep.subr.bf16.mxu0 0
      %2227 = vmatpush2.bf16.msra.mxu0 0
      %2228 = vmatprep.mubr.bf16.mxu0 0
      %2229 = vmatmul.mubr.bf16.gmra.mxu0 %v2140
      %v2230 = vpop.f32.mrf.mxu0
      %v2231 = vadd.f32 0.0, %v2230
      %v2232 = vpop.f32.mrf.mxu0
      %v2233 = vpop.f32.mrf.mxu0
      %v2234 = vadd.f32 0.0, %v2233
      %v2235 = vpop.f32.mrf.mxu0
      %2236 = vmatprep.mubr.bf16.mxu0 0
      %2237 = vmatmul.mubr.bf16.gmra.mxu0 %v2141
      %v2238 = vpop.f32.mrf.mxu0
      %v2239 = vadd.f32 0.0, %v2238
      %v2240 = vpop.f32.mrf.mxu0
      %v2241 = vpop.f32.mrf.mxu0
      %v2242 = vadd.f32 0.0, %v2241
      %v2243 = vpop.f32.mrf.mxu0
      %2244 = vmatprep.mubr.bf16.mxu0 0
      %2245 = vmatmul.mubr.bf16.gmra.mxu0 %v2142
      %v2246 = vpop.f32.mrf.mxu0
      %v2247 = vadd.f32 0.0, %v2246
      %v2248 = vpop.f32.mrf.mxu0
      %v2249 = vpop.f32.mrf.mxu0
      %v2250 = vadd.f32 0.0, %v2249
      %v2251 = vpop.f32.mrf.mxu0
      %2252 = vmatprep.mubr.bf16.mxu0 0
      %2253 = vmatmul.mubr.bf16.gmra.mxu0 %v2143
      %v2254 = vpop.f32.mrf.mxu0
      %v2255 = vadd.f32 0.0, %v2254
      %v2256 = vpop.f32.mrf.mxu0
      %v2257 = vpop.f32.mrf.mxu0
      %v2258 = vadd.f32 0.0, %v2257
      %v2259 = vpop.f32.mrf.mxu0
      %2260 = vdwg.mxu0
      %v2261 = vadd.f32 %v2051, %v2231
      %v2262 = vadd.f32 %v2052, %v2234
      %v2263 = vadd.f32 %v2053, %v2239
      %v2264 = vadd.f32 %v2054, %v2242
      %v2265 = vadd.f32 %v2055, %v2247
      %v2266 = vadd.f32 %v2056, %v2250
      %v2267 = vadd.f32 %v2057, %v2255
      %v2268 = vadd.f32 %v2058, %v2258
      %v2269 = vld [vmem:[%s2] sm:$0x1]
      %v2271 = vlaneseq
      %v2272 = vshrl.u32 %v2271, 7
      %v2273 = vsub.s32 0, %v2272
      %v2274 = vrot.slane %v2269, %v2273
      %v2276 = vmul.f32 %v2261, %v2274
      %v2277 = vmul.f32 %v2262, %v2274
      %v2278 = vmul.f32 %v2263, %v2274
      %v2279 = vmul.f32 %v2264, %v2274
      %v2280 = vmul.f32 %v2265, %v2274
      %v2281 = vmul.f32 %v2266, %v2274
      %v2282 = vmul.f32 %v2267, %v2274
      %v2283 = vmul.f32 %v2268, %v2274
      %v2284 = vld [vmem:[%s3] sm:$0x1]
      %v2286 = vlaneseq
      %v2287 = vshrl.u32 %v2286, 7
      %v2288 = vsub.s32 0, %v2287
      %v2289 = vrot.slane %v2284, %v2288
      %v2291 = vadd.f32 %v2276, %v2289
      %v2292 = vadd.f32 %v2277, %v2289
      %v2293 = vadd.f32 %v2278, %v2289
      %v2294 = vadd.f32 %v2279, %v2289
      %v2295 = vadd.f32 %v2280, %v2289
      %v2296 = vadd.f32 %v2281, %v2289
      %v2297 = vadd.f32 %v2282, %v2289
      %v2298 = vadd.f32 %v2283, %v2289
      %v2299 = vmax.f32 %v2291, 0.0
      %v2300 = vmax.f32 %v2292, 0.0
      %v2301 = vmax.f32 %v2293, 0.0
      %v2302 = vmax.f32 %v2294, 0.0
      %v2303 = vmax.f32 %v2295, 0.0
      %v2304 = vmax.f32 %v2296, 0.0
      %v2305 = vmax.f32 %v2297, 0.0
      %v2306 = vmax.f32 %v2298, 0.0
      %v2307 = vld [vmem:[%s293] sm:$0xf]
      %v2308 = vld [vmem:[%s293 + $0x4] sm:$0xf]
      %v2309 = vld [vmem:[%s293 + $0x8] sm:$0xf]
      %v2310 = vld [vmem:[%s293 + $0xc] sm:$0xf]
      %v2311 = vld [vmem:[%s293 + $0x10] sm:$0xf]
      %v2312 = vld [vmem:[%s293 + $0x14] sm:$0xf]
      %v2313 = vld [vmem:[%s293 + $0x18] sm:$0xf]
      %v2314 = vld [vmem:[%s293 + $0x1c] sm:$0xf]
      %v2315 = vld [vmem:[%s5] sm:$0x3]
      %v2316 = vld [vmem:[%s6] sm:$0x1]
      %v2318 = vlaneseq
      %v2319 = vshrl.u32 %v2318, 7
      %v2320 = vsub.s32 0, %v2319
      %v2321 = vrot.slane %v2316, %v2320
      %v2331 = vunpack.c.l.b16 %v2307
      %v2332 = vunpack.c.l.b16 %v2308
      %v2333 = vunpack.c.l.b16 %v2309
      %v2334 = vunpack.c.l.b16 %v2310
      %v2335 = vunpack.c.l.b16 %v2311
      %v2336 = vunpack.c.l.b16 %v2312
      %v2337 = vunpack.c.l.b16 %v2313
      %v2338 = vunpack.c.l.b16 %v2314
      %v2339 = vpack.c.b16 %v2332, %v2331
      %v2340 = vpack.c.b16 %v2334, %v2333
      %v2341 = vpack.c.b16 %v2336, %v2335
      %v2342 = vpack.c.b16 %v2338, %v2337
      %vm2343 = vcmask 31744
      %v2345 = vsel %vm2343, %v2339, 0
      %v2348 = vsel %vm2343, %v2340, 0
      %v2351 = vsel %vm2343, %v2341, 0
      %v2354 = vsel %vm2343, %v2342, 0
      %vm2356 = vcmask 1041408
      %v2358 = vsel %vm2356, %v2315, 0
      %2360 = vmatprep.subr.bf16.mxu0 0
      %2361 = vmatpush1.bf16.msra.mxu0 0
      %2362 = vmatprep.subr.bf16.mxu0 0
      %2363 = vmatpush1.bf16.msra.mxu0 0
      %2364 = vmatprep.subr.bf16.mxu0 0
      %2365 = vmatpush1.bf16.msra.mxu0 0
      %2366 = vmatprep.subr.bf16.mxu0 0
      %2367 = vmatpush1.bf16.msra.mxu0 0
      %2368 = vmatprep.subr.bf16.mxu0 0
      %2369 = vmatpush1.bf16.msra.mxu0 0
      %2370 = vmatprep.subr.bf16.mxu0 0
      %2371 = vmatpush1.bf16.msra.mxu0 0
      %2372 = vmatprep.subr.bf16.mxu0 0
      %2373 = vmatpush1.bf16.msra.mxu0 0
      %2374 = vmatprep.subr.bf16.mxu0 0
      %2375 = vmatpush1.bf16.msra.mxu0 %v2358
      %2376 = vmatprep.subr.bf16.mxu0 0
      %2377 = vmatpush2.bf16.msra.mxu0 0
      %2378 = vmatprep.subr.bf16.mxu0 0
      %2379 = vmatpush2.bf16.msra.mxu0 0
      %2380 = vmatprep.subr.bf16.mxu0 0
      %2381 = vmatpush2.bf16.msra.mxu0 0
      %2382 = vmatprep.subr.bf16.mxu0 0
      %2383 = vmatpush2.bf16.msra.mxu0 0
      %2384 = vmatprep.subr.bf16.mxu0 0
      %2385 = vmatpush2.bf16.msra.mxu0 0
      %2386 = vmatprep.subr.bf16.mxu0 0
      %2387 = vmatpush2.bf16.msra.mxu0 0
      %2388 = vmatprep.subr.bf16.mxu0 0
      %2389 = vmatpush2.bf16.msra.mxu0 0
      %2390 = vmatprep.subr.bf16.mxu0 0
      %2391 = vmatpush2.bf16.msra.mxu0 0
      %2392 = vmatprep.mubr.bf16.mxu0 0
      %2393 = vmatmul.mubr.bf16.gmra.mxu0 %v2345
      %v2394 = vpop.f32.mrf.mxu0
      %v2395 = vadd.f32 %v2321, %v2394
      %v2396 = vpop.f32.mrf.mxu0
      %v2397 = vpop.f32.mrf.mxu0
      %v2398 = vadd.f32 %v2321, %v2397
      %v2399 = vpop.f32.mrf.mxu0
      %2400 = vmatprep.mubr.bf16.mxu0 0
      %2401 = vmatmul.mubr.bf16.gmra.mxu0 %v2348
      %v2402 = vpop.f32.mrf.mxu0
      %v2403 = vadd.f32 %v2321, %v2402
      %v2404 = vpop.f32.mrf.mxu0
      %v2405 = vpop.f32.mrf.mxu0
      %v2406 = vadd.f32 %v2321, %v2405
      %v2407 = vpop.f32.mrf.mxu0
      %2408 = vmatprep.mubr.bf16.mxu0 0
      %2409 = vmatmul.mubr.bf16.gmra.mxu0 %v2351
      %v2410 = vpop.f32.mrf.mxu0
      %v2411 = vadd.f32 %v2321, %v2410
      %v2412 = vpop.f32.mrf.mxu0
      %v2413 = vpop.f32.mrf.mxu0
      %v2414 = vadd.f32 %v2321, %v2413
      %v2415 = vpop.f32.mrf.mxu0
      %2416 = vmatprep.mubr.bf16.mxu0 0
      %2417 = vmatmul.mubr.bf16.gmra.mxu0 %v2354
      %v2418 = vpop.f32.mrf.mxu0
      %v2419 = vadd.f32 %v2321, %v2418
      %v2420 = vpop.f32.mrf.mxu0
      %v2421 = vpop.f32.mrf.mxu0
      %v2422 = vadd.f32 %v2321, %v2421
      %v2423 = vpop.f32.mrf.mxu0
      %2424 = vdwg.mxu0
      %v2425 = vadd.f32 %v2299, %v2395
      %v2426 = vadd.f32 %v2300, %v2398
      %v2427 = vadd.f32 %v2301, %v2403
      %v2428 = vadd.f32 %v2302, %v2406
      %v2429 = vadd.f32 %v2303, %v2411
      %v2430 = vadd.f32 %v2304, %v2414
      %v2431 = vadd.f32 %v2305, %v2419
      %v2432 = vadd.f32 %v2306, %v2422
      %v2433 = vpack.c.bf16 %v2425, %v2425
      %v2434 = vpack.c.bf16 %v2426, %v2426
      %v2435 = vpack.c.bf16 %v2427, %v2427
      %v2436 = vpack.c.bf16 %v2428, %v2428
      %v2437 = vpack.c.bf16 %v2429, %v2429
      %v2438 = vpack.c.bf16 %v2430, %v2430
      %v2439 = vpack.c.bf16 %v2431, %v2431
      %v2440 = vpack.c.bf16 %v2432, %v2432
      %2441 = vst [vmem:[%s298] sm:$0xf] %v2433
      %2442 = vst [vmem:[%s298 + $0x4] sm:$0xf] %v2434
      %2443 = vst [vmem:[%s298 + $0x8] sm:$0xf] %v2435
      %2444 = vst [vmem:[%s298 + $0xc] sm:$0xf] %v2436
      %2445 = vst [vmem:[%s298 + $0x10] sm:$0xf] %v2437
      %2446 = vst [vmem:[%s298 + $0x14] sm:$0xf] %v2438
      %2447 = vst [vmem:[%s298 + $0x18] sm:$0xf] %v2439
      %2448 = vst [vmem:[%s298 + $0x1c] sm:$0xf] %v2440
      %p2449 = scmp.lt.s32.totalorder %s18, 1
      %s2450 = scalar_select %p2449, %s18, 1
      %s2451 = smul.addr %s2450, 8
      %s2452 = smul.addr %s2451, 4
      %s2453 = scalar_lea.vmem %s7, %s2452
      // Predicated region
      $region49: #{resnet_block_forward.3} parent=47 // pred_check
        %p2454 = pneg %p193
      $region50: #{resnet_block_forward.3} parent=47 // pred_check_branch
        %2456 = sbr.rel (%p2454) target = $region52
      $region51: #{resnet_block_forward.3} parent=47 // pred_region
        _
      $region52: #{resnet_block_forward.3} parent=47 // pred_fallthru
        _
    $region48: #{resnet_block_forward.3} parent=5 // pred_fallthru
      _
    %p2457 = scmp.le.s32.totalorder 2, %s13
    // Predicated region
    $region53: #{resnet_block_forward.3} parent=5 // pred_check
      %p2458 = pneg %p2457
    $region54: #{resnet_block_forward.3} parent=5 // pred_check_branch
      %2460 = sbr.rel (%p2458) target = $region56
    $region55: #{resnet_block_forward.3} parent=5 // pred_region
      %s2461 = ssub.s32 %s13, 2
      // Predicated region
      $region57: #{resnet_block_forward.3} parent=55 // pred_check
        %p2462 = pneg %p199
      $region58: #{resnet_block_forward.3} parent=55 // pred_check_branch
        %2464 = sbr.rel (%p2462) target = $region60
      $region59: #{resnet_block_forward.3} parent=55 // pred_region
        %p2465 = scmp.lt.s32.totalorder %s19, 1
        %s2466 = scalar_select %p2465, %s19, 1
        %s2467 = smul.addr %s2466, 8
        %s2468 = smul.addr %s2467, 4
        %s2469 = scalar_lea.vmem %s7, %s2468
      $region60: #{resnet_block_forward.3} parent=55 // pred_fallthru
        _
    $region56: #{resnet_block_forward.3} parent=5 // pred_fallthru
      _
  $region6: #{resnet_block_forward.3} parent=0 // loop_footer
    %s17 = sadd.s32 1, %s13
  $region7: #{resnet_block_forward.3} parent=0 // loop_footer_branch
    %12 = sbr.rel target = $region3
  $region8: #{resnet_block_forward.3} parent=0 // loop_exit
    _

</llo_original>
